<compile_context>
chip_gen: v5e
topology: v5e:2x2
jax: 0.10.0
libtpu: 0.0.40
codegen_flags: <defaults>
</compile_context>

<pallas_src>
import functools

import numpy as np
import jax
import jax.numpy as jnp
from jax.experimental import pallas as pl
from jax.experimental.pallas import tpu as pltpu

OUT_HW = 224           # F.interpolate target size
PATCH = 32             # patch size of the synthetic vision encoder
HIDDEN = 32            # patch-embedding width
EMBED = 16             # final CLIP embedding dim
EMBED_PAD = 128        # lane-dense output width (EMBED zero-padded)
NPATCH = (OUT_HW // PATCH) ** 2          # 7*7 = 49
_LANE = 128
_SUBLANE = 8

_SINGLE_BUFFER_RESIDENT = True           # pl.Buffered(1) on grid-invariant blocks


# ---------------------------------------------------------------------------
# Generation-aware sizing helpers.
# ---------------------------------------------------------------------------
@functools.lru_cache(maxsize=None)
def _vmem_limit_bytes() -> int:
    """~75% of the generation's VMEM (48 MiB on v7x, 96 MiB on v5e/v6e)."""
    cap = 64 * 1024 * 1024          # conservative default (v7x per-core VMEM)
    try:
        info = pltpu.get_tpu_info()
        cap = int(getattr(info, "vmem_capacity_bytes", cap) or cap)
    except Exception:
        pass
    return min(int(0.75 * cap), 100 * 1024 * 1024)


def _round_up(x: int, m: int) -> int:
    return (x + m - 1) // m * m


def _resident_spec(shape):
    """BlockSpec for a grid-invariant operand: constant index_map and (when the
    API supports it) a single VMEM buffer instead of the default double buffer."""
    index_map = lambda *_: (0,) * len(shape)
    if _SINGLE_BUFFER_RESIDENT and hasattr(pl, "Buffered"):
        try:
            return pl.BlockSpec(shape, index_map, pipeline_mode=pl.Buffered(1))
        except (TypeError, ValueError):
            pass
    return pl.BlockSpec(shape, index_map)


def _pick_tb(batch: int, per_item_bytes: int, budget_bytes: int,
             cap: int = 128) -> int:
    """Batch tile: >=2 grid steps when possible (v7x has 2 TensorCores sharing a
    'parallel' axis), multiple of 8 (sublane), capped by double-buffered VMEM."""
    if batch <= 8:
        return max(batch, 1)
    tb = min(cap, ((batch + 1) // 2 + 7) // 8 * 8)
    fit = max(8, (budget_bytes // max(1, 2 * per_item_bytes)) // 8 * 8)
    return max(8, min(tb, fit))


def _bilinear_matrix(in_size: int, out_size: int) -> np.ndarray:
    """PyTorch F.interpolate(mode='bilinear', align_corners=False) weights."""
    scale = in_size / out_size
    i = np.arange(out_size, dtype=np.float64)
    src = np.maximum((i + 0.5) * scale - 0.5, 0.0)
    i0 = np.minimum(np.floor(src).astype(np.int64), in_size - 1)
    i1 = np.minimum(i0 + 1, in_size - 1)
    w1 = src - i0
    w0 = 1.0 - w1
    m = np.zeros((out_size, in_size), dtype=np.float32)
    m[np.arange(out_size), i0] += w0
    m[np.arange(out_size), i1] += w1
    return m


# ---------------------------------------------------------------------------
# PRIMARY PATH (small C*H*W): resize + patchify + patch-embed folded into one
# bf16 matmul; one Pallas kernel for the whole forward.
# ---------------------------------------------------------------------------
def _folded_kernel(x_ref, weff_ref, b1t_ref, pool_ref, wp_ref, bp_ref, o_ref):
    # x_ref   : (TB, C*H*W)       bf16
    # weff_ref: (C*H*W, NPH_PAD)  bf16 folded resize+patchify+patch-embed weight
    # b1t_ref : (1, NPH_PAD)      f32 patch-embed bias tiled per patch
    # pool_ref: (NPH_PAD, HIDDEN) f32 mean-over-patches expressed as a matmul
    # wp_ref  : (HIDDEN, 128)     f32 LN-affine-folded projection (lane padded)
    # o_ref   : (TB, 128)         lane-dense output (first EMBED columns valid)
    h = jnp.dot(x_ref[...], weff_ref[...], preferred_element_type=jnp.float32)
    h = h + b1t_ref[...]
    h = h * jax.nn.sigmoid(1.702 * h)                       # QuickGELU
    pooled = jnp.dot(h, pool_ref[...], preferred_element_type=jnp.float32)
    mu = jnp.mean(pooled, axis=-1, keepdims=True)
    var = jnp.mean((pooled - mu) ** 2, axis=-1, keepdims=True)
    xn = (pooled - mu) * jax.lax.rsqrt(var + 1e-5)
    out = jnp.dot(xn, wp_ref[...], preferred_element_type=jnp.float32) + bp_ref[...]
    o_ref[...] = out.astype(o_ref.dtype)


def prepare_folded_params(params: dict, C: int, H: int, W: int) -> dict:
    """One-time precompute: fold bilinear A,B + patchify into the patch-embed W1
    (stored bf16), fold the LN affine into the projection, pad to lane widths."""
    nph = npw = OUT_HW // PATCH
    np_ = nph * npw
    a = jnp.asarray(_bilinear_matrix(H, OUT_HW)).reshape(nph, PATCH, H)   # (7,32,H)
    b = jnp.asarray(_bilinear_matrix(W, OUT_HW)).reshape(npw, PATCH, W)   # (7,32,W)
    w1 = params["w1"].astype(jnp.float32).reshape(C, PATCH, PATCH, HIDDEN)
    t = jnp.einsum("pih,cijk->pchjk", a, w1)                 # (7,C,H,32,K)
    weff = jnp.einsum("qjw,pchjk->chwpqk", b, t)              # (C,H,W,7,7,K)
    nph_total = np_ * HIDDEN                                  # 1568
    nph_pad = _round_up(nph_total, _LANE)                     # 1664
    weff = weff.reshape(C * H * W, nph_total)
    weff = jnp.pad(weff, ((0, 0), (0, nph_pad - nph_total))).astype(jnp.bfloat16)
    b1t = jnp.tile(params["b1"], (1, np_))
    b1t = jnp.pad(b1t, ((0, 0), (0, nph_pad - nph_total)))
    pool = np.zeros((nph_pad, HIDDEN), np.float32)            # mean over patches
    for p in range(np_):
        pool[p * HIDDEN:(p + 1) * HIDDEN, :] = np.eye(HIDDEN, dtype=np.float32) / np_
    wp_eff = params["wp"] * params["ln_g"].T                  # diag(g) @ Wp
    bp_eff = params["ln_b"] @ params["wp"] + params["bp"]
    return {
        "weff": weff, "b1t": b1t, "pool": jnp.asarray(pool),
        "wp": jnp.pad(wp_eff, ((0, 0), (0, EMBED_PAD - EMBED))),
        "bp": jnp.pad(bp_eff, ((0, 0), (0, EMBED_PAD - EMBED))),
    }


def medclip_forward_folded(x: jax.Array, fp: dict) -> jax.Array:
    """x: (B, C, H, W) -> (B, EMBED). Single fused Pallas kernel."""
    B, C, H, W = x.shape
    chw = C * H * W
    x2 = x.reshape(B, chw).astype(jnp.bfloat16)
    nph_pad = fp["weff"].shape[1]

    TB = _pick_tb(B, chw * 2, int(0.25 * _vmem_limit_bytes()))
    Bp = _round_up(B, TB)
    if Bp != B:
        x2 = jnp.pad(x2, ((0, Bp - B), (0, 0)))

    out = pl.pallas_call(
        _folded_kernel,
        out_shape=jax.ShapeDtypeStruct((Bp, EMBED_PAD), jnp.float32),
        grid_spec=pltpu.PrefetchScalarGridSpec(
            num_scalar_prefetch=0,
            grid=(Bp // TB,),
            in_specs=[
                pl.BlockSpec((TB, chw), lambda i: (i, 0)),
                _resident_spec((chw, nph_pad)),
                _resident_spec((1, nph_pad)),
                _resident_spec((nph_pad, HIDDEN)),
                _resident_spec((HIDDEN, EMBED_PAD)),
                _resident_spec((1, EMBED_PAD)),
            ],
            out_specs=pl.BlockSpec((TB, EMBED_PAD), lambda i: (i, 0)),
        ),
        compiler_params=pltpu.CompilerParams(
            dimension_semantics=("parallel",),
            vmem_limit_bytes=_vmem_limit_bytes()),
    )(x2, fp["weff"], fp["b1t"], fp["pool"], fp["wp"], fp["bp"])
    return out[:B, :EMBED]


def _folded_fits(C: int, H: int, W: int) -> bool:
    """Does the fully-folded path fit this generation's VMEM budget?"""
    chw = C * H * W
    nph_pad = _round_up(NPATCH * HIDDEN, _LANE)
    # Residents counted at 2 buffers even though Buffered(1) is requested.
    resident = 2 * (chw * nph_pad * 2            # Weff (bf16)
                    + nph_pad * 4                # b1t
                    + nph_pad * HIDDEN * 4       # pool
                    + HIDDEN * EMBED_PAD * 4 + EMBED_PAD * 4)
    x_blocks = 2 * 128 * chw * 2                 # worst-case TB, bf16, 2 buffers
    h_scratch = 128 * nph_pad * 4
    return resident + x_blocks + h_scratch <= int(0.6 * _vmem_limit_bytes())


# ---------------------------------------------------------------------------
# FALLBACK PATH (large images): resize kernel + encoder kernel.
# ---------------------------------------------------------------------------
def _resize_kernel(x_ref, a_ref, bt_ref, o_ref):
    # x_ref : (P, Hin, Win) slab of planes
    # a_ref : (224, Hin) row-interp matrix;  bt_ref: (Win, 224) col-interp (pre-T)
    # o_ref : (P, 224, 224)
    def body(p, carry):
        cols = jnp.dot(x_ref[p], bt_ref[...], preferred_element_type=jnp.float32)
        o_ref[p] = jnp.dot(a_ref[...], cols,
                           preferred_element_type=jnp.float32).astype(o_ref.dtype)
        return carry
    jax.lax.fori_loop(0, x_ref.shape[0], body, 0, unroll=2)


def bilinear_resize_224(x: jax.Array) -> jax.Array:
    """x: (B, C, H, W) -> (B, C, 224, 224), F.interpolate semantics."""
    B, C, H, W = x.shape
    planes = B * C
    a = jnp.asarray(_bilinear_matrix(H, OUT_HW))          # (224, H)
    bt = jnp.asarray(_bilinear_matrix(W, OUT_HW).T)       # (W, 224)
    x_flat = x.reshape(planes, H, W).astype(jnp.float32)

    # Slab size from the VMEM budget (input + output double-buffered + temp).
    budget = int(0.6 * _vmem_limit_bytes())
    resident = 2 * 4 * (OUT_HW * H + W * OUT_HW)
    per_plane = 2 * 4 * H * W + 2 * 4 * OUT_HW * OUT_HW + 4 * H * OUT_HW
    P = int(max(1, min(16, planes, (budget - resident) // max(per_plane, 1))))
    Pp = _round_up(planes, P)
    if Pp != planes:
        x_flat = jnp.pad(x_flat, ((0, Pp - planes), (0, 0), (0, 0)))

    out = pl.pallas_call(
        _resize_kernel,
        out_shape=jax.ShapeDtypeStruct((Pp, OUT_HW, OUT_HW), jnp.float32),
        grid_spec=pltpu.PrefetchScalarGridSpec(
            num_scalar_prefetch=0,
            grid=(Pp // P,),
            in_specs=[
                pl.BlockSpec((P, H, W), lambda i: (i, 0, 0)),
                _resident_spec((OUT_HW, H)),
                _resident_spec((W, OUT_HW)),
            ],
            out_specs=pl.BlockSpec((P, OUT_HW, OUT_HW), lambda i: (i, 0, 0)),
        ),
        compiler_params=pltpu.CompilerParams(
            dimension_semantics=("parallel",),
            vmem_limit_bytes=_vmem_limit_bytes()),
    )(x_flat, a, bt)
    return out[:planes].reshape(B, C, OUT_HW, OUT_HW)


def _encoder_kernel(p_ref, w1_ref, b1_ref, wp_ref, bp_ref, o_ref, *, n_valid):
    # p_ref : (TB, NPP, pd) bf16 patches, NPP padded to a multiple of 8
    # w1_ref: (pd, HIDDEN)  bf16 patch-embed weight
    tb, npp, pd = p_ref.shape
    pf = p_ref[...].reshape(tb * npp, pd)
    h = jnp.dot(pf, w1_ref[...], preferred_element_type=jnp.float32) + b1_ref[...]
    h = h * jax.nn.sigmoid(1.702 * h)                       # QuickGELU
    h3 = h.reshape(tb, npp, HIDDEN)
    # Padded patches are zero inputs but gelu(b1) != 0 in general -> mask them.
    pidx = jax.lax.broadcasted_iota(jnp.int32, (npp, HIDDEN), 0)
    mask = (pidx < n_valid).astype(jnp.float32)
    pooled = jnp.sum(h3 * mask[None, :, :], axis=1) * (1.0 / n_valid)
    mu = jnp.mean(pooled, axis=-1, keepdims=True)
    var = jnp.mean((pooled - mu) ** 2, axis=-1, keepdims=True)
    xn = (pooled - mu) * jax.lax.rsqrt(var + 1e-5)
    out = jnp.dot(xn, wp_ref[...], preferred_element_type=jnp.float32) + bp_ref[...]
    o_ref[...] = out.astype(o_ref.dtype)


def encode_image(resized: jax.Array, params: dict) -> jax.Array:
    """resized: (B, C, 224, 224) -> (B, EMBED)."""
    B, C, H, W = resized.shape
    nh, nw = H // PATCH, W // PATCH
    np_ = nh * nw
    pd = C * PATCH * PATCH

    # TODO(synk): fuse resize->patchify->encoder into one kernel (emit the resize
    # output patch-major) to remove this XLA 6-D transpose and an HBM round trip.
    patches = resized.reshape(B, C, nh, PATCH, nw, PATCH)
    patches = patches.transpose(0, 2, 4, 1, 3, 5).reshape(B, np_, pd)
    patches = patches.astype(jnp.bfloat16)

    npp = _round_up(np_, _SUBLANE)
    if npp != np_:
        patches = jnp.pad(patches, ((0, 0), (0, npp - np_), (0, 0)))

    TB = _pick_tb(B, npp * pd * 2, int(0.4 * _vmem_limit_bytes()), cap=16)
    Bp = _round_up(B, TB)
    if Bp != B:
        patches = jnp.pad(patches, ((0, Bp - B), (0, 0), (0, 0)))

    w1 = params["w1"].astype(jnp.bfloat16)
    b1 = params["b1"].astype(jnp.float32)
    wp_eff = params["wp"] * params["ln_g"].T                   # LN affine folded
    bp_eff = params["ln_b"] @ params["wp"] + params["bp"]
    wp_pad = jnp.pad(wp_eff, ((0, 0), (0, EMBED_PAD - EMBED)))
    bp_pad = jnp.pad(bp_eff, ((0, 0), (0, EMBED_PAD - EMBED)))

    kernel = functools.partial(_encoder_kernel, n_valid=np_)
    out = pl.pallas_call(
        kernel,
        out_shape=jax.ShapeDtypeStruct((Bp, EMBED_PAD), jnp.float32),
        grid_spec=pltpu.PrefetchScalarGridSpec(
            num_scalar_prefetch=0,
            grid=(Bp // TB,),
            in_specs=[
                pl.BlockSpec((TB, npp, pd), lambda i: (i, 0, 0)),
                _resident_spec((pd, HIDDEN)),
                _resident_spec((1, HIDDEN)),
                _resident_spec((HIDDEN, EMBED_PAD)),
                _resident_spec((1, EMBED_PAD)),
            ],
            out_specs=pl.BlockSpec((TB, EMBED_PAD), lambda i: (i, 0)),
        ),
        compiler_params=pltpu.CompilerParams(
            dimension_semantics=("parallel",),
            vmem_limit_bytes=_vmem_limit_bytes()),
    )(patches, w1, b1, wp_pad, bp_pad)
    return out[:B, :EMBED]


def medclip_forward_general(x: jax.Array, params: dict) -> jax.Array:
    resized = bilinear_resize_224(x)
    return encode_image(resized, params)


def medclip_vision_forward(image_tensor: jax.Array, params: dict,
                           folded: dict | None = None) -> jax.Array:
    """Equivalent of MedCLIPVisionModel.forward."""
    B, C, H, W = image_tensor.shape
    if folded is None and _folded_fits(C, H, W):
        folded = prepare_folded_params(params, C, H, W)
    if folded is not None:
        return medclip_forward_folded(image_tensor, folded)
    return medclip_forward_general(image_tensor, params)


def init_params(channels: int) -> dict:
    pd = channels * PATCH * PATCH
    keys = jax.random.split(jax.random.PRNGKey(42), 4)
    return {
        "w1": jax.random.normal(keys[0], (pd, HIDDEN), jnp.float32) * 0.02,
        "b1": jnp.zeros((1, HIDDEN), jnp.float32),
        "ln_g": jnp.ones((1, HIDDEN), jnp.float32),
        "ln_b": jnp.zeros((1, HIDDEN), jnp.float32),
        "wp": jax.random.normal(keys[1], (HIDDEN, EMBED), jnp.float32) * 0.1,
        "bp": jnp.zeros((1, EMBED), jnp.float32),
    }


if __name__ == "__main__":
    B, C, H, W = 2, 3, 16, 16
    key = jax.random.PRNGKey(0)
    x = jax.random.normal(key, (B, C, H, W), jnp.float32)
    params = init_params(C)

    # Pure-JAX f32 reference (unfused, mirrors the PyTorch module step by step).
    a = jnp.asarray(_bilinear_matrix(H, OUT_HW))
    b = jnp.asarray(_bilinear_matrix(W, OUT_HW))
    ref_resized = jnp.einsum("oh,bchw,pw->bcop", a, x, b)
    nh = OUT_HW // PATCH
    p = ref_resized.reshape(B, C, nh, PATCH, nh, PATCH)
    p = p.transpose(0, 2, 4, 1, 3, 5).reshape(B, nh * nh, -1)
    h = p @ params["w1"] + params["b1"]
    h = h * jax.nn.sigmoid(1.702 * h)
    pooled = h.mean(axis=1)
    mu = pooled.mean(-1, keepdims=True)
    var = ((pooled - mu) ** 2).mean(-1, keepdims=True)
    xn = (pooled - mu) * jax.lax.rsqrt(var + 1e-5)
    xn = xn * params["ln_g"] + params["ln_b"]
    ref = xn @ params["wp"] + params["bp"]

    # Primary path: fully-folded single kernel (small C*H*W regime).
    # Tolerance 2e-2: the kernels use bf16 operands with f32 MXU accumulation.
    folded = prepare_folded_params(params, C, H, W)
    feats = jax.jit(medclip_forward_folded)(x, folded)
    jax.block_until_ready(feats)
    np.testing.assert_allclose(np.asarray(feats), np.asarray(ref),
                               rtol=2e-2, atol=2e-2)

    # Fallback path (large-image version): also compiled and checked.
    feats_g = jax.jit(medclip_forward_general)(x, params)
    jax.block_until_ready(feats_g)
    np.testing.assert_allclose(np.asarray(feats_g), np.asarray(ref),
                               rtol=2e-2, atol=2e-2)

    assert feats.shape == (B, EMBED)
    print("KERNEL_OK")
</pallas_src>

<mosaic_0001>
module attributes {stable_mosaic.version = 11 : i64} {
  func.func @_folded_kernel(%arg0: i32, %arg1: memref<2x768xbf16, #tpu.memory_space<vmem>>, %arg2: memref<768x1664xbf16, #tpu.memory_space<vmem>>, %arg3: memref<1x1664xf32, #tpu.memory_space<vmem>>, %arg4: memref<1664x32xf32, #tpu.memory_space<vmem>>, %arg5: memref<32x128xf32, #tpu.memory_space<vmem>>, %arg6: memref<1x128xf32, #tpu.memory_space<vmem>>, %arg7: memref<2x128xf32, #tpu.memory_space<vmem>>) attributes {dimension_semantics = [#tpu.dimension_semantics<parallel>], iteration_bounds = array<i64: 1>, scalar_prefetch = 0 : i64, scratch_operands = 0 : i64, tpu.core_type = #tpu.core_type<tc>, window_params = [{transform_indices = @transform_0, window_bounds = array<i64: 2, 768>}, {pipeline_mode = #tpu.pipeline_mode<synchronous>, transform_indices = @transform_1, window_bounds = array<i64: 768, 1664>}, {pipeline_mode = #tpu.pipeline_mode<synchronous>, transform_indices = @transform_2, window_bounds = array<i64: 1, 1664>}, {pipeline_mode = #tpu.pipeline_mode<synchronous>, transform_indices = @transform_3, window_bounds = array<i64: 1664, 32>}, {pipeline_mode = #tpu.pipeline_mode<synchronous>, transform_indices = @transform_4, window_bounds = array<i64: 32, 128>}, {pipeline_mode = #tpu.pipeline_mode<synchronous>, transform_indices = @transform_5, window_bounds = array<i64: 1, 128>}, {transform_indices = @transform_6, window_bounds = array<i64: 2, 128>}]} {
    %c0 = arith.constant 0 : index
    %c0_0 = arith.constant 0 : index
    %0 = vector.load %arg1[%c0, %c0_0] : memref<2x768xbf16, #tpu.memory_space<vmem>>, vector<2x768xbf16>
    %c0_1 = arith.constant 0 : index
    %c0_2 = arith.constant 0 : index
    %1 = vector.load %arg2[%c0_1, %c0_2] : memref<768x1664xbf16, #tpu.memory_space<vmem>>, vector<768x1664xbf16>
    %cst = arith.constant dense<0.000000e+00> : vector<2x1664xf32>
    %2 = tpu.matmul %0, %1, %cst {dimension_numbers = #tpu.dot_dimension_numbers<[1], [0], [0], [1], [0, 0, 1, 1], [], []>} : vector<2x768xbf16>, vector<768x1664xbf16>, vector<2x1664xf32> -> vector<2x1664xf32>
    %c0_3 = arith.constant 0 : index
    %c0_4 = arith.constant 0 : index
    %3 = vector.load %arg3[%c0_3, %c0_4] : memref<1x1664xf32, #tpu.memory_space<vmem>>, vector<1x1664xf32>
    %4 = vector.broadcast %3 : vector<1x1664xf32> to vector<2x1664xf32>
    %5 = arith.addf %2, %4 : vector<2x1664xf32>
    %cst_5 = arith.constant 1.702000e+00 : f32
    %6 = vector.broadcast %cst_5 : f32 to vector<2x1664xf32>
    %7 = arith.mulf %6, %5 : vector<2x1664xf32>
    %8 = arith.negf %7 : vector<2x1664xf32>
    %9 = math.exp %8 : vector<2x1664xf32>
    %cst_6 = arith.constant 1.000000e+00 : f32
    %10 = vector.broadcast %cst_6 : f32 to vector<2x1664xf32>
    %11 = arith.addf %10, %9 : vector<2x1664xf32>
    %12 = arith.divf %10, %11 : vector<2x1664xf32>
    %13 = arith.mulf %5, %12 : vector<2x1664xf32>
    %c0_7 = arith.constant 0 : index
    %c0_8 = arith.constant 0 : index
    %14 = vector.load %arg4[%c0_7, %c0_8] : memref<1664x32xf32, #tpu.memory_space<vmem>>, vector<1664x32xf32>
    %cst_9 = arith.constant dense<0.000000e+00> : vector<2x32xf32>
    %15 = tpu.matmul %13, %14, %cst_9 {dimension_numbers = #tpu.dot_dimension_numbers<[1], [0], [0], [1], [0, 0, 1, 1], [], []>} : vector<2x1664xf32>, vector<1664x32xf32>, vector<2x32xf32> -> vector<2x32xf32>
    %cst_10 = arith.constant dense<0.000000e+00> : vector<2xf32>
    %16 = vector.multi_reduction <add>, %15, %cst_10 [1] : vector<2x32xf32> to vector<2xf32>
    %17 = vector.shape_cast %16 : vector<2xf32> to vector<2x1xf32>
    %cst_11 = arith.constant 3.200000e+01 : f32
    %18 = vector.broadcast %cst_11 : f32 to vector<2x1xf32>
    %19 = arith.divf %17, %18 : vector<2x1xf32>
    %20 = vector.broadcast %19 : vector<2x1xf32> to vector<2x32xf32>
    %21 = arith.subf %15, %20 : vector<2x32xf32>
    %22 = arith.mulf %21, %21 : vector<2x32xf32>
    %cst_12 = arith.constant dense<0.000000e+00> : vector<2xf32>
    %23 = vector.multi_reduction <add>, %22, %cst_12 [1] : vector<2x32xf32> to vector<2xf32>
    %24 = vector.shape_cast %23 : vector<2xf32> to vector<2x1xf32>
    %cst_13 = arith.constant 3.200000e+01 : f32
    %25 = vector.broadcast %cst_13 : f32 to vector<2x1xf32>
    %26 = arith.divf %24, %25 : vector<2x1xf32>
    %27 = vector.broadcast %19 : vector<2x1xf32> to vector<2x32xf32>
    %28 = arith.subf %15, %27 : vector<2x32xf32>
    %cst_14 = arith.constant 9.99999974E-6 : f32
    %29 = vector.broadcast %cst_14 : f32 to vector<2x1xf32>
    %30 = arith.addf %26, %29 : vector<2x1xf32>
    %31 = math.rsqrt %30 : vector<2x1xf32>
    %32 = vector.broadcast %31 : vector<2x1xf32> to vector<2x32xf32>
    %33 = arith.mulf %28, %32 : vector<2x32xf32>
    %c0_15 = arith.constant 0 : index
    %c0_16 = arith.constant 0 : index
    %34 = vector.load %arg5[%c0_15, %c0_16] : memref<32x128xf32, #tpu.memory_space<vmem>>, vector<32x128xf32>
    %cst_17 = arith.constant dense<0.000000e+00> : vector<2x128xf32>
    %35 = tpu.matmul %33, %34, %cst_17 {dimension_numbers = #tpu.dot_dimension_numbers<[1], [0], [0], [1], [0, 0, 1, 1], [], []>} : vector<2x32xf32>, vector<32x128xf32>, vector<2x128xf32> -> vector<2x128xf32>
    %c0_18 = arith.constant 0 : index
    %c0_19 = arith.constant 0 : index
    %36 = vector.load %arg6[%c0_18, %c0_19] : memref<1x128xf32, #tpu.memory_space<vmem>>, vector<1x128xf32>
    %37 = vector.broadcast %36 : vector<1x128xf32> to vector<2x128xf32>
    %38 = arith.addf %35, %37 : vector<2x128xf32>
    %c0_20 = arith.constant 0 : index
    %c0_21 = arith.constant 0 : index
    %39 = vector.load %arg7[%c0_20, %c0_21] : memref<2x128xf32, #tpu.memory_space<vmem>>, vector<2x128xf32>
    tpu.vector_store %arg7[%c0_20, %c0_21], %38 {strides = array<i32>} : memref<2x128xf32, #tpu.memory_space<vmem>>, vector<2x128xf32>,
    return
  }
  func.func @transform_0(%arg0: i32) -> (i32, i32) {
    %c0_i32 = arith.constant 0 : i32
    %c0_i32_0 = arith.constant 0 : i32
    return %arg0, %c0_i32 : i32, i32
  }
  func.func @transform_1(%arg0: i32) -> (i32, i32) {
    %c0_i32 = arith.constant 0 : i32
    %c0_i32_0 = arith.constant 0 : i32
    %c0_i32_1 = arith.constant 0 : i32
    return %c0_i32, %c0_i32_0 : i32, i32
  }
  func.func @transform_2(%arg0: i32) -> (i32, i32) {
    %c0_i32 = arith.constant 0 : i32
    %c0_i32_0 = arith.constant 0 : i32
    %c0_i32_1 = arith.constant 0 : i32
    return %c0_i32, %c0_i32_0 : i32, i32
  }
  func.func @transform_3(%arg0: i32) -> (i32, i32) {
    %c0_i32 = arith.constant 0 : i32
    %c0_i32_0 = arith.constant 0 : i32
    %c0_i32_1 = arith.constant 0 : i32
    return %c0_i32, %c0_i32_0 : i32, i32
  }
  func.func @transform_4(%arg0: i32) -> (i32, i32) {
    %c0_i32 = arith.constant 0 : i32
    %c0_i32_0 = arith.constant 0 : i32
    %c0_i32_1 = arith.constant 0 : i32
    return %c0_i32, %c0_i32_0 : i32, i32
  }
  func.func @transform_5(%arg0: i32) -> (i32, i32) {
    %c0_i32 = arith.constant 0 : i32
    %c0_i32_0 = arith.constant 0 : i32
    %c0_i32_1 = arith.constant 0 : i32
    return %c0_i32, %c0_i32_0 : i32, i32
  }
  func.func @transform_6(%arg0: i32) -> (i32, i32) {
    %c0_i32 = arith.constant 0 : i32
    %c0_i32_0 = arith.constant 0 : i32
    return %arg0, %c0_i32 : i32, i32
  }
}

</mosaic_0001>

<llo_original>
// kernel: medclip_forward_folded.1
$region0: #{medclip_forward_folded.1}
  #allocation0 [shape = 'u32[]', space=smem, size = 0x4, offset = 0x4, fixed_abs, tag = 'smem constant byte address 0x4 - core index']
  #allocation1 [shape = 'u32[72,128]{1,0:T(1,128)}', space=vmem, size = 0x9000, scoped, tag = 'internal scratch']
  %s0 = inlined_call_operand.vmem [shape: bf16[2,768], index: 0, kind: input, shape index: {}]
  %s1 = inlined_call_operand.hbm [shape: bf16[768,1664], index: 1, kind: input, shape index: {}]
  %s2 = inlined_call_operand.hbm [shape: f32[1,1664], index: 2, kind: input, shape index: {}]
  %s3 = inlined_call_operand.vmem [shape: f32[1664,32], index: 3, kind: input, shape index: {}]
  %s4 = inlined_call_operand.hbm [shape: f32[32,128], index: 4, kind: input, shape index: {}]
  %s5 = inlined_call_operand.hbm [shape: f32[1,128], index: 5, kind: input, shape index: {}]
  %s6 = inlined_call_operand.hbm [shape: f32[2,128], index: 6, kind: output, shape index: {}]
  %s7 = sld [smem:[#allocation0]]
  $region50: #{medclip_forward_folded.1} parent=0
    _
  %s9 = ssub.s32 1, %s7
  %s10 = scalar_select 0, %s9, %s7
  $region1: #{medclip_forward_folded.1} parent=0
    #allocation2 [shape = 'u8[2555904]{0}', space=vmem, size = 0x270000, scoped, tag = 'input window, operand 1, single buffered']
    #allocation3 [shape = 's32[1]{0}', space=sflag, size = 0x4, scoped, tag = 'scoped memory for medclip_forward_folded.1']
    #allocation4 [shape = 's32[1]{0}', space=sflag, size = 0x4, scoped, tag = 'scoped memory for medclip_forward_folded.1']
    #allocation5 [shape = 'u8[6656]{0}', space=vmem, size = 0x1c00, scoped, tag = 'input window, operand 2, single buffered']
    #allocation6 [shape = 's32[1]{0}', space=sflag, size = 0x4, scoped, tag = 'scoped memory for medclip_forward_folded.1']
    #allocation7 [shape = 'u8[16384]{0}', space=vmem, size = 0x4000, scoped, tag = 'input window, operand 4, single buffered']
    #allocation8 [shape = 'u8[512]{0}', space=vmem, size = 0x400, scoped, tag = 'input window, operand 5, single buffered']
    #allocation9 [shape = 's32[1]{0}', space=sflag, size = 0x4, scoped, tag = 'scoped memory for medclip_forward_folded.1']
    #allocation10 [shape = 'u8[1024]{0}', space=vmem, size = 0x400, scoped, tag = 'output window, operand 0, single buffered']
    %11 = vsyncpa [#allocation3], 0
    %12 = vsyncpa [#allocation6], 0
    %13 = vsyncpa [#allocation9], 0
    %14 = vsyncpa [#allocation4], 0
    // Predicated region
    $region2: #{medclip_forward_folded.1} parent=1 // pred_check
      _
    $region3: #{medclip_forward_folded.1} parent=1 // pred_check_branch
      %16 = sbr.rel (0) target = $region5
    $region4: #{medclip_forward_folded.1} parent=1 // pred_region
      _
    $region5: #{medclip_forward_folded.1} parent=1 // pred_fallthru
      _
    // Predicated region
    $region6: #{medclip_forward_folded.1} parent=1 // pred_check
      _
    $region7: #{medclip_forward_folded.1} parent=1 // pred_check_branch
      %18 = sbr.rel (0) target = $region9
    $region8: #{medclip_forward_folded.1} parent=1 // pred_region
      %20 = vsyncadd [#allocation3], 0
      %s21 = sshll.u32 %s1, 4
      %s22 = int_to_ptr.hbm [resolvable:$true] %s21
      %s23 = sshll.u32 [#allocation2], 4
      %s24 = int_to_ptr.vmem [resolvable:$true] %s23
      %29 = dma.hbm_to_vmem [thread:$0]  %s22, 79872, %s24, [#allocation3], 832, 832, 52
    $region9: #{medclip_forward_folded.1} parent=1 // pred_fallthru
      _
    // Predicated region
    $region10: #{medclip_forward_folded.1} parent=1 // pred_check
      _
    $region11: #{medclip_forward_folded.1} parent=1 // pred_check_branch
      %31 = sbr.rel (0) target = $region13
    $region12: #{medclip_forward_folded.1} parent=1 // pred_region
      %33 = vsyncadd [#allocation6], 0
      %s35 = sshll.u32 %s2, 4
      %s36 = int_to_ptr.hbm [resolvable:$true] %s35
      %s37 = sshll.u32 [#allocation5], 4
      %s38 = int_to_ptr.vmem [resolvable:$true] %s37
      %40 = dma.hbm_to_vmem [thread:$0]  %s36, 208, %s38, [#allocation6]
    $region13: #{medclip_forward_folded.1} parent=1 // pred_fallthru
      _
    // Predicated region
    $region14: #{medclip_forward_folded.1} parent=1 // pred_check
      _
    $region15: #{medclip_forward_folded.1} parent=1 // pred_check_branch
      %42 = sbr.rel (0) target = $region17
    $region16: #{medclip_forward_folded.1} parent=1 // pred_region
      _
    $region17: #{medclip_forward_folded.1} parent=1 // pred_fallthru
      _
    // Predicated region
    $region18: #{medclip_forward_folded.1} parent=1 // pred_check
      _
    $region19: #{medclip_forward_folded.1} parent=1 // pred_check_branch
      %44 = sbr.rel (0) target = $region21
    $region20: #{medclip_forward_folded.1} parent=1 // pred_region
      %46 = vsyncadd [#allocation6], 0
      %s47 = sshll.u32 %s4, 4
      %s48 = int_to_ptr.hbm [resolvable:$true] %s47
      %s49 = sshll.u32 [#allocation7], 4
      %s50 = int_to_ptr.vmem [resolvable:$true] %s49
      %55 = dma.hbm_to_vmem [thread:$0]  %s48, 512, %s50, [#allocation6], 128, 128, 8
    $region21: #{medclip_forward_folded.1} parent=1 // pred_fallthru
      _
    // Predicated region
    $region22: #{medclip_forward_folded.1} parent=1 // pred_check
      _
    $region23: #{medclip_forward_folded.1} parent=1 // pred_check_branch
      %57 = sbr.rel (0) target = $region25
    $region24: #{medclip_forward_folded.1} parent=1 // pred_region
      %59 = vsyncadd [#allocation9], 0
      %s61 = sshll.u32 %s5, 4
      %s62 = int_to_ptr.hbm [resolvable:$true] %s61
      %s63 = sshll.u32 [#allocation8], 4
      %s64 = int_to_ptr.vmem [resolvable:$true] %s63
      %66 = dma.hbm_to_vmem [thread:$0]  %s62, 16, %s64, [#allocation9]
    $region25: #{medclip_forward_folded.1} parent=1 // pred_fallthru
      _
    // Predicated region
    $region26: #{medclip_forward_folded.1} parent=1 // pred_check
      _
    $region27: #{medclip_forward_folded.1} parent=1 // pred_check_branch
      %68 = sbr.rel (0) target = $region29
    $region28: #{medclip_forward_folded.1} parent=1 // pred_region
      %70 = dma.done [#allocation3], 79872
    $region29: #{medclip_forward_folded.1} parent=1 // pred_fallthru
      _
    // Predicated region
    $region30: #{medclip_forward_folded.1} parent=1 // pred_check
      _
    $region31: #{medclip_forward_folded.1} parent=1 // pred_check_branch
      %72 = sbr.rel (0) target = $region33
    $region32: #{medclip_forward_folded.1} parent=1 // pred_region
      %74 = dma.done [#allocation6], 208
    $region33: #{medclip_forward_folded.1} parent=1 // pred_fallthru
      _
    // Predicated region
    $region34: #{medclip_forward_folded.1} parent=1 // pred_check
      _
    $region35: #{medclip_forward_folded.1} parent=1 // pred_check_branch
      %76 = sbr.rel (0) target = $region37
    $region36: #{medclip_forward_folded.1} parent=1 // pred_region
      %78 = dma.done [#allocation6], 512
    $region37: #{medclip_forward_folded.1} parent=1 // pred_fallthru
      _
    // Predicated region
    $region38: #{medclip_forward_folded.1} parent=1 // pred_check
      _
    $region39: #{medclip_forward_folded.1} parent=1 // pred_check_branch
      %80 = sbr.rel (0) target = $region41
    $region40: #{medclip_forward_folded.1} parent=1 // pred_region
      %82 = dma.done [#allocation9], 16
    $region41: #{medclip_forward_folded.1} parent=1 // pred_fallthru
      _
    %v83 = vld [vmem:[%s0] sm:$0x3f]
    %v84 = vld [vmem:[#allocation2] sm:$0xff]
    %v85 = vld [vmem:[#allocation2 + $0x8] sm:$0xff]
    %v86 = vld [vmem:[#allocation2 + $0x10] sm:$0xff]
    %v87 = vld [vmem:[#allocation2 + $0x18] sm:$0xff]
    %v88 = vld [vmem:[#allocation2 + $0x20] sm:$0xff]
    %v89 = vld [vmem:[#allocation2 + $0x28] sm:$0xff]
    %v90 = vld [vmem:[#allocation2 + $0x30] sm:$0xf]
    %v91 = vld [vmem:[#allocation2 + $0x34] sm:$0xff]
    %v92 = vld [vmem:[#allocation2 + $0x3c] sm:$0xff]
    %v93 = vld [vmem:[#allocation2 + $0x44] sm:$0xff]
    %v94 = vld [vmem:[#allocation2 + $0x4c] sm:$0xff]
    %v95 = vld [vmem:[#allocation2 + $0x54] sm:$0xff]
    %v96 = vld [vmem:[#allocation2 + $0x5c] sm:$0xff]
    %v97 = vld [vmem:[#allocation2 + $0x64] sm:$0xf]
    %v98 = vld [vmem:[#allocation2 + $0x68] sm:$0xff]
    %v99 = vld [vmem:[#allocation2 + $0x70] sm:$0xff]
    %v100 = vld [vmem:[#allocation2 + $0x78] sm:$0xff]
    %v101 = vld [vmem:[#allocation2 + $0x80] sm:$0xff]
    %v102 = vld [vmem:[#allocation2 + $0x88] sm:$0xff]
    %v103 = vld [vmem:[#allocation2 + $0x90] sm:$0xff]
    %v104 = vld [vmem:[#allocation2 + $0x98] sm:$0xf]
    %v105 = vld [vmem:[#allocation2 + $0x9c] sm:$0xff]
    %v106 = vld [vmem:[#allocation2 + $0xa4] sm:$0xff]
    %v107 = vld [vmem:[#allocation2 + $0xac] sm:$0xff]
    %v108 = vld [vmem:[#allocation2 + $0xb4] sm:$0xff]
    %v109 = vld [vmem:[#allocation2 + $0xbc] sm:$0xff]
    %v110 = vld [vmem:[#allocation2 + $0xc4] sm:$0xff]
    %v111 = vld [vmem:[#allocation2 + $0xcc] sm:$0xf]
    %v112 = vld [vmem:[#allocation2 + $0xd0] sm:$0xff]
    %v113 = vld [vmem:[#allocation2 + $0xd8] sm:$0xff]
    %v114 = vld [vmem:[#allocation2 + $0xe0] sm:$0xff]
    %v115 = vld [vmem:[#allocation2 + $0xe8] sm:$0xff]
    %v116 = vld [vmem:[#allocation2 + $0xf0] sm:$0xff]
    %v117 = vld [vmem:[#allocation2 + $0xf8] sm:$0xff]
    %v118 = vld [vmem:[#allocation2 + $0x100] sm:$0xf]
    %v119 = vld [vmem:[#allocation2 + $0x104] sm:$0xff]
    %v120 = vld [vmem:[#allocation2 + $0x10c] sm:$0xff]
    %v121 = vld [vmem:[#allocation2 + $0x114] sm:$0xff]
    %v122 = vld [vmem:[#allocation2 + $0x11c] sm:$0xff]
    %v123 = vld [vmem:[#allocation2 + $0x124] sm:$0xff]
    %v124 = vld [vmem:[#allocation2 + $0x12c] sm:$0xff]
    %v125 = vld [vmem:[#allocation2 + $0x134] sm:$0xf]
    %v126 = vld [vmem:[#allocation2 + $0x138] sm:$0xff]
    %v127 = vld [vmem:[#allocation2 + $0x140] sm:$0xff]
    %v128 = vld [vmem:[#allocation2 + $0x148] sm:$0xff]
    %v129 = vld [vmem:[#allocation2 + $0x150] sm:$0xff]
    %v130 = vld [vmem:[#allocation2 + $0x158] sm:$0xff]
    %v131 = vld [vmem:[#allocation2 + $0x160] sm:$0xff]
    %v132 = vld [vmem:[#allocation2 + $0x168] sm:$0xf]
    %v133 = vld [vmem:[#allocation2 + $0x16c] sm:$0xff]
    %v134 = vld [vmem:[#allocation2 + $0x174] sm:$0xff]
    %v135 = vld [vmem:[#allocation2 + $0x17c] sm:$0xff]
    %v136 = vld [vmem:[#allocation2 + $0x184] sm:$0xff]
    %v137 = vld [vmem:[#allocation2 + $0x18c] sm:$0xff]
    %v138 = vld [vmem:[#allocation2 + $0x194] sm:$0xff]
    %v139 = vld [vmem:[#allocation2 + $0x19c] sm:$0xf]
    %v140 = vld [vmem:[#allocation2 + $0x1a0] sm:$0xff]
    %v141 = vld [vmem:[#allocation2 + $0x1a8] sm:$0xff]
    %v142 = vld [vmem:[#allocation2 + $0x1b0] sm:$0xff]
    %v143 = vld [vmem:[#allocation2 + $0x1b8] sm:$0xff]
    %v144 = vld [vmem:[#allocation2 + $0x1c0] sm:$0xff]
    %v145 = vld [vmem:[#allocation2 + $0x1c8] sm:$0xff]
    %v146 = vld [vmem:[#allocation2 + $0x1d0] sm:$0xf]
    %v147 = vld [vmem:[#allocation2 + $0x1d4] sm:$0xff]
    %v148 = vld [vmem:[#allocation2 + $0x1dc] sm:$0xff]
    %v149 = vld [vmem:[#allocation2 + $0x1e4] sm:$0xff]
    %v150 = vld [vmem:[#allocation2 + $0x1ec] sm:$0xff]
    %v151 = vld [vmem:[#allocation2 + $0x1f4] sm:$0xff]
    %v152 = vld [vmem:[#allocation2 + $0x1fc] sm:$0xff]
    %v153 = vld [vmem:[#allocation2 + $0x204] sm:$0xf]
    %v154 = vld [vmem:[#allocation2 + $0x208] sm:$0xff]
    %v155 = vld [vmem:[#allocation2 + $0x210] sm:$0xff]
    %v156 = vld [vmem:[#allocation2 + $0x218] sm:$0xff]
    %v157 = vld [vmem:[#allocation2 + $0x220] sm:$0xff]
    %v158 = vld [vmem:[#allocation2 + $0x228] sm:$0xff]
    %v159 = vld [vmem:[#allocation2 + $0x230] sm:$0xff]
    %v160 = vld [vmem:[#allocation2 + $0x238] sm:$0xf]
    %v161 = vld [vmem:[#allocation2 + $0x23c] sm:$0xff]
    %v162 = vld [vmem:[#allocation2 + $0x244] sm:$0xff]
    %v163 = vld [vmem:[#allocation2 + $0x24c] sm:$0xff]
    %v164 = vld [vmem:[#allocation2 + $0x254] sm:$0xff]
    %v165 = vld [vmem:[#allocation2 + $0x25c] sm:$0xff]
    %v166 = vld [vmem:[#allocation2 + $0x264] sm:$0xff]
    %v167 = vld [vmem:[#allocation2 + $0x26c] sm:$0xf]
    %v168 = vld [vmem:[#allocation2 + $0x270] sm:$0xff]
    %v169 = vld [vmem:[#allocation2 + $0x278] sm:$0xff]
    %v170 = vld [vmem:[#allocation2 + $0x280] sm:$0xff]
    %v171 = vld [vmem:[#allocation2 + $0x288] sm:$0xff]
    %v172 = vld [vmem:[#allocation2 + $0x290] sm:$0xff]
    %v173 = vld [vmem:[#allocation2 + $0x298] sm:$0xff]
    %v174 = vld [vmem:[#allocation2 + $0x2a0] sm:$0xf]
    %v175 = vld [vmem:[#allocation2 + $0x2a4] sm:$0xff]
    %v176 = vld [vmem:[#allocation2 + $0x2ac] sm:$0xff]
    %v177 = vld [vmem:[#allocation2 + $0x2b4] sm:$0xff]
    %v178 = vld [vmem:[#allocation2 + $0x2bc] sm:$0xff]
    %v179 = vld [vmem:[#allocation2 + $0x2c4] sm:$0xff]
    %v180 = vld [vmem:[#allocation2 + $0x2cc] sm:$0xff]
    %v181 = vld [vmem:[#allocation2 + $0x2d4] sm:$0xf]
    %v182 = vld [vmem:[#allocation2 + $0x2d8] sm:$0xff]
    %v183 = vld [vmem:[#allocation2 + $0x2e0] sm:$0xff]
    %v184 = vld [vmem:[#allocation2 + $0x2e8] sm:$0xff]
    %v185 = vld [vmem:[#allocation2 + $0x2f0] sm:$0xff]
    %v186 = vld [vmem:[#allocation2 + $0x2f8] sm:$0xff]
    %v187 = vld [vmem:[#allocation2 + $0x300] sm:$0xff]
    %v188 = vld [vmem:[#allocation2 + $0x308] sm:$0xf]
    %v189 = vld [vmem:[#allocation2 + $0x30c] sm:$0xff]
    %v190 = vld [vmem:[#allocation2 + $0x314] sm:$0xff]
    %v191 = vld [vmem:[#allocation2 + $0x31c] sm:$0xff]
    %v192 = vld [vmem:[#allocation2 + $0x324] sm:$0xff]
    %v193 = vld [vmem:[#allocation2 + $0x32c] sm:$0xff]
    %v194 = vld [vmem:[#allocation2 + $0x334] sm:$0xff]
    %v195 = vld [vmem:[#allocation2 + $0x33c] sm:$0xf]
    %v196 = vld [vmem:[#allocation2 + $0x340] sm:$0xff]
    %v197 = vld [vmem:[#allocation2 + $0x348] sm:$0xff]
    %v198 = vld [vmem:[#allocation2 + $0x350] sm:$0xff]
    %v199 = vld [vmem:[#allocation2 + $0x358] sm:$0xff]
    %v200 = vld [vmem:[#allocation2 + $0x360] sm:$0xff]
    %v201 = vld [vmem:[#allocation2 + $0x368] sm:$0xff]
    %v202 = vld [vmem:[#allocation2 + $0x370] sm:$0xf]
    %v203 = vld [vmem:[#allocation2 + $0x374] sm:$0xff]
    %v204 = vld [vmem:[#allocation2 + $0x37c] sm:$0xff]
    %v205 = vld [vmem:[#allocation2 + $0x384] sm:$0xff]
    %v206 = vld [vmem:[#allocation2 + $0x38c] sm:$0xff]
    %v207 = vld [vmem:[#allocation2 + $0x394] sm:$0xff]
    %v208 = vld [vmem:[#allocation2 + $0x39c] sm:$0xff]
    %v209 = vld [vmem:[#allocation2 + $0x3a4] sm:$0xf]
    %v210 = vld [vmem:[#allocation2 + $0x3a8] sm:$0xff]
    %v211 = vld [vmem:[#allocation2 + $0x3b0] sm:$0xff]
    %v212 = vld [vmem:[#allocation2 + $0x3b8] sm:$0xff]
    %v213 = vld [vmem:[#allocation2 + $0x3c0] sm:$0xff]
    %v214 = vld [vmem:[#allocation2 + $0x3c8] sm:$0xff]
    %v215 = vld [vmem:[#allocation2 + $0x3d0] sm:$0xff]
    %v216 = vld [vmem:[#allocation2 + $0x3d8] sm:$0xf]
    %v217 = vld [vmem:[#allocation2 + $0x3dc] sm:$0xff]
    %v218 = vld [vmem:[#allocation2 + $0x3e4] sm:$0xff]
    %v219 = vld [vmem:[#allocation2 + $0x3ec] sm:$0xff]
    %v220 = vld [vmem:[#allocation2 + $0x3f4] sm:$0xff]
    %v221 = vld [vmem:[#allocation2 + $0x3fc] sm:$0xff]
    %v222 = vld [vmem:[#allocation2 + $0x404] sm:$0xff]
    %v223 = vld [vmem:[#allocation2 + $0x40c] sm:$0xf]
    %v224 = vld [vmem:[#allocation2 + $0x410] sm:$0xff]
    %v225 = vld [vmem:[#allocation2 + $0x418] sm:$0xff]
    %v226 = vld [vmem:[#allocation2 + $0x420] sm:$0xff]
    %v227 = vld [vmem:[#allocation2 + $0x428] sm:$0xff]
    %v228 = vld [vmem:[#allocation2 + $0x430] sm:$0xff]
    %v229 = vld [vmem:[#allocation2 + $0x438] sm:$0xff]
    %v230 = vld [vmem:[#allocation2 + $0x440] sm:$0xf]
    %v231 = vld [vmem:[#allocation2 + $0x444] sm:$0xff]
    %v232 = vld [vmem:[#allocation2 + $0x44c] sm:$0xff]
    %v233 = vld [vmem:[#allocation2 + $0x454] sm:$0xff]
    %v234 = vld [vmem:[#allocation2 + $0x45c] sm:$0xff]
    %v235 = vld [vmem:[#allocation2 + $0x464] sm:$0xff]
    %v236 = vld [vmem:[#allocation2 + $0x46c] sm:$0xff]
    %v237 = vld [vmem:[#allocation2 + $0x474] sm:$0xf]
    %v238 = vld [vmem:[#allocation2 + $0x478] sm:$0xff]
    %v239 = vld [vmem:[#allocation2 + $0x480] sm:$0xff]
    %v240 = vld [vmem:[#allocation2 + $0x488] sm:$0xff]
    %v241 = vld [vmem:[#allocation2 + $0x490] sm:$0xff]
    %v242 = vld [vmem:[#allocation2 + $0x498] sm:$0xff]
    %v243 = vld [vmem:[#allocation2 + $0x4a0] sm:$0xff]
    %v244 = vld [vmem:[#allocation2 + $0x4a8] sm:$0xf]
    %v245 = vld [vmem:[#allocation2 + $0x4ac] sm:$0xff]
    %v246 = vld [vmem:[#allocation2 + $0x4b4] sm:$0xff]
    %v247 = vld [vmem:[#allocation2 + $0x4bc] sm:$0xff]
    %v248 = vld [vmem:[#allocation2 + $0x4c4] sm:$0xff]
    %v249 = vld [vmem:[#allocation2 + $0x4cc] sm:$0xff]
    %v250 = vld [vmem:[#allocation2 + $0x4d4] sm:$0xff]
    %v251 = vld [vmem:[#allocation2 + $0x4dc] sm:$0xf]
    %v252 = vld [vmem:[#allocation2 + $0x4e0] sm:$0xff]
    %v253 = vld [vmem:[#allocation2 + $0x4e8] sm:$0xff]
    %v254 = vld [vmem:[#allocation2 + $0x4f0] sm:$0xff]
    %v255 = vld [vmem:[#allocation2 + $0x4f8] sm:$0xff]
    %v256 = vld [vmem:[#allocation2 + $0x500] sm:$0xff]
    %v257 = vld [vmem:[#allocation2 + $0x508] sm:$0xff]
    %v258 = vld [vmem:[#allocation2 + $0x510] sm:$0xf]
    %v259 = vld [vmem:[#allocation2 + $0x514] sm:$0xff]
    %v260 = vld [vmem:[#allocation2 + $0x51c] sm:$0xff]
    %v261 = vld [vmem:[#allocation2 + $0x524] sm:$0xff]
    %v262 = vld [vmem:[#allocation2 + $0x52c] sm:$0xff]
    %v263 = vld [vmem:[#allocation2 + $0x534] sm:$0xff]
    %v264 = vld [vmem:[#allocation2 + $0x53c] sm:$0xff]
    %v265 = vld [vmem:[#allocation2 + $0x544] sm:$0xf]
    %v266 = vld [vmem:[#allocation2 + $0x548] sm:$0xff]
    %v267 = vld [vmem:[#allocation2 + $0x550] sm:$0xff]
    %v268 = vld [vmem:[#allocation2 + $0x558] sm:$0xff]
    %v269 = vld [vmem:[#allocation2 + $0x560] sm:$0xff]
    %v270 = vld [vmem:[#allocation2 + $0x568] sm:$0xff]
    %v271 = vld [vmem:[#allocation2 + $0x570] sm:$0xff]
    %v272 = vld [vmem:[#allocation2 + $0x578] sm:$0xf]
    %v273 = vld [vmem:[#allocation2 + $0x57c] sm:$0xff]
    %v274 = vld [vmem:[#allocation2 + $0x584] sm:$0xff]
    %v275 = vld [vmem:[#allocation2 + $0x58c] sm:$0xff]
    %v276 = vld [vmem:[#allocation2 + $0x594] sm:$0xff]
    %v277 = vld [vmem:[#allocation2 + $0x59c] sm:$0xff]
    %v278 = vld [vmem:[#allocation2 + $0x5a4] sm:$0xff]
    %v279 = vld [vmem:[#allocation2 + $0x5ac] sm:$0xf]
    %v280 = vld [vmem:[#allocation2 + $0x5b0] sm:$0xff]
    %v281 = vld [vmem:[#allocation2 + $0x5b8] sm:$0xff]
    %v282 = vld [vmem:[#allocation2 + $0x5c0] sm:$0xff]
    %v283 = vld [vmem:[#allocation2 + $0x5c8] sm:$0xff]
    %v284 = vld [vmem:[#allocation2 + $0x5d0] sm:$0xff]
    %v285 = vld [vmem:[#allocation2 + $0x5d8] sm:$0xff]
    %v286 = vld [vmem:[#allocation2 + $0x5e0] sm:$0xf]
    %v287 = vld [vmem:[#allocation2 + $0x5e4] sm:$0xff]
    %v288 = vld [vmem:[#allocation2 + $0x5ec] sm:$0xff]
    %v289 = vld [vmem:[#allocation2 + $0x5f4] sm:$0xff]
    %v290 = vld [vmem:[#allocation2 + $0x5fc] sm:$0xff]
    %v291 = vld [vmem:[#allocation2 + $0x604] sm:$0xff]
    %v292 = vld [vmem:[#allocation2 + $0x60c] sm:$0xff]
    %v293 = vld [vmem:[#allocation2 + $0x614] sm:$0xf]
    %v294 = vld [vmem:[#allocation2 + $0x618] sm:$0xff]
    %v295 = vld [vmem:[#allocation2 + $0x620] sm:$0xff]
    %v296 = vld [vmem:[#allocation2 + $0x628] sm:$0xff]
    %v297 = vld [vmem:[#allocation2 + $0x630] sm:$0xff]
    %v298 = vld [vmem:[#allocation2 + $0x638] sm:$0xff]
    %v299 = vld [vmem:[#allocation2 + $0x640] sm:$0xff]
    %v300 = vld [vmem:[#allocation2 + $0x648] sm:$0xf]
    %v301 = vld [vmem:[#allocation2 + $0x64c] sm:$0xff]
    %v302 = vld [vmem:[#allocation2 + $0x654] sm:$0xff]
    %v303 = vld [vmem:[#allocation2 + $0x65c] sm:$0xff]
    %v304 = vld [vmem:[#allocation2 + $0x664] sm:$0xff]
    %v305 = vld [vmem:[#allocation2 + $0x66c] sm:$0xff]
    %v306 = vld [vmem:[#allocation2 + $0x674] sm:$0xff]
    %v307 = vld [vmem:[#allocation2 + $0x67c] sm:$0xf]
    %v308 = vld [vmem:[#allocation2 + $0x680] sm:$0xff]
    %v309 = vld [vmem:[#allocation2 + $0x688] sm:$0xff]
    %v310 = vld [vmem:[#allocation2 + $0x690] sm:$0xff]
    %v311 = vld [vmem:[#allocation2 + $0x698] sm:$0xff]
    %v312 = vld [vmem:[#allocation2 + $0x6a0] sm:$0xff]
    %v313 = vld [vmem:[#allocation2 + $0x6a8] sm:$0xff]
    %v314 = vld [vmem:[#allocation2 + $0x6b0] sm:$0xf]
    %v315 = vld [vmem:[#allocation2 + $0x6b4] sm:$0xff]
    %v316 = vld [vmem:[#allocation2 + $0x6bc] sm:$0xff]
    %v317 = vld [vmem:[#allocation2 + $0x6c4] sm:$0xff]
    %v318 = vld [vmem:[#allocation2 + $0x6cc] sm:$0xff]
    %v319 = vld [vmem:[#allocation2 + $0x6d4] sm:$0xff]
    %v320 = vld [vmem:[#allocation2 + $0x6dc] sm:$0xff]
    %v321 = vld [vmem:[#allocation2 + $0x6e4] sm:$0xf]
    %v322 = vld [vmem:[#allocation2 + $0x6e8] sm:$0xff]
    %v323 = vld [vmem:[#allocation2 + $0x6f0] sm:$0xff]
    %v324 = vld [vmem:[#allocation2 + $0x6f8] sm:$0xff]
    %v325 = vld [vmem:[#allocation2 + $0x700] sm:$0xff]
    %v326 = vld [vmem:[#allocation2 + $0x708] sm:$0xff]
    %v327 = vld [vmem:[#allocation2 + $0x710] sm:$0xff]
    %v328 = vld [vmem:[#allocation2 + $0x718] sm:$0xf]
    %v329 = vld [vmem:[#allocation2 + $0x71c] sm:$0xff]
    %v330 = vld [vmem:[#allocation2 + $0x724] sm:$0xff]
    %v331 = vld [vmem:[#allocation2 + $0x72c] sm:$0xff]
    %v332 = vld [vmem:[#allocation2 + $0x734] sm:$0xff]
    %v333 = vld [vmem:[#allocation2 + $0x73c] sm:$0xff]
    %v334 = vld [vmem:[#allocation2 + $0x744] sm:$0xff]
    %v335 = vld [vmem:[#allocation2 + $0x74c] sm:$0xf]
    %v336 = vld [vmem:[#allocation2 + $0x750] sm:$0xff]
    %v337 = vld [vmem:[#allocation2 + $0x758] sm:$0xff]
    %v338 = vld [vmem:[#allocation2 + $0x760] sm:$0xff]
    %v339 = vld [vmem:[#allocation2 + $0x768] sm:$0xff]
    %v340 = vld [vmem:[#allocation2 + $0x770] sm:$0xff]
    %v341 = vld [vmem:[#allocation2 + $0x778] sm:$0xff]
    %v342 = vld [vmem:[#allocation2 + $0x780] sm:$0xf]
    %v343 = vld [vmem:[#allocation2 + $0x784] sm:$0xff]
    %v344 = vld [vmem:[#allocation2 + $0x78c] sm:$0xff]
    %v345 = vld [vmem:[#allocation2 + $0x794] sm:$0xff]
    %v346 = vld [vmem:[#allocation2 + $0x79c] sm:$0xff]
    %v347 = vld [vmem:[#allocation2 + $0x7a4] sm:$0xff]
    %v348 = vld [vmem:[#allocation2 + $0x7ac] sm:$0xff]
    %v349 = vld [vmem:[#allocation2 + $0x7b4] sm:$0xf]
    %v350 = vld [vmem:[#allocation2 + $0x7b8] sm:$0xff]
    %v351 = vld [vmem:[#allocation2 + $0x7c0] sm:$0xff]
    %v352 = vld [vmem:[#allocation2 + $0x7c8] sm:$0xff]
    %v353 = vld [vmem:[#allocation2 + $0x7d0] sm:$0xff]
    %v354 = vld [vmem:[#allocation2 + $0x7d8] sm:$0xff]
    %v355 = vld [vmem:[#allocation2 + $0x7e0] sm:$0xff]
    %v356 = vld [vmem:[#allocation2 + $0x7e8] sm:$0xf]
    %v357 = vld [vmem:[#allocation2 + $0x7ec] sm:$0xff]
    %v358 = vld [vmem:[#allocation2 + $0x7f4] sm:$0xff]
    %v359 = vld [vmem:[#allocation2 + $0x7fc] sm:$0xff]
    %v360 = vld [vmem:[#allocation2 + $0x804] sm:$0xff]
    %v361 = vld [vmem:[#allocation2 + $0x80c] sm:$0xff]
    %v362 = vld [vmem:[#allocation2 + $0x814] sm:$0xff]
    %v363 = vld [vmem:[#allocation2 + $0x81c] sm:$0xf]
    %v364 = vld [vmem:[#allocation2 + $0x820] sm:$0xff]
    %v365 = vld [vmem:[#allocation2 + $0x828] sm:$0xff]
    %v366 = vld [vmem:[#allocation2 + $0x830] sm:$0xff]
    %v367 = vld [vmem:[#allocation2 + $0x838] sm:$0xff]
    %v368 = vld [vmem:[#allocation2 + $0x840] sm:$0xff]
    %v369 = vld [vmem:[#allocation2 + $0x848] sm:$0xff]
    %v370 = vld [vmem:[#allocation2 + $0x850] sm:$0xf]
    %v371 = vld [vmem:[#allocation2 + $0x854] sm:$0xff]
    %v372 = vld [vmem:[#allocation2 + $0x85c] sm:$0xff]
    %v373 = vld [vmem:[#allocation2 + $0x864] sm:$0xff]
    %v374 = vld [vmem:[#allocation2 + $0x86c] sm:$0xff]
    %v375 = vld [vmem:[#allocation2 + $0x874] sm:$0xff]
    %v376 = vld [vmem:[#allocation2 + $0x87c] sm:$0xff]
    %v377 = vld [vmem:[#allocation2 + $0x884] sm:$0xf]
    %v378 = vld [vmem:[#allocation2 + $0x888] sm:$0xff]
    %v379 = vld [vmem:[#allocation2 + $0x890] sm:$0xff]
    %v380 = vld [vmem:[#allocation2 + $0x898] sm:$0xff]
    %v381 = vld [vmem:[#allocation2 + $0x8a0] sm:$0xff]
    %v382 = vld [vmem:[#allocation2 + $0x8a8] sm:$0xff]
    %v383 = vld [vmem:[#allocation2 + $0x8b0] sm:$0xff]
    %v384 = vld [vmem:[#allocation2 + $0x8b8] sm:$0xf]
    %v385 = vld [vmem:[#allocation2 + $0x8bc] sm:$0xff]
    %v386 = vld [vmem:[#allocation2 + $0x8c4] sm:$0xff]
    %v387 = vld [vmem:[#allocation2 + $0x8cc] sm:$0xff]
    %v388 = vld [vmem:[#allocation2 + $0x8d4] sm:$0xff]
    %v389 = vld [vmem:[#allocation2 + $0x8dc] sm:$0xff]
    %v390 = vld [vmem:[#allocation2 + $0x8e4] sm:$0xff]
    %v391 = vld [vmem:[#allocation2 + $0x8ec] sm:$0xf]
    %v392 = vld [vmem:[#allocation2 + $0x8f0] sm:$0xff]
    %v393 = vld [vmem:[#allocation2 + $0x8f8] sm:$0xff]
    %v394 = vld [vmem:[#allocation2 + $0x900] sm:$0xff]
    %v395 = vld [vmem:[#allocation2 + $0x908] sm:$0xff]
    %v396 = vld [vmem:[#allocation2 + $0x910] sm:$0xff]
    %v397 = vld [vmem:[#allocation2 + $0x918] sm:$0xff]
    %v398 = vld [vmem:[#allocation2 + $0x920] sm:$0xf]
    %v399 = vld [vmem:[#allocation2 + $0x924] sm:$0xff]
    %v400 = vld [vmem:[#allocation2 + $0x92c] sm:$0xff]
    %v401 = vld [vmem:[#allocation2 + $0x934] sm:$0xff]
    %v402 = vld [vmem:[#allocation2 + $0x93c] sm:$0xff]
    %v403 = vld [vmem:[#allocation2 + $0x944] sm:$0xff]
    %v404 = vld [vmem:[#allocation2 + $0x94c] sm:$0xff]
    %v405 = vld [vmem:[#allocation2 + $0x954] sm:$0xf]
    %v406 = vld [vmem:[#allocation2 + $0x958] sm:$0xff]
    %v407 = vld [vmem:[#allocation2 + $0x960] sm:$0xff]
    %v408 = vld [vmem:[#allocation2 + $0x968] sm:$0xff]
    %v409 = vld [vmem:[#allocation2 + $0x970] sm:$0xff]
    %v410 = vld [vmem:[#allocation2 + $0x978] sm:$0xff]
    %v411 = vld [vmem:[#allocation2 + $0x980] sm:$0xff]
    %v412 = vld [vmem:[#allocation2 + $0x988] sm:$0xf]
    %v413 = vld [vmem:[#allocation2 + $0x98c] sm:$0xff]
    %v414 = vld [vmem:[#allocation2 + $0x994] sm:$0xff]
    %v415 = vld [vmem:[#allocation2 + $0x99c] sm:$0xff]
    %v416 = vld [vmem:[#allocation2 + $0x9a4] sm:$0xff]
    %v417 = vld [vmem:[#allocation2 + $0x9ac] sm:$0xff]
    %v418 = vld [vmem:[#allocation2 + $0x9b4] sm:$0xff]
    %v419 = vld [vmem:[#allocation2 + $0x9bc] sm:$0xf]
    %v420 = vld [vmem:[#allocation2 + $0x9c0] sm:$0xff]
    %v421 = vld [vmem:[#allocation2 + $0x9c8] sm:$0xff]
    %v422 = vld [vmem:[#allocation2 + $0x9d0] sm:$0xff]
    %v423 = vld [vmem:[#allocation2 + $0x9d8] sm:$0xff]
    %v424 = vld [vmem:[#allocation2 + $0x9e0] sm:$0xff]
    %v425 = vld [vmem:[#allocation2 + $0x9e8] sm:$0xff]
    %v426 = vld [vmem:[#allocation2 + $0x9f0] sm:$0xf]
    %v427 = vld [vmem:[#allocation2 + $0x9f4] sm:$0xff]
    %v428 = vld [vmem:[#allocation2 + $0x9fc] sm:$0xff]
    %v429 = vld [vmem:[#allocation2 + $0xa04] sm:$0xff]
    %v430 = vld [vmem:[#allocation2 + $0xa0c] sm:$0xff]
    %v431 = vld [vmem:[#allocation2 + $0xa14] sm:$0xff]
    %v432 = vld [vmem:[#allocation2 + $0xa1c] sm:$0xff]
    %v433 = vld [vmem:[#allocation2 + $0xa24] sm:$0xf]
    %v434 = vld [vmem:[#allocation2 + $0xa28] sm:$0xff]
    %v435 = vld [vmem:[#allocation2 + $0xa30] sm:$0xff]
    %v436 = vld [vmem:[#allocation2 + $0xa38] sm:$0xff]
    %v437 = vld [vmem:[#allocation2 + $0xa40] sm:$0xff]
    %v438 = vld [vmem:[#allocation2 + $0xa48] sm:$0xff]
    %v439 = vld [vmem:[#allocation2 + $0xa50] sm:$0xff]
    %v440 = vld [vmem:[#allocation2 + $0xa58] sm:$0xf]
    %v441 = vld [vmem:[#allocation2 + $0xa5c] sm:$0xff]
    %v442 = vld [vmem:[#allocation2 + $0xa64] sm:$0xff]
    %v443 = vld [vmem:[#allocation2 + $0xa6c] sm:$0xff]
    %v444 = vld [vmem:[#allocation2 + $0xa74] sm:$0xff]
    %v445 = vld [vmem:[#allocation2 + $0xa7c] sm:$0xff]
    %v446 = vld [vmem:[#allocation2 + $0xa84] sm:$0xff]
    %v447 = vld [vmem:[#allocation2 + $0xa8c] sm:$0xf]
    %v448 = vld [vmem:[#allocation2 + $0xa90] sm:$0xff]
    %v449 = vld [vmem:[#allocation2 + $0xa98] sm:$0xff]
    %v450 = vld [vmem:[#allocation2 + $0xaa0] sm:$0xff]
    %v451 = vld [vmem:[#allocation2 + $0xaa8] sm:$0xff]
    %v452 = vld [vmem:[#allocation2 + $0xab0] sm:$0xff]
    %v453 = vld [vmem:[#allocation2 + $0xab8] sm:$0xff]
    %v454 = vld [vmem:[#allocation2 + $0xac0] sm:$0xf]
    %v455 = vld [vmem:[#allocation2 + $0xac4] sm:$0xff]
    %v456 = vld [vmem:[#allocation2 + $0xacc] sm:$0xff]
    %v457 = vld [vmem:[#allocation2 + $0xad4] sm:$0xff]
    %v458 = vld [vmem:[#allocation2 + $0xadc] sm:$0xff]
    %v459 = vld [vmem:[#allocation2 + $0xae4] sm:$0xff]
    %v460 = vld [vmem:[#allocation2 + $0xaec] sm:$0xff]
    %v461 = vld [vmem:[#allocation2 + $0xaf4] sm:$0xf]
    %v462 = vld [vmem:[#allocation2 + $0xaf8] sm:$0xff]
    %v463 = vld [vmem:[#allocation2 + $0xb00] sm:$0xff]
    %v464 = vld [vmem:[#allocation2 + $0xb08] sm:$0xff]
    %v465 = vld [vmem:[#allocation2 + $0xb10] sm:$0xff]
    %v466 = vld [vmem:[#allocation2 + $0xb18] sm:$0xff]
    %v467 = vld [vmem:[#allocation2 + $0xb20] sm:$0xff]
    %v468 = vld [vmem:[#allocation2 + $0xb28] sm:$0xf]
    %v469 = vld [vmem:[#allocation2 + $0xb2c] sm:$0xff]
    %v470 = vld [vmem:[#allocation2 + $0xb34] sm:$0xff]
    %v471 = vld [vmem:[#allocation2 + $0xb3c] sm:$0xff]
    %v472 = vld [vmem:[#allocation2 + $0xb44] sm:$0xff]
    %v473 = vld [vmem:[#allocation2 + $0xb4c] sm:$0xff]
    %v474 = vld [vmem:[#allocation2 + $0xb54] sm:$0xff]
    %v475 = vld [vmem:[#allocation2 + $0xb5c] sm:$0xf]
    %v476 = vld [vmem:[#allocation2 + $0xb60] sm:$0xff]
    %v477 = vld [vmem:[#allocation2 + $0xb68] sm:$0xff]
    %v478 = vld [vmem:[#allocation2 + $0xb70] sm:$0xff]
    %v479 = vld [vmem:[#allocation2 + $0xb78] sm:$0xff]
    %v480 = vld [vmem:[#allocation2 + $0xb80] sm:$0xff]
    %v481 = vld [vmem:[#allocation2 + $0xb88] sm:$0xff]
    %v482 = vld [vmem:[#allocation2 + $0xb90] sm:$0xf]
    %v483 = vld [vmem:[#allocation2 + $0xb94] sm:$0xff]
    %v484 = vld [vmem:[#allocation2 + $0xb9c] sm:$0xff]
    %v485 = vld [vmem:[#allocation2 + $0xba4] sm:$0xff]
    %v486 = vld [vmem:[#allocation2 + $0xbac] sm:$0xff]
    %v487 = vld [vmem:[#allocation2 + $0xbb4] sm:$0xff]
    %v488 = vld [vmem:[#allocation2 + $0xbbc] sm:$0xff]
    %v489 = vld [vmem:[#allocation2 + $0xbc4] sm:$0xf]
    %v490 = vld [vmem:[#allocation2 + $0xbc8] sm:$0xff]
    %v491 = vld [vmem:[#allocation2 + $0xbd0] sm:$0xff]
    %v492 = vld [vmem:[#allocation2 + $0xbd8] sm:$0xff]
    %v493 = vld [vmem:[#allocation2 + $0xbe0] sm:$0xff]
    %v494 = vld [vmem:[#allocation2 + $0xbe8] sm:$0xff]
    %v495 = vld [vmem:[#allocation2 + $0xbf0] sm:$0xff]
    %v496 = vld [vmem:[#allocation2 + $0xbf8] sm:$0xf]
    %v497 = vld [vmem:[#allocation2 + $0xbfc] sm:$0xff]
    %v498 = vld [vmem:[#allocation2 + $0xc04] sm:$0xff]
    %v499 = vld [vmem:[#allocation2 + $0xc0c] sm:$0xff]
    %v500 = vld [vmem:[#allocation2 + $0xc14] sm:$0xff]
    %v501 = vld [vmem:[#allocation2 + $0xc1c] sm:$0xff]
    %v502 = vld [vmem:[#allocation2 + $0xc24] sm:$0xff]
    %v503 = vld [vmem:[#allocation2 + $0xc2c] sm:$0xf]
    %v504 = vld [vmem:[#allocation2 + $0xc30] sm:$0xff]
    %v505 = vld [vmem:[#allocation2 + $0xc38] sm:$0xff]
    %v506 = vld [vmem:[#allocation2 + $0xc40] sm:$0xff]
    %v507 = vld [vmem:[#allocation2 + $0xc48] sm:$0xff]
    %v508 = vld [vmem:[#allocation2 + $0xc50] sm:$0xff]
    %v509 = vld [vmem:[#allocation2 + $0xc58] sm:$0xff]
    %v510 = vld [vmem:[#allocation2 + $0xc60] sm:$0xf]
    %v511 = vld [vmem:[#allocation2 + $0xc64] sm:$0xff]
    %v512 = vld [vmem:[#allocation2 + $0xc6c] sm:$0xff]
    %v513 = vld [vmem:[#allocation2 + $0xc74] sm:$0xff]
    %v514 = vld [vmem:[#allocation2 + $0xc7c] sm:$0xff]
    %v515 = vld [vmem:[#allocation2 + $0xc84] sm:$0xff]
    %v516 = vld [vmem:[#allocation2 + $0xc8c] sm:$0xff]
    %v517 = vld [vmem:[#allocation2 + $0xc94] sm:$0xf]
    %v518 = vld [vmem:[#allocation2 + $0xc98] sm:$0xff]
    %v519 = vld [vmem:[#allocation2 + $0xca0] sm:$0xff]
    %v520 = vld [vmem:[#allocation2 + $0xca8] sm:$0xff]
    %v521 = vld [vmem:[#allocation2 + $0xcb0] sm:$0xff]
    %v522 = vld [vmem:[#allocation2 + $0xcb8] sm:$0xff]
    %v523 = vld [vmem:[#allocation2 + $0xcc0] sm:$0xff]
    %v524 = vld [vmem:[#allocation2 + $0xcc8] sm:$0xf]
    %v525 = vld [vmem:[#allocation2 + $0xccc] sm:$0xff]
    %v526 = vld [vmem:[#allocation2 + $0xcd4] sm:$0xff]
    %v527 = vld [vmem:[#allocation2 + $0xcdc] sm:$0xff]
    %v528 = vld [vmem:[#allocation2 + $0xce4] sm:$0xff]
    %v529 = vld [vmem:[#allocation2 + $0xcec] sm:$0xff]
    %v530 = vld [vmem:[#allocation2 + $0xcf4] sm:$0xff]
    %v531 = vld [vmem:[#allocation2 + $0xcfc] sm:$0xf]
    %v532 = vld [vmem:[#allocation2 + $0xd00] sm:$0xff]
    %v533 = vld [vmem:[#allocation2 + $0xd08] sm:$0xff]
    %v534 = vld [vmem:[#allocation2 + $0xd10] sm:$0xff]
    %v535 = vld [vmem:[#allocation2 + $0xd18] sm:$0xff]
    %v536 = vld [vmem:[#allocation2 + $0xd20] sm:$0xff]
    %v537 = vld [vmem:[#allocation2 + $0xd28] sm:$0xff]
    %v538 = vld [vmem:[#allocation2 + $0xd30] sm:$0xf]
    %v539 = vld [vmem:[#allocation2 + $0xd34] sm:$0xff]
    %v540 = vld [vmem:[#allocation2 + $0xd3c] sm:$0xff]
    %v541 = vld [vmem:[#allocation2 + $0xd44] sm:$0xff]
    %v542 = vld [vmem:[#allocation2 + $0xd4c] sm:$0xff]
    %v543 = vld [vmem:[#allocation2 + $0xd54] sm:$0xff]
    %v544 = vld [vmem:[#allocation2 + $0xd5c] sm:$0xff]
    %v545 = vld [vmem:[#allocation2 + $0xd64] sm:$0xf]
    %v546 = vld [vmem:[#allocation2 + $0xd68] sm:$0xff]
    %v547 = vld [vmem:[#allocation2 + $0xd70] sm:$0xff]
    %v548 = vld [vmem:[#allocation2 + $0xd78] sm:$0xff]
    %v549 = vld [vmem:[#allocation2 + $0xd80] sm:$0xff]
    %v550 = vld [vmem:[#allocation2 + $0xd88] sm:$0xff]
    %v551 = vld [vmem:[#allocation2 + $0xd90] sm:$0xff]
    %v552 = vld [vmem:[#allocation2 + $0xd98] sm:$0xf]
    %v553 = vld [vmem:[#allocation2 + $0xd9c] sm:$0xff]
    %v554 = vld [vmem:[#allocation2 + $0xda4] sm:$0xff]
    %v555 = vld [vmem:[#allocation2 + $0xdac] sm:$0xff]
    %v556 = vld [vmem:[#allocation2 + $0xdb4] sm:$0xff]
    %v557 = vld [vmem:[#allocation2 + $0xdbc] sm:$0xff]
    %v558 = vld [vmem:[#allocation2 + $0xdc4] sm:$0xff]
    %v559 = vld [vmem:[#allocation2 + $0xdcc] sm:$0xf]
    %v560 = vld [vmem:[#allocation2 + $0xdd0] sm:$0xff]
    %v561 = vld [vmem:[#allocation2 + $0xdd8] sm:$0xff]
    %v562 = vld [vmem:[#allocation2 + $0xde0] sm:$0xff]
    %v563 = vld [vmem:[#allocation2 + $0xde8] sm:$0xff]
    %v564 = vld [vmem:[#allocation2 + $0xdf0] sm:$0xff]
    %v565 = vld [vmem:[#allocation2 + $0xdf8] sm:$0xff]
    %v566 = vld [vmem:[#allocation2 + $0xe00] sm:$0xf]
    %v567 = vld [vmem:[#allocation2 + $0xe04] sm:$0xff]
    %v568 = vld [vmem:[#allocation2 + $0xe0c] sm:$0xff]
    %v569 = vld [vmem:[#allocation2 + $0xe14] sm:$0xff]
    %v570 = vld [vmem:[#allocation2 + $0xe1c] sm:$0xff]
    %v571 = vld [vmem:[#allocation2 + $0xe24] sm:$0xff]
    %v572 = vld [vmem:[#allocation2 + $0xe2c] sm:$0xff]
    %v573 = vld [vmem:[#allocation2 + $0xe34] sm:$0xf]
    %v574 = vld [vmem:[#allocation2 + $0xe38] sm:$0xff]
    %v575 = vld [vmem:[#allocation2 + $0xe40] sm:$0xff]
    %v576 = vld [vmem:[#allocation2 + $0xe48] sm:$0xff]
    %v577 = vld [vmem:[#allocation2 + $0xe50] sm:$0xff]
    %v578 = vld [vmem:[#allocation2 + $0xe58] sm:$0xff]
    %v579 = vld [vmem:[#allocation2 + $0xe60] sm:$0xff]
    %v580 = vld [vmem:[#allocation2 + $0xe68] sm:$0xf]
    %v581 = vld [vmem:[#allocation2 + $0xe6c] sm:$0xff]
    %v582 = vld [vmem:[#allocation2 + $0xe74] sm:$0xff]
    %v583 = vld [vmem:[#allocation2 + $0xe7c] sm:$0xff]
    %v584 = vld [vmem:[#allocation2 + $0xe84] sm:$0xff]
    %v585 = vld [vmem:[#allocation2 + $0xe8c] sm:$0xff]
    %v586 = vld [vmem:[#allocation2 + $0xe94] sm:$0xff]
    %v587 = vld [vmem:[#allocation2 + $0xe9c] sm:$0xf]
    %v588 = vld [vmem:[#allocation2 + $0xea0] sm:$0xff]
    %v589 = vld [vmem:[#allocation2 + $0xea8] sm:$0xff]
    %v590 = vld [vmem:[#allocation2 + $0xeb0] sm:$0xff]
    %v591 = vld [vmem:[#allocation2 + $0xeb8] sm:$0xff]
    %v592 = vld [vmem:[#allocation2 + $0xec0] sm:$0xff]
    %v593 = vld [vmem:[#allocation2 + $0xec8] sm:$0xff]
    %v594 = vld [vmem:[#allocation2 + $0xed0] sm:$0xf]
    %v595 = vld [vmem:[#allocation2 + $0xed4] sm:$0xff]
    %v596 = vld [vmem:[#allocation2 + $0xedc] sm:$0xff]
    %v597 = vld [vmem:[#allocation2 + $0xee4] sm:$0xff]
    %v598 = vld [vmem:[#allocation2 + $0xeec] sm:$0xff]
    %v599 = vld [vmem:[#allocation2 + $0xef4] sm:$0xff]
    %v600 = vld [vmem:[#allocation2 + $0xefc] sm:$0xff]
    %v601 = vld [vmem:[#allocation2 + $0xf04] sm:$0xf]
    %v602 = vld [vmem:[#allocation2 + $0xf08] sm:$0xff]
    %v603 = vld [vmem:[#allocation2 + $0xf10] sm:$0xff]
    %v604 = vld [vmem:[#allocation2 + $0xf18] sm:$0xff]
    %v605 = vld [vmem:[#allocation2 + $0xf20] sm:$0xff]
    %v606 = vld [vmem:[#allocation2 + $0xf28] sm:$0xff]
    %v607 = vld [vmem:[#allocation2 + $0xf30] sm:$0xff]
    %v608 = vld [vmem:[#allocation2 + $0xf38] sm:$0xf]
    %v609 = vld [vmem:[#allocation2 + $0xf3c] sm:$0xff]
    %v610 = vld [vmem:[#allocation2 + $0xf44] sm:$0xff]
    %v611 = vld [vmem:[#allocation2 + $0xf4c] sm:$0xff]
    %v612 = vld [vmem:[#allocation2 + $0xf54] sm:$0xff]
    %v613 = vld [vmem:[#allocation2 + $0xf5c] sm:$0xff]
    %v614 = vld [vmem:[#allocation2 + $0xf64] sm:$0xff]
    %v615 = vld [vmem:[#allocation2 + $0xf6c] sm:$0xf]
    %v616 = vld [vmem:[#allocation2 + $0xf70] sm:$0xff]
    %v617 = vld [vmem:[#allocation2 + $0xf78] sm:$0xff]
    %v618 = vld [vmem:[#allocation2 + $0xf80] sm:$0xff]
    %v619 = vld [vmem:[#allocation2 + $0xf88] sm:$0xff]
    %v620 = vld [vmem:[#allocation2 + $0xf90] sm:$0xff]
    %v621 = vld [vmem:[#allocation2 + $0xf98] sm:$0xff]
    %v622 = vld [vmem:[#allocation2 + $0xfa0] sm:$0xf]
    %v623 = vld [vmem:[#allocation2 + $0xfa4] sm:$0xff]
    %v624 = vld [vmem:[#allocation2 + $0xfac] sm:$0xff]
    %v625 = vld [vmem:[#allocation2 + $0xfb4] sm:$0xff]
    %v626 = vld [vmem:[#allocation2 + $0xfbc] sm:$0xff]
    %v627 = vld [vmem:[#allocation2 + $0xfc4] sm:$0xff]
    %v628 = vld [vmem:[#allocation2 + $0xfcc] sm:$0xff]
    %v629 = vld [vmem:[#allocation2 + $0xfd4] sm:$0xf]
    %v630 = vld [vmem:[#allocation2 + $0xfd8] sm:$0xff]
    %v631 = vld [vmem:[#allocation2 + $0xfe0] sm:$0xff]
    %v632 = vld [vmem:[#allocation2 + $0xfe8] sm:$0xff]
    %v633 = vld [vmem:[#allocation2 + $0xff0] sm:$0xff]
    %v634 = vld [vmem:[#allocation2 + $0xff8] sm:$0xff]
    %v635 = vld [vmem:[#allocation2 + $0x1000] sm:$0xff]
    %v636 = vld [vmem:[#allocation2 + $0x1008] sm:$0xf]
    %v637 = vld [vmem:[#allocation2 + $0x100c] sm:$0xff]
    %v638 = vld [vmem:[#allocation2 + $0x1014] sm:$0xff]
    %v639 = vld [vmem:[#allocation2 + $0x101c] sm:$0xff]
    %v640 = vld [vmem:[#allocation2 + $0x1024] sm:$0xff]
    %v641 = vld [vmem:[#allocation2 + $0x102c] sm:$0xff]
    %v642 = vld [vmem:[#allocation2 + $0x1034] sm:$0xff]
    %v643 = vld [vmem:[#allocation2 + $0x103c] sm:$0xf]
    %v644 = vld [vmem:[#allocation2 + $0x1040] sm:$0xff]
    %v645 = vld [vmem:[#allocation2 + $0x1048] sm:$0xff]
    %v646 = vld [vmem:[#allocation2 + $0x1050] sm:$0xff]
    %v647 = vld [vmem:[#allocation2 + $0x1058] sm:$0xff]
    %v648 = vld [vmem:[#allocation2 + $0x1060] sm:$0xff]
    %v649 = vld [vmem:[#allocation2 + $0x1068] sm:$0xff]
    %v650 = vld [vmem:[#allocation2 + $0x1070] sm:$0xf]
    %v651 = vld [vmem:[#allocation2 + $0x1074] sm:$0xff]
    %v652 = vld [vmem:[#allocation2 + $0x107c] sm:$0xff]
    %v653 = vld [vmem:[#allocation2 + $0x1084] sm:$0xff]
    %v654 = vld [vmem:[#allocation2 + $0x108c] sm:$0xff]
    %v655 = vld [vmem:[#allocation2 + $0x1094] sm:$0xff]
    %v656 = vld [vmem:[#allocation2 + $0x109c] sm:$0xff]
    %v657 = vld [vmem:[#allocation2 + $0x10a4] sm:$0xf]
    %v658 = vld [vmem:[#allocation2 + $0x10a8] sm:$0xff]
    %v659 = vld [vmem:[#allocation2 + $0x10b0] sm:$0xff]
    %v660 = vld [vmem:[#allocation2 + $0x10b8] sm:$0xff]
    %v661 = vld [vmem:[#allocation2 + $0x10c0] sm:$0xff]
    %v662 = vld [vmem:[#allocation2 + $0x10c8] sm:$0xff]
    %v663 = vld [vmem:[#allocation2 + $0x10d0] sm:$0xff]
    %v664 = vld [vmem:[#allocation2 + $0x10d8] sm:$0xf]
    %v665 = vld [vmem:[#allocation2 + $0x10dc] sm:$0xff]
    %v666 = vld [vmem:[#allocation2 + $0x10e4] sm:$0xff]
    %v667 = vld [vmem:[#allocation2 + $0x10ec] sm:$0xff]
    %v668 = vld [vmem:[#allocation2 + $0x10f4] sm:$0xff]
    %v669 = vld [vmem:[#allocation2 + $0x10fc] sm:$0xff]
    %v670 = vld [vmem:[#allocation2 + $0x1104] sm:$0xff]
    %v671 = vld [vmem:[#allocation2 + $0x110c] sm:$0xf]
    %v672 = vld [vmem:[#allocation2 + $0x1110] sm:$0xff]
    %v673 = vld [vmem:[#allocation2 + $0x1118] sm:$0xff]
    %v674 = vld [vmem:[#allocation2 + $0x1120] sm:$0xff]
    %v675 = vld [vmem:[#allocation2 + $0x1128] sm:$0xff]
    %v676 = vld [vmem:[#allocation2 + $0x1130] sm:$0xff]
    %v677 = vld [vmem:[#allocation2 + $0x1138] sm:$0xff]
    %v678 = vld [vmem:[#allocation2 + $0x1140] sm:$0xf]
    %v679 = vld [vmem:[#allocation2 + $0x1144] sm:$0xff]
    %v680 = vld [vmem:[#allocation2 + $0x114c] sm:$0xff]
    %v681 = vld [vmem:[#allocation2 + $0x1154] sm:$0xff]
    %v682 = vld [vmem:[#allocation2 + $0x115c] sm:$0xff]
    %v683 = vld [vmem:[#allocation2 + $0x1164] sm:$0xff]
    %v684 = vld [vmem:[#allocation2 + $0x116c] sm:$0xff]
    %v685 = vld [vmem:[#allocation2 + $0x1174] sm:$0xf]
    %v686 = vld [vmem:[#allocation2 + $0x1178] sm:$0xff]
    %v687 = vld [vmem:[#allocation2 + $0x1180] sm:$0xff]
    %v688 = vld [vmem:[#allocation2 + $0x1188] sm:$0xff]
    %v689 = vld [vmem:[#allocation2 + $0x1190] sm:$0xff]
    %v690 = vld [vmem:[#allocation2 + $0x1198] sm:$0xff]
    %v691 = vld [vmem:[#allocation2 + $0x11a0] sm:$0xff]
    %v692 = vld [vmem:[#allocation2 + $0x11a8] sm:$0xf]
    %v693 = vld [vmem:[#allocation2 + $0x11ac] sm:$0xff]
    %v694 = vld [vmem:[#allocation2 + $0x11b4] sm:$0xff]
    %v695 = vld [vmem:[#allocation2 + $0x11bc] sm:$0xff]
    %v696 = vld [vmem:[#allocation2 + $0x11c4] sm:$0xff]
    %v697 = vld [vmem:[#allocation2 + $0x11cc] sm:$0xff]
    %v698 = vld [vmem:[#allocation2 + $0x11d4] sm:$0xff]
    %v699 = vld [vmem:[#allocation2 + $0x11dc] sm:$0xf]
    %v700 = vld [vmem:[#allocation2 + $0x11e0] sm:$0xff]
    %v701 = vld [vmem:[#allocation2 + $0x11e8] sm:$0xff]
    %v702 = vld [vmem:[#allocation2 + $0x11f0] sm:$0xff]
    %v703 = vld [vmem:[#allocation2 + $0x11f8] sm:$0xff]
    %v704 = vld [vmem:[#allocation2 + $0x1200] sm:$0xff]
    %v705 = vld [vmem:[#allocation2 + $0x1208] sm:$0xff]
    %v706 = vld [vmem:[#allocation2 + $0x1210] sm:$0xf]
    %v707 = vld [vmem:[#allocation2 + $0x1214] sm:$0xff]
    %v708 = vld [vmem:[#allocation2 + $0x121c] sm:$0xff]
    %v709 = vld [vmem:[#allocation2 + $0x1224] sm:$0xff]
    %v710 = vld [vmem:[#allocation2 + $0x122c] sm:$0xff]
    %v711 = vld [vmem:[#allocation2 + $0x1234] sm:$0xff]
    %v712 = vld [vmem:[#allocation2 + $0x123c] sm:$0xff]
    %v713 = vld [vmem:[#allocation2 + $0x1244] sm:$0xf]
    %v714 = vld [vmem:[#allocation2 + $0x1248] sm:$0xff]
    %v715 = vld [vmem:[#allocation2 + $0x1250] sm:$0xff]
    %v716 = vld [vmem:[#allocation2 + $0x1258] sm:$0xff]
    %v717 = vld [vmem:[#allocation2 + $0x1260] sm:$0xff]
    %v718 = vld [vmem:[#allocation2 + $0x1268] sm:$0xff]
    %v719 = vld [vmem:[#allocation2 + $0x1270] sm:$0xff]
    %v720 = vld [vmem:[#allocation2 + $0x1278] sm:$0xf]
    %v721 = vld [vmem:[#allocation2 + $0x127c] sm:$0xff]
    %v722 = vld [vmem:[#allocation2 + $0x1284] sm:$0xff]
    %v723 = vld [vmem:[#allocation2 + $0x128c] sm:$0xff]
    %v724 = vld [vmem:[#allocation2 + $0x1294] sm:$0xff]
    %v725 = vld [vmem:[#allocation2 + $0x129c] sm:$0xff]
    %v726 = vld [vmem:[#allocation2 + $0x12a4] sm:$0xff]
    %v727 = vld [vmem:[#allocation2 + $0x12ac] sm:$0xf]
    %v728 = vld [vmem:[#allocation2 + $0x12b0] sm:$0xff]
    %v729 = vld [vmem:[#allocation2 + $0x12b8] sm:$0xff]
    %v730 = vld [vmem:[#allocation2 + $0x12c0] sm:$0xff]
    %v731 = vld [vmem:[#allocation2 + $0x12c8] sm:$0xff]
    %v732 = vld [vmem:[#allocation2 + $0x12d0] sm:$0xff]
    %v733 = vld [vmem:[#allocation2 + $0x12d8] sm:$0xff]
    %v734 = vld [vmem:[#allocation2 + $0x12e0] sm:$0xf]
    %v735 = vld [vmem:[#allocation2 + $0x12e4] sm:$0xff]
    %v736 = vld [vmem:[#allocation2 + $0x12ec] sm:$0xff]
    %v737 = vld [vmem:[#allocation2 + $0x12f4] sm:$0xff]
    %v738 = vld [vmem:[#allocation2 + $0x12fc] sm:$0xff]
    %v739 = vld [vmem:[#allocation2 + $0x1304] sm:$0xff]
    %v740 = vld [vmem:[#allocation2 + $0x130c] sm:$0xff]
    %v741 = vld [vmem:[#allocation2 + $0x1314] sm:$0xf]
    %v742 = vld [vmem:[#allocation2 + $0x1318] sm:$0xff]
    %v743 = vld [vmem:[#allocation2 + $0x1320] sm:$0xff]
    %v744 = vld [vmem:[#allocation2 + $0x1328] sm:$0xff]
    %v745 = vld [vmem:[#allocation2 + $0x1330] sm:$0xff]
    %v746 = vld [vmem:[#allocation2 + $0x1338] sm:$0xff]
    %v747 = vld [vmem:[#allocation2 + $0x1340] sm:$0xff]
    %v748 = vld [vmem:[#allocation2 + $0x1348] sm:$0xf]
    %v749 = vld [vmem:[#allocation2 + $0x134c] sm:$0xff]
    %v750 = vld [vmem:[#allocation2 + $0x1354] sm:$0xff]
    %v751 = vld [vmem:[#allocation2 + $0x135c] sm:$0xff]
    %v752 = vld [vmem:[#allocation2 + $0x1364] sm:$0xff]
    %v753 = vld [vmem:[#allocation2 + $0x136c] sm:$0xff]
    %v754 = vld [vmem:[#allocation2 + $0x1374] sm:$0xff]
    %v755 = vld [vmem:[#allocation2 + $0x137c] sm:$0xf]
    %v756 = vld [vmem:[#allocation5] sm:$0xff]
    %v757 = vld [vmem:[#allocation5 + $0x8] sm:$0x1f]
    %v760 = vperm.slane %v756, 0
    %v761 = vperm.slane %v756, 1
    %v762 = vperm.slane %v756, 2
    %v763 = vperm.slane %v756, 3
    %v764 = vperm.slane %v756, 4
    %v765 = vperm.slane %v756, 5
    %v766 = vperm.slane %v756, 6
    %v767 = vperm.slane %v756, 7
    %v768 = vperm.slane %v757, 0
    %v769 = vperm.slane %v757, 1
    %v770 = vperm.slane %v757, 2
    %v771 = vperm.slane %v757, 3
    %v772 = vperm.slane %v757, 4
    %787 = vst [vmem:[#allocation1] ss:$9 sm:$0xff] %v83
    %v788 = vld [vmem:[#allocation1] sm:$0xff]
    %v789 = vld [vmem:[#allocation1 + $0x9] sm:$0xff]
    %v790 = vld [vmem:[#allocation1 + $0x12] sm:$0xff]
    %v791 = vld [vmem:[#allocation1 + $0x1b] sm:$0xff]
    %v792 = vld [vmem:[#allocation1 + $0x24] sm:$0xff]
    %v793 = vld [vmem:[#allocation1 + $0x2d] sm:$0xff]
    %v1472 = vunpack.c.l.b16 %v84
    %v1473 = vunpack.c.h.b16 %v84
    %v1474 = vunpack.c.l.b16 %v85
    %v1475 = vunpack.c.h.b16 %v85
    %v1476 = vunpack.c.l.b16 %v86
    %v1477 = vunpack.c.h.b16 %v86
    %v1478 = vunpack.c.l.b16 %v87
    %v1479 = vunpack.c.h.b16 %v87
    %v1480 = vunpack.c.l.b16 %v88
    %v1481 = vunpack.c.h.b16 %v88
    %v1482 = vunpack.c.l.b16 %v89
    %v1483 = vunpack.c.h.b16 %v89
    %v1484 = vunpack.c.l.b16 %v90
    %v1485 = vunpack.c.l.b16 %v91
    %v1486 = vunpack.c.h.b16 %v91
    %v1487 = vunpack.c.l.b16 %v92
    %v1488 = vunpack.c.h.b16 %v92
    %v1489 = vunpack.c.l.b16 %v93
    %v1490 = vunpack.c.h.b16 %v93
    %v1491 = vunpack.c.l.b16 %v94
    %v1492 = vunpack.c.h.b16 %v94
    %v1493 = vunpack.c.l.b16 %v95
    %v1494 = vunpack.c.h.b16 %v95
    %v1495 = vunpack.c.l.b16 %v96
    %v1496 = vunpack.c.h.b16 %v96
    %v1497 = vunpack.c.l.b16 %v97
    %v1498 = vunpack.c.l.b16 %v98
    %v1499 = vunpack.c.h.b16 %v98
    %v1500 = vunpack.c.l.b16 %v99
    %v1501 = vunpack.c.h.b16 %v99
    %v1502 = vunpack.c.l.b16 %v100
    %v1503 = vunpack.c.h.b16 %v100
    %v1504 = vunpack.c.l.b16 %v101
    %v1505 = vunpack.c.h.b16 %v101
    %v1506 = vunpack.c.l.b16 %v102
    %v1507 = vunpack.c.h.b16 %v102
    %v1508 = vunpack.c.l.b16 %v103
    %v1509 = vunpack.c.h.b16 %v103
    %v1510 = vunpack.c.l.b16 %v104
    %v1511 = vunpack.c.l.b16 %v105
    %v1512 = vunpack.c.h.b16 %v105
    %v1513 = vunpack.c.l.b16 %v106
    %v1514 = vunpack.c.h.b16 %v106
    %v1515 = vunpack.c.l.b16 %v107
    %v1516 = vunpack.c.h.b16 %v107
    %v1517 = vunpack.c.l.b16 %v108
    %v1518 = vunpack.c.h.b16 %v108
    %v1519 = vunpack.c.l.b16 %v109
    %v1520 = vunpack.c.h.b16 %v109
    %v1521 = vunpack.c.l.b16 %v110
    %v1522 = vunpack.c.h.b16 %v110
    %v1523 = vunpack.c.l.b16 %v111
    %v1524 = vunpack.c.l.b16 %v112
    %v1525 = vunpack.c.h.b16 %v112
    %v1526 = vunpack.c.l.b16 %v113
    %v1527 = vunpack.c.h.b16 %v113
    %v1528 = vunpack.c.l.b16 %v114
    %v1529 = vunpack.c.h.b16 %v114
    %v1530 = vunpack.c.l.b16 %v115
    %v1531 = vunpack.c.h.b16 %v115
    %v1532 = vunpack.c.l.b16 %v116
    %v1533 = vunpack.c.h.b16 %v116
    %v1534 = vunpack.c.l.b16 %v117
    %v1535 = vunpack.c.h.b16 %v117
    %v1536 = vunpack.c.l.b16 %v118
    %v1537 = vunpack.c.l.b16 %v119
    %v1538 = vunpack.c.h.b16 %v119
    %v1539 = vunpack.c.l.b16 %v120
    %v1540 = vunpack.c.h.b16 %v120
    %v1541 = vunpack.c.l.b16 %v121
    %v1542 = vunpack.c.h.b16 %v121
    %v1543 = vunpack.c.l.b16 %v122
    %v1544 = vunpack.c.h.b16 %v122
    %v1545 = vunpack.c.l.b16 %v123
    %v1546 = vunpack.c.h.b16 %v123
    %v1547 = vunpack.c.l.b16 %v124
    %v1548 = vunpack.c.h.b16 %v124
    %v1549 = vunpack.c.l.b16 %v125
    %v1550 = vunpack.c.l.b16 %v126
    %v1551 = vunpack.c.h.b16 %v126
    %v1552 = vunpack.c.l.b16 %v127
    %v1553 = vunpack.c.h.b16 %v127
    %v1554 = vunpack.c.l.b16 %v128
    %v1555 = vunpack.c.h.b16 %v128
    %v1556 = vunpack.c.l.b16 %v129
    %v1557 = vunpack.c.h.b16 %v129
    %v1558 = vunpack.c.l.b16 %v130
    %v1559 = vunpack.c.h.b16 %v130
    %v1560 = vunpack.c.l.b16 %v131
    %v1561 = vunpack.c.h.b16 %v131
    %v1562 = vunpack.c.l.b16 %v132
    %v1563 = vunpack.c.l.b16 %v133
    %v1564 = vunpack.c.h.b16 %v133
    %v1565 = vunpack.c.l.b16 %v134
    %v1566 = vunpack.c.h.b16 %v134
    %v1567 = vunpack.c.l.b16 %v135
    %v1568 = vunpack.c.h.b16 %v135
    %v1569 = vunpack.c.l.b16 %v136
    %v1570 = vunpack.c.h.b16 %v136
    %v1571 = vunpack.c.l.b16 %v137
    %v1572 = vunpack.c.h.b16 %v137
    %v1573 = vunpack.c.l.b16 %v138
    %v1574 = vunpack.c.h.b16 %v138
    %v1575 = vunpack.c.l.b16 %v139
    %v1576 = vunpack.c.l.b16 %v140
    %v1577 = vunpack.c.h.b16 %v140
    %v1578 = vunpack.c.l.b16 %v141
    %v1579 = vunpack.c.h.b16 %v141
    %v1580 = vunpack.c.l.b16 %v142
    %v1581 = vunpack.c.h.b16 %v142
    %v1582 = vunpack.c.l.b16 %v143
    %v1583 = vunpack.c.h.b16 %v143
    %v1584 = vunpack.c.l.b16 %v144
    %v1585 = vunpack.c.h.b16 %v144
    %v1586 = vunpack.c.l.b16 %v145
    %v1587 = vunpack.c.h.b16 %v145
    %v1588 = vunpack.c.l.b16 %v146
    %v1589 = vunpack.c.l.b16 %v147
    %v1590 = vunpack.c.h.b16 %v147
    %v1591 = vunpack.c.l.b16 %v148
    %v1592 = vunpack.c.h.b16 %v148
    %v1593 = vunpack.c.l.b16 %v149
    %v1594 = vunpack.c.h.b16 %v149
    %v1595 = vunpack.c.l.b16 %v150
    %v1596 = vunpack.c.h.b16 %v150
    %v1597 = vunpack.c.l.b16 %v151
    %v1598 = vunpack.c.h.b16 %v151
    %v1599 = vunpack.c.l.b16 %v152
    %v1600 = vunpack.c.h.b16 %v152
    %v1601 = vunpack.c.l.b16 %v153
    %v1602 = vunpack.c.l.b16 %v154
    %v1603 = vunpack.c.h.b16 %v154
    %v1604 = vunpack.c.l.b16 %v155
    %v1605 = vunpack.c.h.b16 %v155
    %v1606 = vunpack.c.l.b16 %v156
    %v1607 = vunpack.c.h.b16 %v156
    %v1608 = vunpack.c.l.b16 %v157
    %v1609 = vunpack.c.h.b16 %v157
    %v1610 = vunpack.c.l.b16 %v158
    %v1611 = vunpack.c.h.b16 %v158
    %v1612 = vunpack.c.l.b16 %v159
    %v1613 = vunpack.c.h.b16 %v159
    %v1614 = vunpack.c.l.b16 %v160
    %v1615 = vunpack.c.l.b16 %v161
    %v1616 = vunpack.c.h.b16 %v161
    %v1617 = vunpack.c.l.b16 %v162
    %v1618 = vunpack.c.h.b16 %v162
    %v1619 = vunpack.c.l.b16 %v163
    %v1620 = vunpack.c.h.b16 %v163
    %v1621 = vunpack.c.l.b16 %v164
    %v1622 = vunpack.c.h.b16 %v164
    %v1623 = vunpack.c.l.b16 %v165
    %v1624 = vunpack.c.h.b16 %v165
    %v1625 = vunpack.c.l.b16 %v166
    %v1626 = vunpack.c.h.b16 %v166
    %v1627 = vunpack.c.l.b16 %v167
    %v1628 = vunpack.c.l.b16 %v168
    %v1629 = vunpack.c.h.b16 %v168
    %v1630 = vunpack.c.l.b16 %v169
    %v1631 = vunpack.c.h.b16 %v169
    %v1632 = vunpack.c.l.b16 %v170
    %v1633 = vunpack.c.h.b16 %v170
    %v1634 = vunpack.c.l.b16 %v171
    %v1635 = vunpack.c.h.b16 %v171
    %v1636 = vunpack.c.l.b16 %v172
    %v1637 = vunpack.c.h.b16 %v172
    %v1638 = vunpack.c.l.b16 %v173
    %v1639 = vunpack.c.h.b16 %v173
    %v1640 = vunpack.c.l.b16 %v174
    %v1641 = vunpack.c.l.b16 %v175
    %v1642 = vunpack.c.h.b16 %v175
    %v1643 = vunpack.c.l.b16 %v176
    %v1644 = vunpack.c.h.b16 %v176
    %v1645 = vunpack.c.l.b16 %v177
    %v1646 = vunpack.c.h.b16 %v177
    %v1647 = vunpack.c.l.b16 %v178
    %v1648 = vunpack.c.h.b16 %v178
    %v1649 = vunpack.c.l.b16 %v179
    %v1650 = vunpack.c.h.b16 %v179
    %v1651 = vunpack.c.l.b16 %v180
    %v1652 = vunpack.c.h.b16 %v180
    %v1653 = vunpack.c.l.b16 %v181
    %v1654 = vunpack.c.l.b16 %v182
    %v1655 = vunpack.c.h.b16 %v182
    %v1656 = vunpack.c.l.b16 %v183
    %v1657 = vunpack.c.h.b16 %v183
    %v1658 = vunpack.c.l.b16 %v184
    %v1659 = vunpack.c.h.b16 %v184
    %v1660 = vunpack.c.l.b16 %v185
    %v1661 = vunpack.c.h.b16 %v185
    %v1662 = vunpack.c.l.b16 %v186
    %v1663 = vunpack.c.h.b16 %v186
    %v1664 = vunpack.c.l.b16 %v187
    %v1665 = vunpack.c.h.b16 %v187
    %v1666 = vunpack.c.l.b16 %v188
    %v1667 = vunpack.c.l.b16 %v189
    %v1668 = vunpack.c.h.b16 %v189
    %v1669 = vunpack.c.l.b16 %v190
    %v1670 = vunpack.c.h.b16 %v190
    %v1671 = vunpack.c.l.b16 %v191
    %v1672 = vunpack.c.h.b16 %v191
    %v1673 = vunpack.c.l.b16 %v192
    %v1674 = vunpack.c.h.b16 %v192
    %v1675 = vunpack.c.l.b16 %v193
    %v1676 = vunpack.c.h.b16 %v193
    %v1677 = vunpack.c.l.b16 %v194
    %v1678 = vunpack.c.h.b16 %v194
    %v1679 = vunpack.c.l.b16 %v195
    %v1680 = vunpack.c.l.b16 %v196
    %v1681 = vunpack.c.h.b16 %v196
    %v1682 = vunpack.c.l.b16 %v197
    %v1683 = vunpack.c.h.b16 %v197
    %v1684 = vunpack.c.l.b16 %v198
    %v1685 = vunpack.c.h.b16 %v198
    %v1686 = vunpack.c.l.b16 %v199
    %v1687 = vunpack.c.h.b16 %v199
    %v1688 = vunpack.c.l.b16 %v200
    %v1689 = vunpack.c.h.b16 %v200
    %v1690 = vunpack.c.l.b16 %v201
    %v1691 = vunpack.c.h.b16 %v201
    %v1692 = vunpack.c.l.b16 %v202
    %v1693 = vunpack.c.l.b16 %v203
    %v1694 = vunpack.c.h.b16 %v203
    %v1695 = vunpack.c.l.b16 %v204
    %v1696 = vunpack.c.h.b16 %v204
    %v1697 = vunpack.c.l.b16 %v205
    %v1698 = vunpack.c.h.b16 %v205
    %v1699 = vunpack.c.l.b16 %v206
    %v1700 = vunpack.c.h.b16 %v206
    %v1701 = vunpack.c.l.b16 %v207
    %v1702 = vunpack.c.h.b16 %v207
    %v1703 = vunpack.c.l.b16 %v208
    %v1704 = vunpack.c.h.b16 %v208
    %v1705 = vunpack.c.l.b16 %v209
    %v1706 = vunpack.c.l.b16 %v210
    %v1707 = vunpack.c.h.b16 %v210
    %v1708 = vunpack.c.l.b16 %v211
    %v1709 = vunpack.c.h.b16 %v211
    %v1710 = vunpack.c.l.b16 %v212
    %v1711 = vunpack.c.h.b16 %v212
    %v1712 = vunpack.c.l.b16 %v213
    %v1713 = vunpack.c.h.b16 %v213
    %v1714 = vunpack.c.l.b16 %v214
    %v1715 = vunpack.c.h.b16 %v214
    %v1716 = vunpack.c.l.b16 %v215
    %v1717 = vunpack.c.h.b16 %v215
    %v1718 = vunpack.c.l.b16 %v216
    %v1719 = vunpack.c.l.b16 %v217
    %v1720 = vunpack.c.h.b16 %v217
    %v1721 = vunpack.c.l.b16 %v218
    %v1722 = vunpack.c.h.b16 %v218
    %v1723 = vunpack.c.l.b16 %v219
    %v1724 = vunpack.c.h.b16 %v219
    %v1725 = vunpack.c.l.b16 %v220
    %v1726 = vunpack.c.h.b16 %v220
    %v1727 = vunpack.c.l.b16 %v221
    %v1728 = vunpack.c.h.b16 %v221
    %v1729 = vunpack.c.l.b16 %v222
    %v1730 = vunpack.c.h.b16 %v222
    %v1731 = vunpack.c.l.b16 %v223
    %v1732 = vunpack.c.l.b16 %v224
    %v1733 = vunpack.c.h.b16 %v224
    %v1734 = vunpack.c.l.b16 %v225
    %v1735 = vunpack.c.h.b16 %v225
    %v1736 = vunpack.c.l.b16 %v226
    %v1737 = vunpack.c.h.b16 %v226
    %v1738 = vunpack.c.l.b16 %v227
    %v1739 = vunpack.c.h.b16 %v227
    %v1740 = vunpack.c.l.b16 %v228
    %v1741 = vunpack.c.h.b16 %v228
    %v1742 = vunpack.c.l.b16 %v229
    %v1743 = vunpack.c.h.b16 %v229
    %v1744 = vunpack.c.l.b16 %v230
    %v1745 = vunpack.c.l.b16 %v231
    %v1746 = vunpack.c.h.b16 %v231
    %v1747 = vunpack.c.l.b16 %v232
    %v1748 = vunpack.c.h.b16 %v232
    %v1749 = vunpack.c.l.b16 %v233
    %v1750 = vunpack.c.h.b16 %v233
    %v1751 = vunpack.c.l.b16 %v234
    %v1752 = vunpack.c.h.b16 %v234
    %v1753 = vunpack.c.l.b16 %v235
    %v1754 = vunpack.c.h.b16 %v235
    %v1755 = vunpack.c.l.b16 %v236
    %v1756 = vunpack.c.h.b16 %v236
    %v1757 = vunpack.c.l.b16 %v237
    %v1758 = vunpack.c.l.b16 %v238
    %v1759 = vunpack.c.h.b16 %v238
    %v1760 = vunpack.c.l.b16 %v239
    %v1761 = vunpack.c.h.b16 %v239
    %v1762 = vunpack.c.l.b16 %v240
    %v1763 = vunpack.c.h.b16 %v240
    %v1764 = vunpack.c.l.b16 %v241
    %v1765 = vunpack.c.h.b16 %v241
    %v1766 = vunpack.c.l.b16 %v242
    %v1767 = vunpack.c.h.b16 %v242
    %v1768 = vunpack.c.l.b16 %v243
    %v1769 = vunpack.c.h.b16 %v243
    %v1770 = vunpack.c.l.b16 %v244
    %v1771 = vunpack.c.l.b16 %v245
    %v1772 = vunpack.c.h.b16 %v245
    %v1773 = vunpack.c.l.b16 %v246
    %v1774 = vunpack.c.h.b16 %v246
    %v1775 = vunpack.c.l.b16 %v247
    %v1776 = vunpack.c.h.b16 %v247
    %v1777 = vunpack.c.l.b16 %v248
    %v1778 = vunpack.c.h.b16 %v248
    %v1779 = vunpack.c.l.b16 %v249
    %v1780 = vunpack.c.h.b16 %v249
    %v1781 = vunpack.c.l.b16 %v250
    %v1782 = vunpack.c.h.b16 %v250
    %v1783 = vunpack.c.l.b16 %v251
    %v1784 = vunpack.c.l.b16 %v252
    %v1785 = vunpack.c.h.b16 %v252
    %v1786 = vunpack.c.l.b16 %v253
    %v1787 = vunpack.c.h.b16 %v253
    %v1788 = vunpack.c.l.b16 %v254
    %v1789 = vunpack.c.h.b16 %v254
    %v1790 = vunpack.c.l.b16 %v255
    %v1791 = vunpack.c.h.b16 %v255
    %v1792 = vunpack.c.l.b16 %v256
    %v1793 = vunpack.c.h.b16 %v256
    %v1794 = vunpack.c.l.b16 %v257
    %v1795 = vunpack.c.h.b16 %v257
    %v1796 = vunpack.c.l.b16 %v258
    %v1797 = vunpack.c.l.b16 %v259
    %v1798 = vunpack.c.h.b16 %v259
    %v1799 = vunpack.c.l.b16 %v260
    %v1800 = vunpack.c.h.b16 %v260
    %v1801 = vunpack.c.l.b16 %v261
    %v1802 = vunpack.c.h.b16 %v261
    %v1803 = vunpack.c.l.b16 %v262
    %v1804 = vunpack.c.h.b16 %v262
    %v1805 = vunpack.c.l.b16 %v263
    %v1806 = vunpack.c.h.b16 %v263
    %v1807 = vunpack.c.l.b16 %v264
    %v1808 = vunpack.c.h.b16 %v264
    %v1809 = vunpack.c.l.b16 %v265
    %v1810 = vunpack.c.l.b16 %v266
    %v1811 = vunpack.c.h.b16 %v266
    %v1812 = vunpack.c.l.b16 %v267
    %v1813 = vunpack.c.h.b16 %v267
    %v1814 = vunpack.c.l.b16 %v268
    %v1815 = vunpack.c.h.b16 %v268
    %v1816 = vunpack.c.l.b16 %v269
    %v1817 = vunpack.c.h.b16 %v269
    %v1818 = vunpack.c.l.b16 %v270
    %v1819 = vunpack.c.h.b16 %v270
    %v1820 = vunpack.c.l.b16 %v271
    %v1821 = vunpack.c.h.b16 %v271
    %v1822 = vunpack.c.l.b16 %v272
    %v1823 = vunpack.c.l.b16 %v273
    %v1824 = vunpack.c.h.b16 %v273
    %v1825 = vunpack.c.l.b16 %v274
    %v1826 = vunpack.c.h.b16 %v274
    %v1827 = vunpack.c.l.b16 %v275
    %v1828 = vunpack.c.h.b16 %v275
    %v1829 = vunpack.c.l.b16 %v276
    %v1830 = vunpack.c.h.b16 %v276
    %v1831 = vunpack.c.l.b16 %v277
    %v1832 = vunpack.c.h.b16 %v277
    %v1833 = vunpack.c.l.b16 %v278
    %v1834 = vunpack.c.h.b16 %v278
    %v1835 = vunpack.c.l.b16 %v279
    %v1836 = vunpack.c.l.b16 %v280
    %v1837 = vunpack.c.h.b16 %v280
    %v1838 = vunpack.c.l.b16 %v281
    %v1839 = vunpack.c.h.b16 %v281
    %v1840 = vunpack.c.l.b16 %v282
    %v1841 = vunpack.c.h.b16 %v282
    %v1842 = vunpack.c.l.b16 %v283
    %v1843 = vunpack.c.h.b16 %v283
    %v1844 = vunpack.c.l.b16 %v284
    %v1845 = vunpack.c.h.b16 %v284
    %v1846 = vunpack.c.l.b16 %v285
    %v1847 = vunpack.c.h.b16 %v285
    %v1848 = vunpack.c.l.b16 %v286
    %v1849 = vunpack.c.l.b16 %v287
    %v1850 = vunpack.c.h.b16 %v287
    %v1851 = vunpack.c.l.b16 %v288
    %v1852 = vunpack.c.h.b16 %v288
    %v1853 = vunpack.c.l.b16 %v289
    %v1854 = vunpack.c.h.b16 %v289
    %v1855 = vunpack.c.l.b16 %v290
    %v1856 = vunpack.c.h.b16 %v290
    %v1857 = vunpack.c.l.b16 %v291
    %v1858 = vunpack.c.h.b16 %v291
    %v1859 = vunpack.c.l.b16 %v292
    %v1860 = vunpack.c.h.b16 %v292
    %v1861 = vunpack.c.l.b16 %v293
    %v1862 = vunpack.c.l.b16 %v294
    %v1863 = vunpack.c.h.b16 %v294
    %v1864 = vunpack.c.l.b16 %v295
    %v1865 = vunpack.c.h.b16 %v295
    %v1866 = vunpack.c.l.b16 %v296
    %v1867 = vunpack.c.h.b16 %v296
    %v1868 = vunpack.c.l.b16 %v297
    %v1869 = vunpack.c.h.b16 %v297
    %v1870 = vunpack.c.l.b16 %v298
    %v1871 = vunpack.c.h.b16 %v298
    %v1872 = vunpack.c.l.b16 %v299
    %v1873 = vunpack.c.h.b16 %v299
    %v1874 = vunpack.c.l.b16 %v300
    %v1875 = vunpack.c.l.b16 %v301
    %v1876 = vunpack.c.h.b16 %v301
    %v1877 = vunpack.c.l.b16 %v302
    %v1878 = vunpack.c.h.b16 %v302
    %v1879 = vunpack.c.l.b16 %v303
    %v1880 = vunpack.c.h.b16 %v303
    %v1881 = vunpack.c.l.b16 %v304
    %v1882 = vunpack.c.h.b16 %v304
    %v1883 = vunpack.c.l.b16 %v305
    %v1884 = vunpack.c.h.b16 %v305
    %v1885 = vunpack.c.l.b16 %v306
    %v1886 = vunpack.c.h.b16 %v306
    %v1887 = vunpack.c.l.b16 %v307
    %v1888 = vunpack.c.l.b16 %v308
    %v1889 = vunpack.c.h.b16 %v308
    %v1890 = vunpack.c.l.b16 %v309
    %v1891 = vunpack.c.h.b16 %v309
    %v1892 = vunpack.c.l.b16 %v310
    %v1893 = vunpack.c.h.b16 %v310
    %v1894 = vunpack.c.l.b16 %v311
    %v1895 = vunpack.c.h.b16 %v311
    %v1896 = vunpack.c.l.b16 %v312
    %v1897 = vunpack.c.h.b16 %v312
    %v1898 = vunpack.c.l.b16 %v313
    %v1899 = vunpack.c.h.b16 %v313
    %v1900 = vunpack.c.l.b16 %v314
    %v1901 = vunpack.c.l.b16 %v315
    %v1902 = vunpack.c.h.b16 %v315
    %v1903 = vunpack.c.l.b16 %v316
    %v1904 = vunpack.c.h.b16 %v316
    %v1905 = vunpack.c.l.b16 %v317
    %v1906 = vunpack.c.h.b16 %v317
    %v1907 = vunpack.c.l.b16 %v318
    %v1908 = vunpack.c.h.b16 %v318
    %v1909 = vunpack.c.l.b16 %v319
    %v1910 = vunpack.c.h.b16 %v319
    %v1911 = vunpack.c.l.b16 %v320
    %v1912 = vunpack.c.h.b16 %v320
    %v1913 = vunpack.c.l.b16 %v321
    %v1914 = vunpack.c.l.b16 %v322
    %v1915 = vunpack.c.h.b16 %v322
    %v1916 = vunpack.c.l.b16 %v323
    %v1917 = vunpack.c.h.b16 %v323
    %v1918 = vunpack.c.l.b16 %v324
    %v1919 = vunpack.c.h.b16 %v324
    %v1920 = vunpack.c.l.b16 %v325
    %v1921 = vunpack.c.h.b16 %v325
    %v1922 = vunpack.c.l.b16 %v326
    %v1923 = vunpack.c.h.b16 %v326
    %v1924 = vunpack.c.l.b16 %v327
    %v1925 = vunpack.c.h.b16 %v327
    %v1926 = vunpack.c.l.b16 %v328
    %v1927 = vunpack.c.l.b16 %v329
    %v1928 = vunpack.c.h.b16 %v329
    %v1929 = vunpack.c.l.b16 %v330
    %v1930 = vunpack.c.h.b16 %v330
    %v1931 = vunpack.c.l.b16 %v331
    %v1932 = vunpack.c.h.b16 %v331
    %v1933 = vunpack.c.l.b16 %v332
    %v1934 = vunpack.c.h.b16 %v332
    %v1935 = vunpack.c.l.b16 %v333
    %v1936 = vunpack.c.h.b16 %v333
    %v1937 = vunpack.c.l.b16 %v334
    %v1938 = vunpack.c.h.b16 %v334
    %v1939 = vunpack.c.l.b16 %v335
    %v1940 = vunpack.c.l.b16 %v336
    %v1941 = vunpack.c.h.b16 %v336
    %v1942 = vunpack.c.l.b16 %v337
    %v1943 = vunpack.c.h.b16 %v337
    %v1944 = vunpack.c.l.b16 %v338
    %v1945 = vunpack.c.h.b16 %v338
    %v1946 = vunpack.c.l.b16 %v339
    %v1947 = vunpack.c.h.b16 %v339
    %v1948 = vunpack.c.l.b16 %v340
    %v1949 = vunpack.c.h.b16 %v340
    %v1950 = vunpack.c.l.b16 %v341
    %v1951 = vunpack.c.h.b16 %v341
    %v1952 = vunpack.c.l.b16 %v342
    %v1953 = vunpack.c.l.b16 %v343
    %v1954 = vunpack.c.h.b16 %v343
    %v1955 = vunpack.c.l.b16 %v344
    %v1956 = vunpack.c.h.b16 %v344
    %v1957 = vunpack.c.l.b16 %v345
    %v1958 = vunpack.c.h.b16 %v345
    %v1959 = vunpack.c.l.b16 %v346
    %v1960 = vunpack.c.h.b16 %v346
    %v1961 = vunpack.c.l.b16 %v347
    %v1962 = vunpack.c.h.b16 %v347
    %v1963 = vunpack.c.l.b16 %v348
    %v1964 = vunpack.c.h.b16 %v348
    %v1965 = vunpack.c.l.b16 %v349
    %v1966 = vunpack.c.l.b16 %v350
    %v1967 = vunpack.c.h.b16 %v350
    %v1968 = vunpack.c.l.b16 %v351
    %v1969 = vunpack.c.h.b16 %v351
    %v1970 = vunpack.c.l.b16 %v352
    %v1971 = vunpack.c.h.b16 %v352
    %v1972 = vunpack.c.l.b16 %v353
    %v1973 = vunpack.c.h.b16 %v353
    %v1974 = vunpack.c.l.b16 %v354
    %v1975 = vunpack.c.h.b16 %v354
    %v1976 = vunpack.c.l.b16 %v355
    %v1977 = vunpack.c.h.b16 %v355
    %v1978 = vunpack.c.l.b16 %v356
    %v1979 = vunpack.c.l.b16 %v357
    %v1980 = vunpack.c.h.b16 %v357
    %v1981 = vunpack.c.l.b16 %v358
    %v1982 = vunpack.c.h.b16 %v358
    %v1983 = vunpack.c.l.b16 %v359
    %v1984 = vunpack.c.h.b16 %v359
    %v1985 = vunpack.c.l.b16 %v360
    %v1986 = vunpack.c.h.b16 %v360
    %v1987 = vunpack.c.l.b16 %v361
    %v1988 = vunpack.c.h.b16 %v361
    %v1989 = vunpack.c.l.b16 %v362
    %v1990 = vunpack.c.h.b16 %v362
    %v1991 = vunpack.c.l.b16 %v363
    %v1992 = vunpack.c.l.b16 %v364
    %v1993 = vunpack.c.h.b16 %v364
    %v1994 = vunpack.c.l.b16 %v365
    %v1995 = vunpack.c.h.b16 %v365
    %v1996 = vunpack.c.l.b16 %v366
    %v1997 = vunpack.c.h.b16 %v366
    %v1998 = vunpack.c.l.b16 %v367
    %v1999 = vunpack.c.h.b16 %v367
    %v2000 = vunpack.c.l.b16 %v368
    %v2001 = vunpack.c.h.b16 %v368
    %v2002 = vunpack.c.l.b16 %v369
    %v2003 = vunpack.c.h.b16 %v369
    %v2004 = vunpack.c.l.b16 %v370
    %v2005 = vunpack.c.l.b16 %v371
    %v2006 = vunpack.c.h.b16 %v371
    %v2007 = vunpack.c.l.b16 %v372
    %v2008 = vunpack.c.h.b16 %v372
    %v2009 = vunpack.c.l.b16 %v373
    %v2010 = vunpack.c.h.b16 %v373
    %v2011 = vunpack.c.l.b16 %v374
    %v2012 = vunpack.c.h.b16 %v374
    %v2013 = vunpack.c.l.b16 %v375
    %v2014 = vunpack.c.h.b16 %v375
    %v2015 = vunpack.c.l.b16 %v376
    %v2016 = vunpack.c.h.b16 %v376
    %v2017 = vunpack.c.l.b16 %v377
    %v2018 = vunpack.c.l.b16 %v378
    %v2019 = vunpack.c.h.b16 %v378
    %v2020 = vunpack.c.l.b16 %v379
    %v2021 = vunpack.c.h.b16 %v379
    %v2022 = vunpack.c.l.b16 %v380
    %v2023 = vunpack.c.h.b16 %v380
    %v2024 = vunpack.c.l.b16 %v381
    %v2025 = vunpack.c.h.b16 %v381
    %v2026 = vunpack.c.l.b16 %v382
    %v2027 = vunpack.c.h.b16 %v382
    %v2028 = vunpack.c.l.b16 %v383
    %v2029 = vunpack.c.h.b16 %v383
    %v2030 = vunpack.c.l.b16 %v384
    %v2031 = vunpack.c.l.b16 %v385
    %v2032 = vunpack.c.h.b16 %v385
    %v2033 = vunpack.c.l.b16 %v386
    %v2034 = vunpack.c.h.b16 %v386
    %v2035 = vunpack.c.l.b16 %v387
    %v2036 = vunpack.c.h.b16 %v387
    %v2037 = vunpack.c.l.b16 %v388
    %v2038 = vunpack.c.h.b16 %v388
    %v2039 = vunpack.c.l.b16 %v389
    %v2040 = vunpack.c.h.b16 %v389
    %v2041 = vunpack.c.l.b16 %v390
    %v2042 = vunpack.c.h.b16 %v390
    %v2043 = vunpack.c.l.b16 %v391
    %v2044 = vunpack.c.l.b16 %v392
    %v2045 = vunpack.c.h.b16 %v392
    %v2046 = vunpack.c.l.b16 %v393
    %v2047 = vunpack.c.h.b16 %v393
    %v2048 = vunpack.c.l.b16 %v394
    %v2049 = vunpack.c.h.b16 %v394
    %v2050 = vunpack.c.l.b16 %v395
    %v2051 = vunpack.c.h.b16 %v395
    %v2052 = vunpack.c.l.b16 %v396
    %v2053 = vunpack.c.h.b16 %v396
    %v2054 = vunpack.c.l.b16 %v397
    %v2055 = vunpack.c.h.b16 %v397
    %v2056 = vunpack.c.l.b16 %v398
    %v2057 = vunpack.c.l.b16 %v399
    %v2058 = vunpack.c.h.b16 %v399
    %v2059 = vunpack.c.l.b16 %v400
    %v2060 = vunpack.c.h.b16 %v400
    %v2061 = vunpack.c.l.b16 %v401
    %v2062 = vunpack.c.h.b16 %v401
    %v2063 = vunpack.c.l.b16 %v402
    %v2064 = vunpack.c.h.b16 %v402
    %v2065 = vunpack.c.l.b16 %v403
    %v2066 = vunpack.c.h.b16 %v403
    %v2067 = vunpack.c.l.b16 %v404
    %v2068 = vunpack.c.h.b16 %v404
    %v2069 = vunpack.c.l.b16 %v405
    %v2070 = vunpack.c.l.b16 %v406
    %v2071 = vunpack.c.h.b16 %v406
    %v2072 = vunpack.c.l.b16 %v407
    %v2073 = vunpack.c.h.b16 %v407
    %v2074 = vunpack.c.l.b16 %v408
    %v2075 = vunpack.c.h.b16 %v408
    %v2076 = vunpack.c.l.b16 %v409
    %v2077 = vunpack.c.h.b16 %v409
    %v2078 = vunpack.c.l.b16 %v410
    %v2079 = vunpack.c.h.b16 %v410
    %v2080 = vunpack.c.l.b16 %v411
    %v2081 = vunpack.c.h.b16 %v411
    %v2082 = vunpack.c.l.b16 %v412
    %v2083 = vunpack.c.l.b16 %v413
    %v2084 = vunpack.c.h.b16 %v413
    %v2085 = vunpack.c.l.b16 %v414
    %v2086 = vunpack.c.h.b16 %v414
    %v2087 = vunpack.c.l.b16 %v415
    %v2088 = vunpack.c.h.b16 %v415
    %v2089 = vunpack.c.l.b16 %v416
    %v2090 = vunpack.c.h.b16 %v416
    %v2091 = vunpack.c.l.b16 %v417
    %v2092 = vunpack.c.h.b16 %v417
    %v2093 = vunpack.c.l.b16 %v418
    %v2094 = vunpack.c.h.b16 %v418
    %v2095 = vunpack.c.l.b16 %v419
    %v2096 = vunpack.c.l.b16 %v420
    %v2097 = vunpack.c.h.b16 %v420
    %v2098 = vunpack.c.l.b16 %v421
    %v2099 = vunpack.c.h.b16 %v421
    %v2100 = vunpack.c.l.b16 %v422
    %v2101 = vunpack.c.h.b16 %v422
    %v2102 = vunpack.c.l.b16 %v423
    %v2103 = vunpack.c.h.b16 %v423
    %v2104 = vunpack.c.l.b16 %v424
    %v2105 = vunpack.c.h.b16 %v424
    %v2106 = vunpack.c.l.b16 %v425
    %v2107 = vunpack.c.h.b16 %v425
    %v2108 = vunpack.c.l.b16 %v426
    %v2109 = vunpack.c.l.b16 %v427
    %v2110 = vunpack.c.h.b16 %v427
    %v2111 = vunpack.c.l.b16 %v428
    %v2112 = vunpack.c.h.b16 %v428
    %v2113 = vunpack.c.l.b16 %v429
    %v2114 = vunpack.c.h.b16 %v429
    %v2115 = vunpack.c.l.b16 %v430
    %v2116 = vunpack.c.h.b16 %v430
    %v2117 = vunpack.c.l.b16 %v431
    %v2118 = vunpack.c.h.b16 %v431
    %v2119 = vunpack.c.l.b16 %v432
    %v2120 = vunpack.c.h.b16 %v432
    %v2121 = vunpack.c.l.b16 %v433
    %v2122 = vunpack.c.l.b16 %v434
    %v2123 = vunpack.c.h.b16 %v434
    %v2124 = vunpack.c.l.b16 %v435
    %v2125 = vunpack.c.h.b16 %v435
    %v2126 = vunpack.c.l.b16 %v436
    %v2127 = vunpack.c.h.b16 %v436
    %v2128 = vunpack.c.l.b16 %v437
    %v2129 = vunpack.c.h.b16 %v437
    %v2130 = vunpack.c.l.b16 %v438
    %v2131 = vunpack.c.h.b16 %v438
    %v2132 = vunpack.c.l.b16 %v439
    %v2133 = vunpack.c.h.b16 %v439
    %v2134 = vunpack.c.l.b16 %v440
    %v2135 = vunpack.c.l.b16 %v441
    %v2136 = vunpack.c.h.b16 %v441
    %v2137 = vunpack.c.l.b16 %v442
    %v2138 = vunpack.c.h.b16 %v442
    %v2139 = vunpack.c.l.b16 %v443
    %v2140 = vunpack.c.h.b16 %v443
    %v2141 = vunpack.c.l.b16 %v444
    %v2142 = vunpack.c.h.b16 %v444
    %v2143 = vunpack.c.l.b16 %v445
    %v2144 = vunpack.c.h.b16 %v445
    %v2145 = vunpack.c.l.b16 %v446
    %v2146 = vunpack.c.h.b16 %v446
    %v2147 = vunpack.c.l.b16 %v447
    %v2148 = vunpack.c.l.b16 %v448
    %v2149 = vunpack.c.h.b16 %v448
    %v2150 = vunpack.c.l.b16 %v449
    %v2151 = vunpack.c.h.b16 %v449
    %v2152 = vunpack.c.l.b16 %v450
    %v2153 = vunpack.c.h.b16 %v450
    %v2154 = vunpack.c.l.b16 %v451
    %v2155 = vunpack.c.h.b16 %v451
    %v2156 = vunpack.c.l.b16 %v452
    %v2157 = vunpack.c.h.b16 %v452
    %v2158 = vunpack.c.l.b16 %v453
    %v2159 = vunpack.c.h.b16 %v453
    %v2160 = vunpack.c.l.b16 %v454
    %v2161 = vunpack.c.l.b16 %v455
    %v2162 = vunpack.c.h.b16 %v455
    %v2163 = vunpack.c.l.b16 %v456
    %v2164 = vunpack.c.h.b16 %v456
    %v2165 = vunpack.c.l.b16 %v457
    %v2166 = vunpack.c.h.b16 %v457
    %v2167 = vunpack.c.l.b16 %v458
    %v2168 = vunpack.c.h.b16 %v458
    %v2169 = vunpack.c.l.b16 %v459
    %v2170 = vunpack.c.h.b16 %v459
    %v2171 = vunpack.c.l.b16 %v460
    %v2172 = vunpack.c.h.b16 %v460
    %v2173 = vunpack.c.l.b16 %v461
    %v2174 = vunpack.c.l.b16 %v462
    %v2175 = vunpack.c.h.b16 %v462
    %v2176 = vunpack.c.l.b16 %v463
    %v2177 = vunpack.c.h.b16 %v463
    %v2178 = vunpack.c.l.b16 %v464
    %v2179 = vunpack.c.h.b16 %v464
    %v2180 = vunpack.c.l.b16 %v465
    %v2181 = vunpack.c.h.b16 %v465
    %v2182 = vunpack.c.l.b16 %v466
    %v2183 = vunpack.c.h.b16 %v466
    %v2184 = vunpack.c.l.b16 %v467
    %v2185 = vunpack.c.h.b16 %v467
    %v2186 = vunpack.c.l.b16 %v468
    %v2187 = vunpack.c.l.b16 %v469
    %v2188 = vunpack.c.h.b16 %v469
    %v2189 = vunpack.c.l.b16 %v470
    %v2190 = vunpack.c.h.b16 %v470
    %v2191 = vunpack.c.l.b16 %v471
    %v2192 = vunpack.c.h.b16 %v471
    %v2193 = vunpack.c.l.b16 %v472
    %v2194 = vunpack.c.h.b16 %v472
    %v2195 = vunpack.c.l.b16 %v473
    %v2196 = vunpack.c.h.b16 %v473
    %v2197 = vunpack.c.l.b16 %v474
    %v2198 = vunpack.c.h.b16 %v474
    %v2199 = vunpack.c.l.b16 %v475
    %v2200 = vunpack.c.l.b16 %v476
    %v2201 = vunpack.c.h.b16 %v476
    %v2202 = vunpack.c.l.b16 %v477
    %v2203 = vunpack.c.h.b16 %v477
    %v2204 = vunpack.c.l.b16 %v478
    %v2205 = vunpack.c.h.b16 %v478
    %v2206 = vunpack.c.l.b16 %v479
    %v2207 = vunpack.c.h.b16 %v479
    %v2208 = vunpack.c.l.b16 %v480
    %v2209 = vunpack.c.h.b16 %v480
    %v2210 = vunpack.c.l.b16 %v481
    %v2211 = vunpack.c.h.b16 %v481
    %v2212 = vunpack.c.l.b16 %v482
    %v2213 = vunpack.c.l.b16 %v483
    %v2214 = vunpack.c.h.b16 %v483
    %v2215 = vunpack.c.l.b16 %v484
    %v2216 = vunpack.c.h.b16 %v484
    %v2217 = vunpack.c.l.b16 %v485
    %v2218 = vunpack.c.h.b16 %v485
    %v2219 = vunpack.c.l.b16 %v486
    %v2220 = vunpack.c.h.b16 %v486
    %v2221 = vunpack.c.l.b16 %v487
    %v2222 = vunpack.c.h.b16 %v487
    %v2223 = vunpack.c.l.b16 %v488
    %v2224 = vunpack.c.h.b16 %v488
    %v2225 = vunpack.c.l.b16 %v489
    %v2226 = vunpack.c.l.b16 %v490
    %v2227 = vunpack.c.h.b16 %v490
    %v2228 = vunpack.c.l.b16 %v491
    %v2229 = vunpack.c.h.b16 %v491
    %v2230 = vunpack.c.l.b16 %v492
    %v2231 = vunpack.c.h.b16 %v492
    %v2232 = vunpack.c.l.b16 %v493
    %v2233 = vunpack.c.h.b16 %v493
    %v2234 = vunpack.c.l.b16 %v494
    %v2235 = vunpack.c.h.b16 %v494
    %v2236 = vunpack.c.l.b16 %v495
    %v2237 = vunpack.c.h.b16 %v495
    %v2238 = vunpack.c.l.b16 %v496
    %v2239 = vunpack.c.l.b16 %v497
    %v2240 = vunpack.c.h.b16 %v497
    %v2241 = vunpack.c.l.b16 %v498
    %v2242 = vunpack.c.h.b16 %v498
    %v2243 = vunpack.c.l.b16 %v499
    %v2244 = vunpack.c.h.b16 %v499
    %v2245 = vunpack.c.l.b16 %v500
    %v2246 = vunpack.c.h.b16 %v500
    %v2247 = vunpack.c.l.b16 %v501
    %v2248 = vunpack.c.h.b16 %v501
    %v2249 = vunpack.c.l.b16 %v502
    %v2250 = vunpack.c.h.b16 %v502
    %v2251 = vunpack.c.l.b16 %v503
    %v2252 = vunpack.c.l.b16 %v504
    %v2253 = vunpack.c.h.b16 %v504
    %v2254 = vunpack.c.l.b16 %v505
    %v2255 = vunpack.c.h.b16 %v505
    %v2256 = vunpack.c.l.b16 %v506
    %v2257 = vunpack.c.h.b16 %v506
    %v2258 = vunpack.c.l.b16 %v507
    %v2259 = vunpack.c.h.b16 %v507
    %v2260 = vunpack.c.l.b16 %v508
    %v2261 = vunpack.c.h.b16 %v508
    %v2262 = vunpack.c.l.b16 %v509
    %v2263 = vunpack.c.h.b16 %v509
    %v2264 = vunpack.c.l.b16 %v510
    %v2265 = vunpack.c.l.b16 %v511
    %v2266 = vunpack.c.h.b16 %v511
    %v2267 = vunpack.c.l.b16 %v512
    %v2268 = vunpack.c.h.b16 %v512
    %v2269 = vunpack.c.l.b16 %v513
    %v2270 = vunpack.c.h.b16 %v513
    %v2271 = vunpack.c.l.b16 %v514
    %v2272 = vunpack.c.h.b16 %v514
    %v2273 = vunpack.c.l.b16 %v515
    %v2274 = vunpack.c.h.b16 %v515
    %v2275 = vunpack.c.l.b16 %v516
    %v2276 = vunpack.c.h.b16 %v516
    %v2277 = vunpack.c.l.b16 %v517
    %v2278 = vunpack.c.l.b16 %v518
    %v2279 = vunpack.c.h.b16 %v518
    %v2280 = vunpack.c.l.b16 %v519
    %v2281 = vunpack.c.h.b16 %v519
    %v2282 = vunpack.c.l.b16 %v520
    %v2283 = vunpack.c.h.b16 %v520
    %v2284 = vunpack.c.l.b16 %v521
    %v2285 = vunpack.c.h.b16 %v521
    %v2286 = vunpack.c.l.b16 %v522
    %v2287 = vunpack.c.h.b16 %v522
    %v2288 = vunpack.c.l.b16 %v523
    %v2289 = vunpack.c.h.b16 %v523
    %v2290 = vunpack.c.l.b16 %v524
    %v2291 = vunpack.c.l.b16 %v525
    %v2292 = vunpack.c.h.b16 %v525
    %v2293 = vunpack.c.l.b16 %v526
    %v2294 = vunpack.c.h.b16 %v526
    %v2295 = vunpack.c.l.b16 %v527
    %v2296 = vunpack.c.h.b16 %v527
    %v2297 = vunpack.c.l.b16 %v528
    %v2298 = vunpack.c.h.b16 %v528
    %v2299 = vunpack.c.l.b16 %v529
    %v2300 = vunpack.c.h.b16 %v529
    %v2301 = vunpack.c.l.b16 %v530
    %v2302 = vunpack.c.h.b16 %v530
    %v2303 = vunpack.c.l.b16 %v531
    %v2304 = vunpack.c.l.b16 %v532
    %v2305 = vunpack.c.h.b16 %v532
    %v2306 = vunpack.c.l.b16 %v533
    %v2307 = vunpack.c.h.b16 %v533
    %v2308 = vunpack.c.l.b16 %v534
    %v2309 = vunpack.c.h.b16 %v534
    %v2310 = vunpack.c.l.b16 %v535
    %v2311 = vunpack.c.h.b16 %v535
    %v2312 = vunpack.c.l.b16 %v536
    %v2313 = vunpack.c.h.b16 %v536
    %v2314 = vunpack.c.l.b16 %v537
    %v2315 = vunpack.c.h.b16 %v537
    %v2316 = vunpack.c.l.b16 %v538
    %v2317 = vunpack.c.l.b16 %v539
    %v2318 = vunpack.c.h.b16 %v539
    %v2319 = vunpack.c.l.b16 %v540
    %v2320 = vunpack.c.h.b16 %v540
    %v2321 = vunpack.c.l.b16 %v541
    %v2322 = vunpack.c.h.b16 %v541
    %v2323 = vunpack.c.l.b16 %v542
    %v2324 = vunpack.c.h.b16 %v542
    %v2325 = vunpack.c.l.b16 %v543
    %v2326 = vunpack.c.h.b16 %v543
    %v2327 = vunpack.c.l.b16 %v544
    %v2328 = vunpack.c.h.b16 %v544
    %v2329 = vunpack.c.l.b16 %v545
    %v2330 = vunpack.c.l.b16 %v546
    %v2331 = vunpack.c.h.b16 %v546
    %v2332 = vunpack.c.l.b16 %v547
    %v2333 = vunpack.c.h.b16 %v547
    %v2334 = vunpack.c.l.b16 %v548
    %v2335 = vunpack.c.h.b16 %v548
    %v2336 = vunpack.c.l.b16 %v549
    %v2337 = vunpack.c.h.b16 %v549
    %v2338 = vunpack.c.l.b16 %v550
    %v2339 = vunpack.c.h.b16 %v550
    %v2340 = vunpack.c.l.b16 %v551
    %v2341 = vunpack.c.h.b16 %v551
    %v2342 = vunpack.c.l.b16 %v552
    %v2343 = vunpack.c.l.b16 %v553
    %v2344 = vunpack.c.h.b16 %v553
    %v2345 = vunpack.c.l.b16 %v554
    %v2346 = vunpack.c.h.b16 %v554
    %v2347 = vunpack.c.l.b16 %v555
    %v2348 = vunpack.c.h.b16 %v555
    %v2349 = vunpack.c.l.b16 %v556
    %v2350 = vunpack.c.h.b16 %v556
    %v2351 = vunpack.c.l.b16 %v557
    %v2352 = vunpack.c.h.b16 %v557
    %v2353 = vunpack.c.l.b16 %v558
    %v2354 = vunpack.c.h.b16 %v558
    %v2355 = vunpack.c.l.b16 %v559
    %v2356 = vunpack.c.l.b16 %v560
    %v2357 = vunpack.c.h.b16 %v560
    %v2358 = vunpack.c.l.b16 %v561
    %v2359 = vunpack.c.h.b16 %v561
    %v2360 = vunpack.c.l.b16 %v562
    %v2361 = vunpack.c.h.b16 %v562
    %v2362 = vunpack.c.l.b16 %v563
    %v2363 = vunpack.c.h.b16 %v563
    %v2364 = vunpack.c.l.b16 %v564
    %v2365 = vunpack.c.h.b16 %v564
    %v2366 = vunpack.c.l.b16 %v565
    %v2367 = vunpack.c.h.b16 %v565
    %v2368 = vunpack.c.l.b16 %v566
    %v2369 = vunpack.c.l.b16 %v567
    %v2370 = vunpack.c.h.b16 %v567
    %v2371 = vunpack.c.l.b16 %v568
    %v2372 = vunpack.c.h.b16 %v568
    %v2373 = vunpack.c.l.b16 %v569
    %v2374 = vunpack.c.h.b16 %v569
    %v2375 = vunpack.c.l.b16 %v570
    %v2376 = vunpack.c.h.b16 %v570
    %v2377 = vunpack.c.l.b16 %v571
    %v2378 = vunpack.c.h.b16 %v571
    %v2379 = vunpack.c.l.b16 %v572
    %v2380 = vunpack.c.h.b16 %v572
    %v2381 = vunpack.c.l.b16 %v573
    %v2382 = vunpack.c.l.b16 %v574
    %v2383 = vunpack.c.h.b16 %v574
    %v2384 = vunpack.c.l.b16 %v575
    %v2385 = vunpack.c.h.b16 %v575
    %v2386 = vunpack.c.l.b16 %v576
    %v2387 = vunpack.c.h.b16 %v576
    %v2388 = vunpack.c.l.b16 %v577
    %v2389 = vunpack.c.h.b16 %v577
    %v2390 = vunpack.c.l.b16 %v578
    %v2391 = vunpack.c.h.b16 %v578
    %v2392 = vunpack.c.l.b16 %v579
    %v2393 = vunpack.c.h.b16 %v579
    %v2394 = vunpack.c.l.b16 %v580
    %v2395 = vunpack.c.l.b16 %v581
    %v2396 = vunpack.c.h.b16 %v581
    %v2397 = vunpack.c.l.b16 %v582
    %v2398 = vunpack.c.h.b16 %v582
    %v2399 = vunpack.c.l.b16 %v583
    %v2400 = vunpack.c.h.b16 %v583
    %v2401 = vunpack.c.l.b16 %v584
    %v2402 = vunpack.c.h.b16 %v584
    %v2403 = vunpack.c.l.b16 %v585
    %v2404 = vunpack.c.h.b16 %v585
    %v2405 = vunpack.c.l.b16 %v586
    %v2406 = vunpack.c.h.b16 %v586
    %v2407 = vunpack.c.l.b16 %v587
    %v2408 = vunpack.c.l.b16 %v588
    %v2409 = vunpack.c.h.b16 %v588
    %v2410 = vunpack.c.l.b16 %v589
    %v2411 = vunpack.c.h.b16 %v589
    %v2412 = vunpack.c.l.b16 %v590
    %v2413 = vunpack.c.h.b16 %v590
    %v2414 = vunpack.c.l.b16 %v591
    %v2415 = vunpack.c.h.b16 %v591
    %v2416 = vunpack.c.l.b16 %v592
    %v2417 = vunpack.c.h.b16 %v592
    %v2418 = vunpack.c.l.b16 %v593
    %v2419 = vunpack.c.h.b16 %v593
    %v2420 = vunpack.c.l.b16 %v594
    %v2421 = vunpack.c.l.b16 %v595
    %v2422 = vunpack.c.h.b16 %v595
    %v2423 = vunpack.c.l.b16 %v596
    %v2424 = vunpack.c.h.b16 %v596
    %v2425 = vunpack.c.l.b16 %v597
    %v2426 = vunpack.c.h.b16 %v597
    %v2427 = vunpack.c.l.b16 %v598
    %v2428 = vunpack.c.h.b16 %v598
    %v2429 = vunpack.c.l.b16 %v599
    %v2430 = vunpack.c.h.b16 %v599
    %v2431 = vunpack.c.l.b16 %v600
    %v2432 = vunpack.c.h.b16 %v600
    %v2433 = vunpack.c.l.b16 %v601
    %v2434 = vunpack.c.l.b16 %v602
    %v2435 = vunpack.c.h.b16 %v602
    %v2436 = vunpack.c.l.b16 %v603
    %v2437 = vunpack.c.h.b16 %v603
    %v2438 = vunpack.c.l.b16 %v604
    %v2439 = vunpack.c.h.b16 %v604
    %v2440 = vunpack.c.l.b16 %v605
    %v2441 = vunpack.c.h.b16 %v605
    %v2442 = vunpack.c.l.b16 %v606
    %v2443 = vunpack.c.h.b16 %v606
    %v2444 = vunpack.c.l.b16 %v607
    %v2445 = vunpack.c.h.b16 %v607
    %v2446 = vunpack.c.l.b16 %v608
    %v2447 = vunpack.c.l.b16 %v609
    %v2448 = vunpack.c.h.b16 %v609
    %v2449 = vunpack.c.l.b16 %v610
    %v2450 = vunpack.c.h.b16 %v610
    %v2451 = vunpack.c.l.b16 %v611
    %v2452 = vunpack.c.h.b16 %v611
    %v2453 = vunpack.c.l.b16 %v612
    %v2454 = vunpack.c.h.b16 %v612
    %v2455 = vunpack.c.l.b16 %v613
    %v2456 = vunpack.c.h.b16 %v613
    %v2457 = vunpack.c.l.b16 %v614
    %v2458 = vunpack.c.h.b16 %v614
    %v2459 = vunpack.c.l.b16 %v615
    %v2460 = vunpack.c.l.b16 %v616
    %v2461 = vunpack.c.h.b16 %v616
    %v2462 = vunpack.c.l.b16 %v617
    %v2463 = vunpack.c.h.b16 %v617
    %v2464 = vunpack.c.l.b16 %v618
    %v2465 = vunpack.c.h.b16 %v618
    %v2466 = vunpack.c.l.b16 %v619
    %v2467 = vunpack.c.h.b16 %v619
    %v2468 = vunpack.c.l.b16 %v620
    %v2469 = vunpack.c.h.b16 %v620
    %v2470 = vunpack.c.l.b16 %v621
    %v2471 = vunpack.c.h.b16 %v621
    %v2472 = vunpack.c.l.b16 %v622
    %v2473 = vunpack.c.l.b16 %v623
    %v2474 = vunpack.c.h.b16 %v623
    %v2475 = vunpack.c.l.b16 %v624
    %v2476 = vunpack.c.h.b16 %v624
    %v2477 = vunpack.c.l.b16 %v625
    %v2478 = vunpack.c.h.b16 %v625
    %v2479 = vunpack.c.l.b16 %v626
    %v2480 = vunpack.c.h.b16 %v626
    %v2481 = vunpack.c.l.b16 %v627
    %v2482 = vunpack.c.h.b16 %v627
    %v2483 = vunpack.c.l.b16 %v628
    %v2484 = vunpack.c.h.b16 %v628
    %v2485 = vunpack.c.l.b16 %v629
    %v2486 = vunpack.c.l.b16 %v630
    %v2487 = vunpack.c.h.b16 %v630
    %v2488 = vunpack.c.l.b16 %v631
    %v2489 = vunpack.c.h.b16 %v631
    %v2490 = vunpack.c.l.b16 %v632
    %v2491 = vunpack.c.h.b16 %v632
    %v2492 = vunpack.c.l.b16 %v633
    %v2493 = vunpack.c.h.b16 %v633
    %v2494 = vunpack.c.l.b16 %v634
    %v2495 = vunpack.c.h.b16 %v634
    %v2496 = vunpack.c.l.b16 %v635
    %v2497 = vunpack.c.h.b16 %v635
    %v2498 = vunpack.c.l.b16 %v636
    %v2499 = vunpack.c.l.b16 %v637
    %v2500 = vunpack.c.h.b16 %v637
    %v2501 = vunpack.c.l.b16 %v638
    %v2502 = vunpack.c.h.b16 %v638
    %v2503 = vunpack.c.l.b16 %v639
    %v2504 = vunpack.c.h.b16 %v639
    %v2505 = vunpack.c.l.b16 %v640
    %v2506 = vunpack.c.h.b16 %v640
    %v2507 = vunpack.c.l.b16 %v641
    %v2508 = vunpack.c.h.b16 %v641
    %v2509 = vunpack.c.l.b16 %v642
    %v2510 = vunpack.c.h.b16 %v642
    %v2511 = vunpack.c.l.b16 %v643
    %v2512 = vunpack.c.l.b16 %v644
    %v2513 = vunpack.c.h.b16 %v644
    %v2514 = vunpack.c.l.b16 %v645
    %v2515 = vunpack.c.h.b16 %v645
    %v2516 = vunpack.c.l.b16 %v646
    %v2517 = vunpack.c.h.b16 %v646
    %v2518 = vunpack.c.l.b16 %v647
    %v2519 = vunpack.c.h.b16 %v647
    %v2520 = vunpack.c.l.b16 %v648
    %v2521 = vunpack.c.h.b16 %v648
    %v2522 = vunpack.c.l.b16 %v649
    %v2523 = vunpack.c.h.b16 %v649
    %v2524 = vunpack.c.l.b16 %v650
    %v2525 = vunpack.c.l.b16 %v651
    %v2526 = vunpack.c.h.b16 %v651
    %v2527 = vunpack.c.l.b16 %v652
    %v2528 = vunpack.c.h.b16 %v652
    %v2529 = vunpack.c.l.b16 %v653
    %v2530 = vunpack.c.h.b16 %v653
    %v2531 = vunpack.c.l.b16 %v654
    %v2532 = vunpack.c.h.b16 %v654
    %v2533 = vunpack.c.l.b16 %v655
    %v2534 = vunpack.c.h.b16 %v655
    %v2535 = vunpack.c.l.b16 %v656
    %v2536 = vunpack.c.h.b16 %v656
    %v2537 = vunpack.c.l.b16 %v657
    %v2538 = vunpack.c.l.b16 %v658
    %v2539 = vunpack.c.h.b16 %v658
    %v2540 = vunpack.c.l.b16 %v659
    %v2541 = vunpack.c.h.b16 %v659
    %v2542 = vunpack.c.l.b16 %v660
    %v2543 = vunpack.c.h.b16 %v660
    %v2544 = vunpack.c.l.b16 %v661
    %v2545 = vunpack.c.h.b16 %v661
    %v2546 = vunpack.c.l.b16 %v662
    %v2547 = vunpack.c.h.b16 %v662
    %v2548 = vunpack.c.l.b16 %v663
    %v2549 = vunpack.c.h.b16 %v663
    %v2550 = vunpack.c.l.b16 %v664
    %v2551 = vunpack.c.l.b16 %v665
    %v2552 = vunpack.c.h.b16 %v665
    %v2553 = vunpack.c.l.b16 %v666
    %v2554 = vunpack.c.h.b16 %v666
    %v2555 = vunpack.c.l.b16 %v667
    %v2556 = vunpack.c.h.b16 %v667
    %v2557 = vunpack.c.l.b16 %v668
    %v2558 = vunpack.c.h.b16 %v668
    %v2559 = vunpack.c.l.b16 %v669
    %v2560 = vunpack.c.h.b16 %v669
    %v2561 = vunpack.c.l.b16 %v670
    %v2562 = vunpack.c.h.b16 %v670
    %v2563 = vunpack.c.l.b16 %v671
    %v2564 = vunpack.c.l.b16 %v672
    %v2565 = vunpack.c.h.b16 %v672
    %v2566 = vunpack.c.l.b16 %v673
    %v2567 = vunpack.c.h.b16 %v673
    %v2568 = vunpack.c.l.b16 %v674
    %v2569 = vunpack.c.h.b16 %v674
    %v2570 = vunpack.c.l.b16 %v675
    %v2571 = vunpack.c.h.b16 %v675
    %v2572 = vunpack.c.l.b16 %v676
    %v2573 = vunpack.c.h.b16 %v676
    %v2574 = vunpack.c.l.b16 %v677
    %v2575 = vunpack.c.h.b16 %v677
    %v2576 = vunpack.c.l.b16 %v678
    %v2577 = vunpack.c.l.b16 %v679
    %v2578 = vunpack.c.h.b16 %v679
    %v2579 = vunpack.c.l.b16 %v680
    %v2580 = vunpack.c.h.b16 %v680
    %v2581 = vunpack.c.l.b16 %v681
    %v2582 = vunpack.c.h.b16 %v681
    %v2583 = vunpack.c.l.b16 %v682
    %v2584 = vunpack.c.h.b16 %v682
    %v2585 = vunpack.c.l.b16 %v683
    %v2586 = vunpack.c.h.b16 %v683
    %v2587 = vunpack.c.l.b16 %v684
    %v2588 = vunpack.c.h.b16 %v684
    %v2589 = vunpack.c.l.b16 %v685
    %v2590 = vunpack.c.l.b16 %v686
    %v2591 = vunpack.c.h.b16 %v686
    %v2592 = vunpack.c.l.b16 %v687
    %v2593 = vunpack.c.h.b16 %v687
    %v2594 = vunpack.c.l.b16 %v688
    %v2595 = vunpack.c.h.b16 %v688
    %v2596 = vunpack.c.l.b16 %v689
    %v2597 = vunpack.c.h.b16 %v689
    %v2598 = vunpack.c.l.b16 %v690
    %v2599 = vunpack.c.h.b16 %v690
    %v2600 = vunpack.c.l.b16 %v691
    %v2601 = vunpack.c.h.b16 %v691
    %v2602 = vunpack.c.l.b16 %v692
    %v2603 = vunpack.c.l.b16 %v693
    %v2604 = vunpack.c.h.b16 %v693
    %v2605 = vunpack.c.l.b16 %v694
    %v2606 = vunpack.c.h.b16 %v694
    %v2607 = vunpack.c.l.b16 %v695
    %v2608 = vunpack.c.h.b16 %v695
    %v2609 = vunpack.c.l.b16 %v696
    %v2610 = vunpack.c.h.b16 %v696
    %v2611 = vunpack.c.l.b16 %v697
    %v2612 = vunpack.c.h.b16 %v697
    %v2613 = vunpack.c.l.b16 %v698
    %v2614 = vunpack.c.h.b16 %v698
    %v2615 = vunpack.c.l.b16 %v699
    %v2616 = vunpack.c.l.b16 %v700
    %v2617 = vunpack.c.h.b16 %v700
    %v2618 = vunpack.c.l.b16 %v701
    %v2619 = vunpack.c.h.b16 %v701
    %v2620 = vunpack.c.l.b16 %v702
    %v2621 = vunpack.c.h.b16 %v702
    %v2622 = vunpack.c.l.b16 %v703
    %v2623 = vunpack.c.h.b16 %v703
    %v2624 = vunpack.c.l.b16 %v704
    %v2625 = vunpack.c.h.b16 %v704
    %v2626 = vunpack.c.l.b16 %v705
    %v2627 = vunpack.c.h.b16 %v705
    %v2628 = vunpack.c.l.b16 %v706
    %v2629 = vunpack.c.l.b16 %v707
    %v2630 = vunpack.c.h.b16 %v707
    %v2631 = vunpack.c.l.b16 %v708
    %v2632 = vunpack.c.h.b16 %v708
    %v2633 = vunpack.c.l.b16 %v709
    %v2634 = vunpack.c.h.b16 %v709
    %v2635 = vunpack.c.l.b16 %v710
    %v2636 = vunpack.c.h.b16 %v710
    %v2637 = vunpack.c.l.b16 %v711
    %v2638 = vunpack.c.h.b16 %v711
    %v2639 = vunpack.c.l.b16 %v712
    %v2640 = vunpack.c.h.b16 %v712
    %v2641 = vunpack.c.l.b16 %v713
    %v2642 = vunpack.c.l.b16 %v714
    %v2643 = vunpack.c.h.b16 %v714
    %v2644 = vunpack.c.l.b16 %v715
    %v2645 = vunpack.c.h.b16 %v715
    %v2646 = vunpack.c.l.b16 %v716
    %v2647 = vunpack.c.h.b16 %v716
    %v2648 = vunpack.c.l.b16 %v717
    %v2649 = vunpack.c.h.b16 %v717
    %v2650 = vunpack.c.l.b16 %v718
    %v2651 = vunpack.c.h.b16 %v718
    %v2652 = vunpack.c.l.b16 %v719
    %v2653 = vunpack.c.h.b16 %v719
    %v2654 = vunpack.c.l.b16 %v720
    %v2655 = vunpack.c.l.b16 %v721
    %v2656 = vunpack.c.h.b16 %v721
    %v2657 = vunpack.c.l.b16 %v722
    %v2658 = vunpack.c.h.b16 %v722
    %v2659 = vunpack.c.l.b16 %v723
    %v2660 = vunpack.c.h.b16 %v723
    %v2661 = vunpack.c.l.b16 %v724
    %v2662 = vunpack.c.h.b16 %v724
    %v2663 = vunpack.c.l.b16 %v725
    %v2664 = vunpack.c.h.b16 %v725
    %v2665 = vunpack.c.l.b16 %v726
    %v2666 = vunpack.c.h.b16 %v726
    %v2667 = vunpack.c.l.b16 %v727
    %v2668 = vunpack.c.l.b16 %v728
    %v2669 = vunpack.c.h.b16 %v728
    %v2670 = vunpack.c.l.b16 %v729
    %v2671 = vunpack.c.h.b16 %v729
    %v2672 = vunpack.c.l.b16 %v730
    %v2673 = vunpack.c.h.b16 %v730
    %v2674 = vunpack.c.l.b16 %v731
    %v2675 = vunpack.c.h.b16 %v731
    %v2676 = vunpack.c.l.b16 %v732
    %v2677 = vunpack.c.h.b16 %v732
    %v2678 = vunpack.c.l.b16 %v733
    %v2679 = vunpack.c.h.b16 %v733
    %v2680 = vunpack.c.l.b16 %v734
    %v2681 = vunpack.c.l.b16 %v735
    %v2682 = vunpack.c.h.b16 %v735
    %v2683 = vunpack.c.l.b16 %v736
    %v2684 = vunpack.c.h.b16 %v736
    %v2685 = vunpack.c.l.b16 %v737
    %v2686 = vunpack.c.h.b16 %v737
    %v2687 = vunpack.c.l.b16 %v738
    %v2688 = vunpack.c.h.b16 %v738
    %v2689 = vunpack.c.l.b16 %v739
    %v2690 = vunpack.c.h.b16 %v739
    %v2691 = vunpack.c.l.b16 %v740
    %v2692 = vunpack.c.h.b16 %v740
    %v2693 = vunpack.c.l.b16 %v741
    %v2694 = vunpack.c.l.b16 %v742
    %v2695 = vunpack.c.h.b16 %v742
    %v2696 = vunpack.c.l.b16 %v743
    %v2697 = vunpack.c.h.b16 %v743
    %v2698 = vunpack.c.l.b16 %v744
    %v2699 = vunpack.c.h.b16 %v744
    %v2700 = vunpack.c.l.b16 %v745
    %v2701 = vunpack.c.h.b16 %v745
    %v2702 = vunpack.c.l.b16 %v746
    %v2703 = vunpack.c.h.b16 %v746
    %v2704 = vunpack.c.l.b16 %v747
    %v2705 = vunpack.c.h.b16 %v747
    %v2706 = vunpack.c.l.b16 %v748
    %v2707 = vunpack.c.l.b16 %v749
    %v2708 = vunpack.c.h.b16 %v749
    %v2709 = vunpack.c.l.b16 %v750
    %v2710 = vunpack.c.h.b16 %v750
    %v2711 = vunpack.c.l.b16 %v751
    %v2712 = vunpack.c.h.b16 %v751
    %v2713 = vunpack.c.l.b16 %v752
    %v2714 = vunpack.c.h.b16 %v752
    %v2715 = vunpack.c.l.b16 %v753
    %v2716 = vunpack.c.h.b16 %v753
    %v2717 = vunpack.c.l.b16 %v754
    %v2718 = vunpack.c.h.b16 %v754
    %v2719 = vunpack.c.l.b16 %v755
    %v2720 = vpack.c.b16 %v1485, %v1472
    %v2721 = vpack.c.b16 %v1486, %v1473
    %v2722 = vpack.c.b16 %v1487, %v1474
    %v2723 = vpack.c.b16 %v1488, %v1475
    %v2724 = vpack.c.b16 %v1489, %v1476
    %v2725 = vpack.c.b16 %v1490, %v1477
    %v2726 = vpack.c.b16 %v1491, %v1478
    %v2727 = vpack.c.b16 %v1492, %v1479
    %v2728 = vpack.c.b16 %v1493, %v1480
    %v2729 = vpack.c.b16 %v1494, %v1481
    %v2730 = vpack.c.b16 %v1495, %v1482
    %v2731 = vpack.c.b16 %v1496, %v1483
    %v2732 = vpack.c.b16 %v1497, %v1484
    %v2733 = vpack.c.b16 %v1511, %v1498
    %v2734 = vpack.c.b16 %v1512, %v1499
    %v2735 = vpack.c.b16 %v1513, %v1500
    %v2736 = vpack.c.b16 %v1514, %v1501
    %v2737 = vpack.c.b16 %v1515, %v1502
    %v2738 = vpack.c.b16 %v1516, %v1503
    %v2739 = vpack.c.b16 %v1517, %v1504
    %v2740 = vpack.c.b16 %v1518, %v1505
    %v2741 = vpack.c.b16 %v1519, %v1506
    %v2742 = vpack.c.b16 %v1520, %v1507
    %v2743 = vpack.c.b16 %v1521, %v1508
    %v2744 = vpack.c.b16 %v1522, %v1509
    %v2745 = vpack.c.b16 %v1523, %v1510
    %v2746 = vpack.c.b16 %v1537, %v1524
    %v2747 = vpack.c.b16 %v1538, %v1525
    %v2748 = vpack.c.b16 %v1539, %v1526
    %v2749 = vpack.c.b16 %v1540, %v1527
    %v2750 = vpack.c.b16 %v1541, %v1528
    %v2751 = vpack.c.b16 %v1542, %v1529
    %v2752 = vpack.c.b16 %v1543, %v1530
    %v2753 = vpack.c.b16 %v1544, %v1531
    %v2754 = vpack.c.b16 %v1545, %v1532
    %v2755 = vpack.c.b16 %v1546, %v1533
    %v2756 = vpack.c.b16 %v1547, %v1534
    %v2757 = vpack.c.b16 %v1548, %v1535
    %v2758 = vpack.c.b16 %v1549, %v1536
    %v2759 = vpack.c.b16 %v1563, %v1550
    %v2760 = vpack.c.b16 %v1564, %v1551
    %v2761 = vpack.c.b16 %v1565, %v1552
    %v2762 = vpack.c.b16 %v1566, %v1553
    %v2763 = vpack.c.b16 %v1567, %v1554
    %v2764 = vpack.c.b16 %v1568, %v1555
    %v2765 = vpack.c.b16 %v1569, %v1556
    %v2766 = vpack.c.b16 %v1570, %v1557
    %v2767 = vpack.c.b16 %v1571, %v1558
    %v2768 = vpack.c.b16 %v1572, %v1559
    %v2769 = vpack.c.b16 %v1573, %v1560
    %v2770 = vpack.c.b16 %v1574, %v1561
    %v2771 = vpack.c.b16 %v1575, %v1562
    %v2772 = vpack.c.b16 %v1589, %v1576
    %v2773 = vpack.c.b16 %v1590, %v1577
    %v2774 = vpack.c.b16 %v1591, %v1578
    %v2775 = vpack.c.b16 %v1592, %v1579
    %v2776 = vpack.c.b16 %v1593, %v1580
    %v2777 = vpack.c.b16 %v1594, %v1581
    %v2778 = vpack.c.b16 %v1595, %v1582
    %v2779 = vpack.c.b16 %v1596, %v1583
    %v2780 = vpack.c.b16 %v1597, %v1584
    %v2781 = vpack.c.b16 %v1598, %v1585
    %v2782 = vpack.c.b16 %v1599, %v1586
    %v2783 = vpack.c.b16 %v1600, %v1587
    %v2784 = vpack.c.b16 %v1601, %v1588
    %v2785 = vpack.c.b16 %v1615, %v1602
    %v2786 = vpack.c.b16 %v1616, %v1603
    %v2787 = vpack.c.b16 %v1617, %v1604
    %v2788 = vpack.c.b16 %v1618, %v1605
    %v2789 = vpack.c.b16 %v1619, %v1606
    %v2790 = vpack.c.b16 %v1620, %v1607
    %v2791 = vpack.c.b16 %v1621, %v1608
    %v2792 = vpack.c.b16 %v1622, %v1609
    %v2793 = vpack.c.b16 %v1623, %v1610
    %v2794 = vpack.c.b16 %v1624, %v1611
    %v2795 = vpack.c.b16 %v1625, %v1612
    %v2796 = vpack.c.b16 %v1626, %v1613
    %v2797 = vpack.c.b16 %v1627, %v1614
    %v2798 = vpack.c.b16 %v1641, %v1628
    %v2799 = vpack.c.b16 %v1642, %v1629
    %v2800 = vpack.c.b16 %v1643, %v1630
    %v2801 = vpack.c.b16 %v1644, %v1631
    %v2802 = vpack.c.b16 %v1645, %v1632
    %v2803 = vpack.c.b16 %v1646, %v1633
    %v2804 = vpack.c.b16 %v1647, %v1634
    %v2805 = vpack.c.b16 %v1648, %v1635
    %v2806 = vpack.c.b16 %v1649, %v1636
    %v2807 = vpack.c.b16 %v1650, %v1637
    %v2808 = vpack.c.b16 %v1651, %v1638
    %v2809 = vpack.c.b16 %v1652, %v1639
    %v2810 = vpack.c.b16 %v1653, %v1640
    %v2811 = vpack.c.b16 %v1667, %v1654
    %v2812 = vpack.c.b16 %v1668, %v1655
    %v2813 = vpack.c.b16 %v1669, %v1656
    %v2814 = vpack.c.b16 %v1670, %v1657
    %v2815 = vpack.c.b16 %v1671, %v1658
    %v2816 = vpack.c.b16 %v1672, %v1659
    %v2817 = vpack.c.b16 %v1673, %v1660
    %v2818 = vpack.c.b16 %v1674, %v1661
    %v2819 = vpack.c.b16 %v1675, %v1662
    %v2820 = vpack.c.b16 %v1676, %v1663
    %v2821 = vpack.c.b16 %v1677, %v1664
    %v2822 = vpack.c.b16 %v1678, %v1665
    %v2823 = vpack.c.b16 %v1679, %v1666
    %v2824 = vpack.c.b16 %v1693, %v1680
    %v2825 = vpack.c.b16 %v1694, %v1681
    %v2826 = vpack.c.b16 %v1695, %v1682
    %v2827 = vpack.c.b16 %v1696, %v1683
    %v2828 = vpack.c.b16 %v1697, %v1684
    %v2829 = vpack.c.b16 %v1698, %v1685
    %v2830 = vpack.c.b16 %v1699, %v1686
    %v2831 = vpack.c.b16 %v1700, %v1687
    %v2832 = vpack.c.b16 %v1701, %v1688
    %v2833 = vpack.c.b16 %v1702, %v1689
    %v2834 = vpack.c.b16 %v1703, %v1690
    %v2835 = vpack.c.b16 %v1704, %v1691
    %v2836 = vpack.c.b16 %v1705, %v1692
    %v2837 = vpack.c.b16 %v1719, %v1706
    %v2838 = vpack.c.b16 %v1720, %v1707
    %v2839 = vpack.c.b16 %v1721, %v1708
    %v2840 = vpack.c.b16 %v1722, %v1709
    %v2841 = vpack.c.b16 %v1723, %v1710
    %v2842 = vpack.c.b16 %v1724, %v1711
    %v2843 = vpack.c.b16 %v1725, %v1712
    %v2844 = vpack.c.b16 %v1726, %v1713
    %v2845 = vpack.c.b16 %v1727, %v1714
    %v2846 = vpack.c.b16 %v1728, %v1715
    %v2847 = vpack.c.b16 %v1729, %v1716
    %v2848 = vpack.c.b16 %v1730, %v1717
    %v2849 = vpack.c.b16 %v1731, %v1718
    %v2850 = vpack.c.b16 %v1745, %v1732
    %v2851 = vpack.c.b16 %v1746, %v1733
    %v2852 = vpack.c.b16 %v1747, %v1734
    %v2853 = vpack.c.b16 %v1748, %v1735
    %v2854 = vpack.c.b16 %v1749, %v1736
    %v2855 = vpack.c.b16 %v1750, %v1737
    %v2856 = vpack.c.b16 %v1751, %v1738
    %v2857 = vpack.c.b16 %v1752, %v1739
    %v2858 = vpack.c.b16 %v1753, %v1740
    %v2859 = vpack.c.b16 %v1754, %v1741
    %v2860 = vpack.c.b16 %v1755, %v1742
    %v2861 = vpack.c.b16 %v1756, %v1743
    %v2862 = vpack.c.b16 %v1757, %v1744
    %v2863 = vpack.c.b16 %v1771, %v1758
    %v2864 = vpack.c.b16 %v1772, %v1759
    %v2865 = vpack.c.b16 %v1773, %v1760
    %v2866 = vpack.c.b16 %v1774, %v1761
    %v2867 = vpack.c.b16 %v1775, %v1762
    %v2868 = vpack.c.b16 %v1776, %v1763
    %v2869 = vpack.c.b16 %v1777, %v1764
    %v2870 = vpack.c.b16 %v1778, %v1765
    %v2871 = vpack.c.b16 %v1779, %v1766
    %v2872 = vpack.c.b16 %v1780, %v1767
    %v2873 = vpack.c.b16 %v1781, %v1768
    %v2874 = vpack.c.b16 %v1782, %v1769
    %v2875 = vpack.c.b16 %v1783, %v1770
    %v2876 = vpack.c.b16 %v1797, %v1784
    %v2877 = vpack.c.b16 %v1798, %v1785
    %v2878 = vpack.c.b16 %v1799, %v1786
    %v2879 = vpack.c.b16 %v1800, %v1787
    %v2880 = vpack.c.b16 %v1801, %v1788
    %v2881 = vpack.c.b16 %v1802, %v1789
    %v2882 = vpack.c.b16 %v1803, %v1790
    %v2883 = vpack.c.b16 %v1804, %v1791
    %v2884 = vpack.c.b16 %v1805, %v1792
    %v2885 = vpack.c.b16 %v1806, %v1793
    %v2886 = vpack.c.b16 %v1807, %v1794
    %v2887 = vpack.c.b16 %v1808, %v1795
    %v2888 = vpack.c.b16 %v1809, %v1796
    %v2889 = vpack.c.b16 %v1823, %v1810
    %v2890 = vpack.c.b16 %v1824, %v1811
    %v2891 = vpack.c.b16 %v1825, %v1812
    %v2892 = vpack.c.b16 %v1826, %v1813
    %v2893 = vpack.c.b16 %v1827, %v1814
    %v2894 = vpack.c.b16 %v1828, %v1815
    %v2895 = vpack.c.b16 %v1829, %v1816
    %v2896 = vpack.c.b16 %v1830, %v1817
    %v2897 = vpack.c.b16 %v1831, %v1818
    %v2898 = vpack.c.b16 %v1832, %v1819
    %v2899 = vpack.c.b16 %v1833, %v1820
    %v2900 = vpack.c.b16 %v1834, %v1821
    %v2901 = vpack.c.b16 %v1835, %v1822
    %v2902 = vpack.c.b16 %v1849, %v1836
    %v2903 = vpack.c.b16 %v1850, %v1837
    %v2904 = vpack.c.b16 %v1851, %v1838
    %v2905 = vpack.c.b16 %v1852, %v1839
    %v2906 = vpack.c.b16 %v1853, %v1840
    %v2907 = vpack.c.b16 %v1854, %v1841
    %v2908 = vpack.c.b16 %v1855, %v1842
    %v2909 = vpack.c.b16 %v1856, %v1843
    %v2910 = vpack.c.b16 %v1857, %v1844
    %v2911 = vpack.c.b16 %v1858, %v1845
    %v2912 = vpack.c.b16 %v1859, %v1846
    %v2913 = vpack.c.b16 %v1860, %v1847
    %v2914 = vpack.c.b16 %v1861, %v1848
    %v2915 = vpack.c.b16 %v1875, %v1862
    %v2916 = vpack.c.b16 %v1876, %v1863
    %v2917 = vpack.c.b16 %v1877, %v1864
    %v2918 = vpack.c.b16 %v1878, %v1865
    %v2919 = vpack.c.b16 %v1879, %v1866
    %v2920 = vpack.c.b16 %v1880, %v1867
    %v2921 = vpack.c.b16 %v1881, %v1868
    %v2922 = vpack.c.b16 %v1882, %v1869
    %v2923 = vpack.c.b16 %v1883, %v1870
    %v2924 = vpack.c.b16 %v1884, %v1871
    %v2925 = vpack.c.b16 %v1885, %v1872
    %v2926 = vpack.c.b16 %v1886, %v1873
    %v2927 = vpack.c.b16 %v1887, %v1874
    %v2928 = vpack.c.b16 %v1901, %v1888
    %v2929 = vpack.c.b16 %v1902, %v1889
    %v2930 = vpack.c.b16 %v1903, %v1890
    %v2931 = vpack.c.b16 %v1904, %v1891
    %v2932 = vpack.c.b16 %v1905, %v1892
    %v2933 = vpack.c.b16 %v1906, %v1893
    %v2934 = vpack.c.b16 %v1907, %v1894
    %v2935 = vpack.c.b16 %v1908, %v1895
    %v2936 = vpack.c.b16 %v1909, %v1896
    %v2937 = vpack.c.b16 %v1910, %v1897
    %v2938 = vpack.c.b16 %v1911, %v1898
    %v2939 = vpack.c.b16 %v1912, %v1899
    %v2940 = vpack.c.b16 %v1913, %v1900
    %v2941 = vpack.c.b16 %v1927, %v1914
    %v2942 = vpack.c.b16 %v1928, %v1915
    %v2943 = vpack.c.b16 %v1929, %v1916
    %v2944 = vpack.c.b16 %v1930, %v1917
    %v2945 = vpack.c.b16 %v1931, %v1918
    %v2946 = vpack.c.b16 %v1932, %v1919
    %v2947 = vpack.c.b16 %v1933, %v1920
    %v2948 = vpack.c.b16 %v1934, %v1921
    %v2949 = vpack.c.b16 %v1935, %v1922
    %v2950 = vpack.c.b16 %v1936, %v1923
    %v2951 = vpack.c.b16 %v1937, %v1924
    %v2952 = vpack.c.b16 %v1938, %v1925
    %v2953 = vpack.c.b16 %v1939, %v1926
    %v2954 = vpack.c.b16 %v1953, %v1940
    %v2955 = vpack.c.b16 %v1954, %v1941
    %v2956 = vpack.c.b16 %v1955, %v1942
    %v2957 = vpack.c.b16 %v1956, %v1943
    %v2958 = vpack.c.b16 %v1957, %v1944
    %v2959 = vpack.c.b16 %v1958, %v1945
    %v2960 = vpack.c.b16 %v1959, %v1946
    %v2961 = vpack.c.b16 %v1960, %v1947
    %v2962 = vpack.c.b16 %v1961, %v1948
    %v2963 = vpack.c.b16 %v1962, %v1949
    %v2964 = vpack.c.b16 %v1963, %v1950
    %v2965 = vpack.c.b16 %v1964, %v1951
    %v2966 = vpack.c.b16 %v1965, %v1952
    %v2967 = vpack.c.b16 %v1979, %v1966
    %v2968 = vpack.c.b16 %v1980, %v1967
    %v2969 = vpack.c.b16 %v1981, %v1968
    %v2970 = vpack.c.b16 %v1982, %v1969
    %v2971 = vpack.c.b16 %v1983, %v1970
    %v2972 = vpack.c.b16 %v1984, %v1971
    %v2973 = vpack.c.b16 %v1985, %v1972
    %v2974 = vpack.c.b16 %v1986, %v1973
    %v2975 = vpack.c.b16 %v1987, %v1974
    %v2976 = vpack.c.b16 %v1988, %v1975
    %v2977 = vpack.c.b16 %v1989, %v1976
    %v2978 = vpack.c.b16 %v1990, %v1977
    %v2979 = vpack.c.b16 %v1991, %v1978
    %v2980 = vpack.c.b16 %v2005, %v1992
    %v2981 = vpack.c.b16 %v2006, %v1993
    %v2982 = vpack.c.b16 %v2007, %v1994
    %v2983 = vpack.c.b16 %v2008, %v1995
    %v2984 = vpack.c.b16 %v2009, %v1996
    %v2985 = vpack.c.b16 %v2010, %v1997
    %v2986 = vpack.c.b16 %v2011, %v1998
    %v2987 = vpack.c.b16 %v2012, %v1999
    %v2988 = vpack.c.b16 %v2013, %v2000
    %v2989 = vpack.c.b16 %v2014, %v2001
    %v2990 = vpack.c.b16 %v2015, %v2002
    %v2991 = vpack.c.b16 %v2016, %v2003
    %v2992 = vpack.c.b16 %v2017, %v2004
    %v2993 = vpack.c.b16 %v2031, %v2018
    %v2994 = vpack.c.b16 %v2032, %v2019
    %v2995 = vpack.c.b16 %v2033, %v2020
    %v2996 = vpack.c.b16 %v2034, %v2021
    %v2997 = vpack.c.b16 %v2035, %v2022
    %v2998 = vpack.c.b16 %v2036, %v2023
    %v2999 = vpack.c.b16 %v2037, %v2024
    %v3000 = vpack.c.b16 %v2038, %v2025
    %v3001 = vpack.c.b16 %v2039, %v2026
    %v3002 = vpack.c.b16 %v2040, %v2027
    %v3003 = vpack.c.b16 %v2041, %v2028
    %v3004 = vpack.c.b16 %v2042, %v2029
    %v3005 = vpack.c.b16 %v2043, %v2030
    %v3006 = vpack.c.b16 %v2057, %v2044
    %v3007 = vpack.c.b16 %v2058, %v2045
    %v3008 = vpack.c.b16 %v2059, %v2046
    %v3009 = vpack.c.b16 %v2060, %v2047
    %v3010 = vpack.c.b16 %v2061, %v2048
    %v3011 = vpack.c.b16 %v2062, %v2049
    %v3012 = vpack.c.b16 %v2063, %v2050
    %v3013 = vpack.c.b16 %v2064, %v2051
    %v3014 = vpack.c.b16 %v2065, %v2052
    %v3015 = vpack.c.b16 %v2066, %v2053
    %v3016 = vpack.c.b16 %v2067, %v2054
    %v3017 = vpack.c.b16 %v2068, %v2055
    %v3018 = vpack.c.b16 %v2069, %v2056
    %v3019 = vpack.c.b16 %v2083, %v2070
    %v3020 = vpack.c.b16 %v2084, %v2071
    %v3021 = vpack.c.b16 %v2085, %v2072
    %v3022 = vpack.c.b16 %v2086, %v2073
    %v3023 = vpack.c.b16 %v2087, %v2074
    %v3024 = vpack.c.b16 %v2088, %v2075
    %v3025 = vpack.c.b16 %v2089, %v2076
    %v3026 = vpack.c.b16 %v2090, %v2077
    %v3027 = vpack.c.b16 %v2091, %v2078
    %v3028 = vpack.c.b16 %v2092, %v2079
    %v3029 = vpack.c.b16 %v2093, %v2080
    %v3030 = vpack.c.b16 %v2094, %v2081
    %v3031 = vpack.c.b16 %v2095, %v2082
    %v3032 = vpack.c.b16 %v2109, %v2096
    %v3033 = vpack.c.b16 %v2110, %v2097
    %v3034 = vpack.c.b16 %v2111, %v2098
    %v3035 = vpack.c.b16 %v2112, %v2099
    %v3036 = vpack.c.b16 %v2113, %v2100
    %v3037 = vpack.c.b16 %v2114, %v2101
    %v3038 = vpack.c.b16 %v2115, %v2102
    %v3039 = vpack.c.b16 %v2116, %v2103
    %v3040 = vpack.c.b16 %v2117, %v2104
    %v3041 = vpack.c.b16 %v2118, %v2105
    %v3042 = vpack.c.b16 %v2119, %v2106
    %v3043 = vpack.c.b16 %v2120, %v2107
    %v3044 = vpack.c.b16 %v2121, %v2108
    %v3045 = vpack.c.b16 %v2135, %v2122
    %v3046 = vpack.c.b16 %v2136, %v2123
    %v3047 = vpack.c.b16 %v2137, %v2124
    %v3048 = vpack.c.b16 %v2138, %v2125
    %v3049 = vpack.c.b16 %v2139, %v2126
    %v3050 = vpack.c.b16 %v2140, %v2127
    %v3051 = vpack.c.b16 %v2141, %v2128
    %v3052 = vpack.c.b16 %v2142, %v2129
    %v3053 = vpack.c.b16 %v2143, %v2130
    %v3054 = vpack.c.b16 %v2144, %v2131
    %v3055 = vpack.c.b16 %v2145, %v2132
    %v3056 = vpack.c.b16 %v2146, %v2133
    %v3057 = vpack.c.b16 %v2147, %v2134
    %v3058 = vpack.c.b16 %v2161, %v2148
    %v3059 = vpack.c.b16 %v2162, %v2149
    %v3060 = vpack.c.b16 %v2163, %v2150
    %v3061 = vpack.c.b16 %v2164, %v2151
    %v3062 = vpack.c.b16 %v2165, %v2152
    %v3063 = vpack.c.b16 %v2166, %v2153
    %v3064 = vpack.c.b16 %v2167, %v2154
    %v3065 = vpack.c.b16 %v2168, %v2155
    %v3066 = vpack.c.b16 %v2169, %v2156
    %v3067 = vpack.c.b16 %v2170, %v2157
    %v3068 = vpack.c.b16 %v2171, %v2158
    %v3069 = vpack.c.b16 %v2172, %v2159
    %v3070 = vpack.c.b16 %v2173, %v2160
    %v3071 = vpack.c.b16 %v2187, %v2174
    %v3072 = vpack.c.b16 %v2188, %v2175
    %v3073 = vpack.c.b16 %v2189, %v2176
    %v3074 = vpack.c.b16 %v2190, %v2177
    %v3075 = vpack.c.b16 %v2191, %v2178
    %v3076 = vpack.c.b16 %v2192, %v2179
    %v3077 = vpack.c.b16 %v2193, %v2180
    %v3078 = vpack.c.b16 %v2194, %v2181
    %v3079 = vpack.c.b16 %v2195, %v2182
    %v3080 = vpack.c.b16 %v2196, %v2183
    %v3081 = vpack.c.b16 %v2197, %v2184
    %v3082 = vpack.c.b16 %v2198, %v2185
    %v3083 = vpack.c.b16 %v2199, %v2186
    %v3084 = vpack.c.b16 %v2213, %v2200
    %v3085 = vpack.c.b16 %v2214, %v2201
    %v3086 = vpack.c.b16 %v2215, %v2202
    %v3087 = vpack.c.b16 %v2216, %v2203
    %v3088 = vpack.c.b16 %v2217, %v2204
    %v3089 = vpack.c.b16 %v2218, %v2205
    %v3090 = vpack.c.b16 %v2219, %v2206
    %v3091 = vpack.c.b16 %v2220, %v2207
    %v3092 = vpack.c.b16 %v2221, %v2208
    %v3093 = vpack.c.b16 %v2222, %v2209
    %v3094 = vpack.c.b16 %v2223, %v2210
    %v3095 = vpack.c.b16 %v2224, %v2211
    %v3096 = vpack.c.b16 %v2225, %v2212
    %v3097 = vpack.c.b16 %v2239, %v2226
    %v3098 = vpack.c.b16 %v2240, %v2227
    %v3099 = vpack.c.b16 %v2241, %v2228
    %v3100 = vpack.c.b16 %v2242, %v2229
    %v3101 = vpack.c.b16 %v2243, %v2230
    %v3102 = vpack.c.b16 %v2244, %v2231
    %v3103 = vpack.c.b16 %v2245, %v2232
    %v3104 = vpack.c.b16 %v2246, %v2233
    %v3105 = vpack.c.b16 %v2247, %v2234
    %v3106 = vpack.c.b16 %v2248, %v2235
    %v3107 = vpack.c.b16 %v2249, %v2236
    %v3108 = vpack.c.b16 %v2250, %v2237
    %v3109 = vpack.c.b16 %v2251, %v2238
    %v3110 = vpack.c.b16 %v2265, %v2252
    %v3111 = vpack.c.b16 %v2266, %v2253
    %v3112 = vpack.c.b16 %v2267, %v2254
    %v3113 = vpack.c.b16 %v2268, %v2255
    %v3114 = vpack.c.b16 %v2269, %v2256
    %v3115 = vpack.c.b16 %v2270, %v2257
    %v3116 = vpack.c.b16 %v2271, %v2258
    %v3117 = vpack.c.b16 %v2272, %v2259
    %v3118 = vpack.c.b16 %v2273, %v2260
    %v3119 = vpack.c.b16 %v2274, %v2261
    %v3120 = vpack.c.b16 %v2275, %v2262
    %v3121 = vpack.c.b16 %v2276, %v2263
    %v3122 = vpack.c.b16 %v2277, %v2264
    %v3123 = vpack.c.b16 %v2291, %v2278
    %v3124 = vpack.c.b16 %v2292, %v2279
    %v3125 = vpack.c.b16 %v2293, %v2280
    %v3126 = vpack.c.b16 %v2294, %v2281
    %v3127 = vpack.c.b16 %v2295, %v2282
    %v3128 = vpack.c.b16 %v2296, %v2283
    %v3129 = vpack.c.b16 %v2297, %v2284
    %v3130 = vpack.c.b16 %v2298, %v2285
    %v3131 = vpack.c.b16 %v2299, %v2286
    %v3132 = vpack.c.b16 %v2300, %v2287
    %v3133 = vpack.c.b16 %v2301, %v2288
    %v3134 = vpack.c.b16 %v2302, %v2289
    %v3135 = vpack.c.b16 %v2303, %v2290
    %v3136 = vpack.c.b16 %v2317, %v2304
    %v3137 = vpack.c.b16 %v2318, %v2305
    %v3138 = vpack.c.b16 %v2319, %v2306
    %v3139 = vpack.c.b16 %v2320, %v2307
    %v3140 = vpack.c.b16 %v2321, %v2308
    %v3141 = vpack.c.b16 %v2322, %v2309
    %v3142 = vpack.c.b16 %v2323, %v2310
    %v3143 = vpack.c.b16 %v2324, %v2311
    %v3144 = vpack.c.b16 %v2325, %v2312
    %v3145 = vpack.c.b16 %v2326, %v2313
    %v3146 = vpack.c.b16 %v2327, %v2314
    %v3147 = vpack.c.b16 %v2328, %v2315
    %v3148 = vpack.c.b16 %v2329, %v2316
    %v3149 = vpack.c.b16 %v2343, %v2330
    %v3150 = vpack.c.b16 %v2344, %v2331
    %v3151 = vpack.c.b16 %v2345, %v2332
    %v3152 = vpack.c.b16 %v2346, %v2333
    %v3153 = vpack.c.b16 %v2347, %v2334
    %v3154 = vpack.c.b16 %v2348, %v2335
    %v3155 = vpack.c.b16 %v2349, %v2336
    %v3156 = vpack.c.b16 %v2350, %v2337
    %v3157 = vpack.c.b16 %v2351, %v2338
    %v3158 = vpack.c.b16 %v2352, %v2339
    %v3159 = vpack.c.b16 %v2353, %v2340
    %v3160 = vpack.c.b16 %v2354, %v2341
    %v3161 = vpack.c.b16 %v2355, %v2342
    %v3162 = vpack.c.b16 %v2369, %v2356
    %v3163 = vpack.c.b16 %v2370, %v2357
    %v3164 = vpack.c.b16 %v2371, %v2358
    %v3165 = vpack.c.b16 %v2372, %v2359
    %v3166 = vpack.c.b16 %v2373, %v2360
    %v3167 = vpack.c.b16 %v2374, %v2361
    %v3168 = vpack.c.b16 %v2375, %v2362
    %v3169 = vpack.c.b16 %v2376, %v2363
    %v3170 = vpack.c.b16 %v2377, %v2364
    %v3171 = vpack.c.b16 %v2378, %v2365
    %v3172 = vpack.c.b16 %v2379, %v2366
    %v3173 = vpack.c.b16 %v2380, %v2367
    %v3174 = vpack.c.b16 %v2381, %v2368
    %v3175 = vpack.c.b16 %v2395, %v2382
    %v3176 = vpack.c.b16 %v2396, %v2383
    %v3177 = vpack.c.b16 %v2397, %v2384
    %v3178 = vpack.c.b16 %v2398, %v2385
    %v3179 = vpack.c.b16 %v2399, %v2386
    %v3180 = vpack.c.b16 %v2400, %v2387
    %v3181 = vpack.c.b16 %v2401, %v2388
    %v3182 = vpack.c.b16 %v2402, %v2389
    %v3183 = vpack.c.b16 %v2403, %v2390
    %v3184 = vpack.c.b16 %v2404, %v2391
    %v3185 = vpack.c.b16 %v2405, %v2392
    %v3186 = vpack.c.b16 %v2406, %v2393
    %v3187 = vpack.c.b16 %v2407, %v2394
    %v3188 = vpack.c.b16 %v2421, %v2408
    %v3189 = vpack.c.b16 %v2422, %v2409
    %v3190 = vpack.c.b16 %v2423, %v2410
    %v3191 = vpack.c.b16 %v2424, %v2411
    %v3192 = vpack.c.b16 %v2425, %v2412
    %v3193 = vpack.c.b16 %v2426, %v2413
    %v3194 = vpack.c.b16 %v2427, %v2414
    %v3195 = vpack.c.b16 %v2428, %v2415
    %v3196 = vpack.c.b16 %v2429, %v2416
    %v3197 = vpack.c.b16 %v2430, %v2417
    %v3198 = vpack.c.b16 %v2431, %v2418
    %v3199 = vpack.c.b16 %v2432, %v2419
    %v3200 = vpack.c.b16 %v2433, %v2420
    %v3201 = vpack.c.b16 %v2447, %v2434
    %v3202 = vpack.c.b16 %v2448, %v2435
    %v3203 = vpack.c.b16 %v2449, %v2436
    %v3204 = vpack.c.b16 %v2450, %v2437
    %v3205 = vpack.c.b16 %v2451, %v2438
    %v3206 = vpack.c.b16 %v2452, %v2439
    %v3207 = vpack.c.b16 %v2453, %v2440
    %v3208 = vpack.c.b16 %v2454, %v2441
    %v3209 = vpack.c.b16 %v2455, %v2442
    %v3210 = vpack.c.b16 %v2456, %v2443
    %v3211 = vpack.c.b16 %v2457, %v2444
    %v3212 = vpack.c.b16 %v2458, %v2445
    %v3213 = vpack.c.b16 %v2459, %v2446
    %v3214 = vpack.c.b16 %v2473, %v2460
    %v3215 = vpack.c.b16 %v2474, %v2461
    %v3216 = vpack.c.b16 %v2475, %v2462
    %v3217 = vpack.c.b16 %v2476, %v2463
    %v3218 = vpack.c.b16 %v2477, %v2464
    %v3219 = vpack.c.b16 %v2478, %v2465
    %v3220 = vpack.c.b16 %v2479, %v2466
    %v3221 = vpack.c.b16 %v2480, %v2467
    %v3222 = vpack.c.b16 %v2481, %v2468
    %v3223 = vpack.c.b16 %v2482, %v2469
    %v3224 = vpack.c.b16 %v2483, %v2470
    %v3225 = vpack.c.b16 %v2484, %v2471
    %v3226 = vpack.c.b16 %v2485, %v2472
    %v3227 = vpack.c.b16 %v2499, %v2486
    %v3228 = vpack.c.b16 %v2500, %v2487
    %v3229 = vpack.c.b16 %v2501, %v2488
    %v3230 = vpack.c.b16 %v2502, %v2489
    %v3231 = vpack.c.b16 %v2503, %v2490
    %v3232 = vpack.c.b16 %v2504, %v2491
    %v3233 = vpack.c.b16 %v2505, %v2492
    %v3234 = vpack.c.b16 %v2506, %v2493
    %v3235 = vpack.c.b16 %v2507, %v2494
    %v3236 = vpack.c.b16 %v2508, %v2495
    %v3237 = vpack.c.b16 %v2509, %v2496
    %v3238 = vpack.c.b16 %v2510, %v2497
    %v3239 = vpack.c.b16 %v2511, %v2498
    %v3240 = vpack.c.b16 %v2525, %v2512
    %v3241 = vpack.c.b16 %v2526, %v2513
    %v3242 = vpack.c.b16 %v2527, %v2514
    %v3243 = vpack.c.b16 %v2528, %v2515
    %v3244 = vpack.c.b16 %v2529, %v2516
    %v3245 = vpack.c.b16 %v2530, %v2517
    %v3246 = vpack.c.b16 %v2531, %v2518
    %v3247 = vpack.c.b16 %v2532, %v2519
    %v3248 = vpack.c.b16 %v2533, %v2520
    %v3249 = vpack.c.b16 %v2534, %v2521
    %v3250 = vpack.c.b16 %v2535, %v2522
    %v3251 = vpack.c.b16 %v2536, %v2523
    %v3252 = vpack.c.b16 %v2537, %v2524
    %v3253 = vpack.c.b16 %v2551, %v2538
    %v3254 = vpack.c.b16 %v2552, %v2539
    %v3255 = vpack.c.b16 %v2553, %v2540
    %v3256 = vpack.c.b16 %v2554, %v2541
    %v3257 = vpack.c.b16 %v2555, %v2542
    %v3258 = vpack.c.b16 %v2556, %v2543
    %v3259 = vpack.c.b16 %v2557, %v2544
    %v3260 = vpack.c.b16 %v2558, %v2545
    %v3261 = vpack.c.b16 %v2559, %v2546
    %v3262 = vpack.c.b16 %v2560, %v2547
    %v3263 = vpack.c.b16 %v2561, %v2548
    %v3264 = vpack.c.b16 %v2562, %v2549
    %v3265 = vpack.c.b16 %v2563, %v2550
    %v3266 = vpack.c.b16 %v2577, %v2564
    %v3267 = vpack.c.b16 %v2578, %v2565
    %v3268 = vpack.c.b16 %v2579, %v2566
    %v3269 = vpack.c.b16 %v2580, %v2567
    %v3270 = vpack.c.b16 %v2581, %v2568
    %v3271 = vpack.c.b16 %v2582, %v2569
    %v3272 = vpack.c.b16 %v2583, %v2570
    %v3273 = vpack.c.b16 %v2584, %v2571
    %v3274 = vpack.c.b16 %v2585, %v2572
    %v3275 = vpack.c.b16 %v2586, %v2573
    %v3276 = vpack.c.b16 %v2587, %v2574
    %v3277 = vpack.c.b16 %v2588, %v2575
    %v3278 = vpack.c.b16 %v2589, %v2576
    %v3279 = vpack.c.b16 %v2603, %v2590
    %v3280 = vpack.c.b16 %v2604, %v2591
    %v3281 = vpack.c.b16 %v2605, %v2592
    %v3282 = vpack.c.b16 %v2606, %v2593
    %v3283 = vpack.c.b16 %v2607, %v2594
    %v3284 = vpack.c.b16 %v2608, %v2595
    %v3285 = vpack.c.b16 %v2609, %v2596
    %v3286 = vpack.c.b16 %v2610, %v2597
    %v3287 = vpack.c.b16 %v2611, %v2598
    %v3288 = vpack.c.b16 %v2612, %v2599
    %v3289 = vpack.c.b16 %v2613, %v2600
    %v3290 = vpack.c.b16 %v2614, %v2601
    %v3291 = vpack.c.b16 %v2615, %v2602
    %v3292 = vpack.c.b16 %v2629, %v2616
    %v3293 = vpack.c.b16 %v2630, %v2617
    %v3294 = vpack.c.b16 %v2631, %v2618
    %v3295 = vpack.c.b16 %v2632, %v2619
    %v3296 = vpack.c.b16 %v2633, %v2620
    %v3297 = vpack.c.b16 %v2634, %v2621
    %v3298 = vpack.c.b16 %v2635, %v2622
    %v3299 = vpack.c.b16 %v2636, %v2623
    %v3300 = vpack.c.b16 %v2637, %v2624
    %v3301 = vpack.c.b16 %v2638, %v2625
    %v3302 = vpack.c.b16 %v2639, %v2626
    %v3303 = vpack.c.b16 %v2640, %v2627
    %v3304 = vpack.c.b16 %v2641, %v2628
    %v3305 = vpack.c.b16 %v2655, %v2642
    %v3306 = vpack.c.b16 %v2656, %v2643
    %v3307 = vpack.c.b16 %v2657, %v2644
    %v3308 = vpack.c.b16 %v2658, %v2645
    %v3309 = vpack.c.b16 %v2659, %v2646
    %v3310 = vpack.c.b16 %v2660, %v2647
    %v3311 = vpack.c.b16 %v2661, %v2648
    %v3312 = vpack.c.b16 %v2662, %v2649
    %v3313 = vpack.c.b16 %v2663, %v2650
    %v3314 = vpack.c.b16 %v2664, %v2651
    %v3315 = vpack.c.b16 %v2665, %v2652
    %v3316 = vpack.c.b16 %v2666, %v2653
    %v3317 = vpack.c.b16 %v2667, %v2654
    %v3318 = vpack.c.b16 %v2681, %v2668
    %v3319 = vpack.c.b16 %v2682, %v2669
    %v3320 = vpack.c.b16 %v2683, %v2670
    %v3321 = vpack.c.b16 %v2684, %v2671
    %v3322 = vpack.c.b16 %v2685, %v2672
    %v3323 = vpack.c.b16 %v2686, %v2673
    %v3324 = vpack.c.b16 %v2687, %v2674
    %v3325 = vpack.c.b16 %v2688, %v2675
    %v3326 = vpack.c.b16 %v2689, %v2676
    %v3327 = vpack.c.b16 %v2690, %v2677
    %v3328 = vpack.c.b16 %v2691, %v2678
    %v3329 = vpack.c.b16 %v2692, %v2679
    %v3330 = vpack.c.b16 %v2693, %v2680
    %v3331 = vpack.c.b16 %v2707, %v2694
    %v3332 = vpack.c.b16 %v2708, %v2695
    %v3333 = vpack.c.b16 %v2709, %v2696
    %v3334 = vpack.c.b16 %v2710, %v2697
    %v3335 = vpack.c.b16 %v2711, %v2698
    %v3336 = vpack.c.b16 %v2712, %v2699
    %v3337 = vpack.c.b16 %v2713, %v2700
    %v3338 = vpack.c.b16 %v2714, %v2701
    %v3339 = vpack.c.b16 %v2715, %v2702
    %v3340 = vpack.c.b16 %v2716, %v2703
    %v3341 = vpack.c.b16 %v2717, %v2704
    %v3342 = vpack.c.b16 %v2718, %v2705
    %v3343 = vpack.c.b16 %v2719, %v2706
    %3968 = vmatpush.bf16.msra.mxu0 %v2811
    %3969 = vmatpush.bf16.msra.mxu0 %v2798
    %3970 = vmatpush.bf16.msra.mxu0 %v2785
    %3971 = vmatpush.bf16.msra.mxu0 %v2772
    %3972 = vmatpush.bf16.msra.mxu0 %v2759
    %3973 = vmatpush.bf16.msra.mxu0 %v2746
    %3974 = vmatpush.bf16.msra.mxu0 %v2733
    %3975 = vmatpush.bf16.msra.mxu0 %v2720
    %3976 = vmatmul.bf16.gmra.mxu0 %v788
    %v3977 = vpop.f32.mrf.mxu0
    %v3978 = vadd.f32 %v760, %v3977
    %v3979 = vpop.f32.mrf.mxu0
    %3980 = vdwg.mxu0
    %3981 = vmatpush.bf16.msra.mxu0 %v2915
    %3982 = vmatpush.bf16.msra.mxu0 %v2902
    %3983 = vmatpush.bf16.msra.mxu0 %v2889
    %3984 = vmatpush.bf16.msra.mxu0 %v2876
    %3985 = vmatpush.bf16.msra.mxu0 %v2863
    %3986 = vmatpush.bf16.msra.mxu0 %v2850
    %3987 = vmatpush.bf16.msra.mxu0 %v2837
    %3988 = vmatpush.bf16.msra.mxu0 %v2824
    %3989 = vmatmul.bf16.gmra.mxu0 %v789
    %v3990 = vpop.f32.mrf.mxu0
    %v3991 = vadd.f32 %v3978, %v3990
    %v3992 = vpop.f32.mrf.mxu0
    %3993 = vdwg.mxu0
    %3994 = vmatpush.bf16.msra.mxu0 %v3019
    %3995 = vmatpush.bf16.msra.mxu0 %v3006
    %3996 = vmatpush.bf16.msra.mxu0 %v2993
    %3997 = vmatpush.bf16.msra.mxu0 %v2980
    %3998 = vmatpush.bf16.msra.mxu0 %v2967
    %3999 = vmatpush.bf16.msra.mxu0 %v2954
    %4000 = vmatpush.bf16.msra.mxu0 %v2941
    %4001 = vmatpush.bf16.msra.mxu0 %v2928
    %4002 = vmatmul.bf16.gmra.mxu0 %v790
    %v4003 = vpop.f32.mrf.mxu0
    %v4004 = vadd.f32 %v3991, %v4003
    %v4005 = vpop.f32.mrf.mxu0
    %4006 = vdwg.mxu0
    %4007 = vmatpush.bf16.msra.mxu0 %v3123
    %4008 = vmatpush.bf16.msra.mxu0 %v3110
    %4009 = vmatpush.bf16.msra.mxu0 %v3097
    %4010 = vmatpush.bf16.msra.mxu0 %v3084
    %4011 = vmatpush.bf16.msra.mxu0 %v3071
    %4012 = vmatpush.bf16.msra.mxu0 %v3058
    %4013 = vmatpush.bf16.msra.mxu0 %v3045
    %4014 = vmatpush.bf16.msra.mxu0 %v3032
    %4015 = vmatmul.bf16.gmra.mxu0 %v791
    %v4016 = vpop.f32.mrf.mxu0
    %v4017 = vadd.f32 %v4004, %v4016
    %v4018 = vpop.f32.mrf.mxu0
    %4019 = vdwg.mxu0
    %4020 = vmatpush.bf16.msra.mxu0 %v3227
    %4021 = vmatpush.bf16.msra.mxu0 %v3214
    %4022 = vmatpush.bf16.msra.mxu0 %v3201
    %4023 = vmatpush.bf16.msra.mxu0 %v3188
    %4024 = vmatpush.bf16.msra.mxu0 %v3175
    %4025 = vmatpush.bf16.msra.mxu0 %v3162
    %4026 = vmatpush.bf16.msra.mxu0 %v3149
    %4027 = vmatpush.bf16.msra.mxu0 %v3136
    %4028 = vmatmul.bf16.gmra.mxu0 %v792
    %v4029 = vpop.f32.mrf.mxu0
    %v4030 = vadd.f32 %v4017, %v4029
    %v4031 = vpop.f32.mrf.mxu0
    %4032 = vdwg.mxu0
    %4033 = vmatpush.bf16.msra.mxu0 %v3331
    %4034 = vmatpush.bf16.msra.mxu0 %v3318
    %4035 = vmatpush.bf16.msra.mxu0 %v3305
    %4036 = vmatpush.bf16.msra.mxu0 %v3292
    %4037 = vmatpush.bf16.msra.mxu0 %v3279
    %4038 = vmatpush.bf16.msra.mxu0 %v3266
    %4039 = vmatpush.bf16.msra.mxu0 %v3253
    %4040 = vmatpush.bf16.msra.mxu0 %v3240
    %4041 = vmatmul.bf16.gmra.mxu0 %v793
    %v4042 = vpop.f32.mrf.mxu0
    %v4043 = vadd.f32 %v4030, %v4042
    %v4044 = vpop.f32.mrf.mxu0
    %4045 = vdwg.mxu0
    %4046 = vmatpush.bf16.msra.mxu0 %v2812
    %4047 = vmatpush.bf16.msra.mxu0 %v2799
    %4048 = vmatpush.bf16.msra.mxu0 %v2786
    %4049 = vmatpush.bf16.msra.mxu0 %v2773
    %4050 = vmatpush.bf16.msra.mxu0 %v2760
    %4051 = vmatpush.bf16.msra.mxu0 %v2747
    %4052 = vmatpush.bf16.msra.mxu0 %v2734
    %4053 = vmatpush.bf16.msra.mxu0 %v2721
    %4054 = vmatmul.bf16.gmra.mxu0 %v788
    %v4055 = vpop.f32.mrf.mxu0
    %v4056 = vadd.f32 %v761, %v4055
    %v4057 = vpop.f32.mrf.mxu0
    %4058 = vdwg.mxu0
    %4059 = vmatpush.bf16.msra.mxu0 %v2916
    %4060 = vmatpush.bf16.msra.mxu0 %v2903
    %4061 = vmatpush.bf16.msra.mxu0 %v2890
    %4062 = vmatpush.bf16.msra.mxu0 %v2877
    %4063 = vmatpush.bf16.msra.mxu0 %v2864
    %4064 = vmatpush.bf16.msra.mxu0 %v2851
    %4065 = vmatpush.bf16.msra.mxu0 %v2838
    %4066 = vmatpush.bf16.msra.mxu0 %v2825
    %4067 = vmatmul.bf16.gmra.mxu0 %v789
    %v4068 = vpop.f32.mrf.mxu0
    %v4069 = vadd.f32 %v4056, %v4068
    %v4070 = vpop.f32.mrf.mxu0
    %4071 = vdwg.mxu0
    %4072 = vmatpush.bf16.msra.mxu0 %v3020
    %4073 = vmatpush.bf16.msra.mxu0 %v3007
    %4074 = vmatpush.bf16.msra.mxu0 %v2994
    %4075 = vmatpush.bf16.msra.mxu0 %v2981
    %4076 = vmatpush.bf16.msra.mxu0 %v2968
    %4077 = vmatpush.bf16.msra.mxu0 %v2955
    %4078 = vmatpush.bf16.msra.mxu0 %v2942
    %4079 = vmatpush.bf16.msra.mxu0 %v2929
    %4080 = vmatmul.bf16.gmra.mxu0 %v790
    %v4081 = vpop.f32.mrf.mxu0
    %v4082 = vadd.f32 %v4069, %v4081
    %v4083 = vpop.f32.mrf.mxu0
    %4084 = vdwg.mxu0
    %4085 = vmatpush.bf16.msra.mxu0 %v3124
    %4086 = vmatpush.bf16.msra.mxu0 %v3111
    %4087 = vmatpush.bf16.msra.mxu0 %v3098
    %4088 = vmatpush.bf16.msra.mxu0 %v3085
    %4089 = vmatpush.bf16.msra.mxu0 %v3072
    %4090 = vmatpush.bf16.msra.mxu0 %v3059
    %4091 = vmatpush.bf16.msra.mxu0 %v3046
    %4092 = vmatpush.bf16.msra.mxu0 %v3033
    %4093 = vmatmul.bf16.gmra.mxu0 %v791
    %v4094 = vpop.f32.mrf.mxu0
    %v4095 = vadd.f32 %v4082, %v4094
    %v4096 = vpop.f32.mrf.mxu0
    %4097 = vdwg.mxu0
    %4098 = vmatpush.bf16.msra.mxu0 %v3228
    %4099 = vmatpush.bf16.msra.mxu0 %v3215
    %4100 = vmatpush.bf16.msra.mxu0 %v3202
    %4101 = vmatpush.bf16.msra.mxu0 %v3189
    %4102 = vmatpush.bf16.msra.mxu0 %v3176
    %4103 = vmatpush.bf16.msra.mxu0 %v3163
    %4104 = vmatpush.bf16.msra.mxu0 %v3150
    %4105 = vmatpush.bf16.msra.mxu0 %v3137
    %4106 = vmatmul.bf16.gmra.mxu0 %v792
    %v4107 = vpop.f32.mrf.mxu0
    %v4108 = vadd.f32 %v4095, %v4107
    %v4109 = vpop.f32.mrf.mxu0
    %4110 = vdwg.mxu0
    %4111 = vmatpush.bf16.msra.mxu0 %v3332
    %4112 = vmatpush.bf16.msra.mxu0 %v3319
    %4113 = vmatpush.bf16.msra.mxu0 %v3306
    %4114 = vmatpush.bf16.msra.mxu0 %v3293
    %4115 = vmatpush.bf16.msra.mxu0 %v3280
    %4116 = vmatpush.bf16.msra.mxu0 %v3267
    %4117 = vmatpush.bf16.msra.mxu0 %v3254
    %4118 = vmatpush.bf16.msra.mxu0 %v3241
    %4119 = vmatmul.bf16.gmra.mxu0 %v793
    %v4120 = vpop.f32.mrf.mxu0
    %v4121 = vadd.f32 %v4108, %v4120
    %v4122 = vpop.f32.mrf.mxu0
    %4123 = vdwg.mxu0
    %4124 = vmatpush.bf16.msra.mxu0 %v2813
    %4125 = vmatpush.bf16.msra.mxu0 %v2800
    %4126 = vmatpush.bf16.msra.mxu0 %v2787
    %4127 = vmatpush.bf16.msra.mxu0 %v2774
    %4128 = vmatpush.bf16.msra.mxu0 %v2761
    %4129 = vmatpush.bf16.msra.mxu0 %v2748
    %4130 = vmatpush.bf16.msra.mxu0 %v2735
    %4131 = vmatpush.bf16.msra.mxu0 %v2722
    %4132 = vmatmul.bf16.gmra.mxu0 %v788
    %v4133 = vpop.f32.mrf.mxu0
    %v4134 = vadd.f32 %v762, %v4133
    %v4135 = vpop.f32.mrf.mxu0
    %4136 = vdwg.mxu0
    %4137 = vmatpush.bf16.msra.mxu0 %v2917
    %4138 = vmatpush.bf16.msra.mxu0 %v2904
    %4139 = vmatpush.bf16.msra.mxu0 %v2891
    %4140 = vmatpush.bf16.msra.mxu0 %v2878
    %4141 = vmatpush.bf16.msra.mxu0 %v2865
    %4142 = vmatpush.bf16.msra.mxu0 %v2852
    %4143 = vmatpush.bf16.msra.mxu0 %v2839
    %4144 = vmatpush.bf16.msra.mxu0 %v2826
    %4145 = vmatmul.bf16.gmra.mxu0 %v789
    %v4146 = vpop.f32.mrf.mxu0
    %v4147 = vadd.f32 %v4134, %v4146
    %v4148 = vpop.f32.mrf.mxu0
    %4149 = vdwg.mxu0
    %4150 = vmatpush.bf16.msra.mxu0 %v3021
    %4151 = vmatpush.bf16.msra.mxu0 %v3008
    %4152 = vmatpush.bf16.msra.mxu0 %v2995
    %4153 = vmatpush.bf16.msra.mxu0 %v2982
    %4154 = vmatpush.bf16.msra.mxu0 %v2969
    %4155 = vmatpush.bf16.msra.mxu0 %v2956
    %4156 = vmatpush.bf16.msra.mxu0 %v2943
    %4157 = vmatpush.bf16.msra.mxu0 %v2930
    %4158 = vmatmul.bf16.gmra.mxu0 %v790
    %v4159 = vpop.f32.mrf.mxu0
    %v4160 = vadd.f32 %v4147, %v4159
    %v4161 = vpop.f32.mrf.mxu0
    %4162 = vdwg.mxu0
    %4163 = vmatpush.bf16.msra.mxu0 %v3125
    %4164 = vmatpush.bf16.msra.mxu0 %v3112
    %4165 = vmatpush.bf16.msra.mxu0 %v3099
    %4166 = vmatpush.bf16.msra.mxu0 %v3086
    %4167 = vmatpush.bf16.msra.mxu0 %v3073
    %4168 = vmatpush.bf16.msra.mxu0 %v3060
    %4169 = vmatpush.bf16.msra.mxu0 %v3047
    %4170 = vmatpush.bf16.msra.mxu0 %v3034
    %4171 = vmatmul.bf16.gmra.mxu0 %v791
    %v4172 = vpop.f32.mrf.mxu0
    %v4173 = vadd.f32 %v4160, %v4172
    %v4174 = vpop.f32.mrf.mxu0
    %4175 = vdwg.mxu0
    %4176 = vmatpush.bf16.msra.mxu0 %v3229
    %4177 = vmatpush.bf16.msra.mxu0 %v3216
    %4178 = vmatpush.bf16.msra.mxu0 %v3203
    %4179 = vmatpush.bf16.msra.mxu0 %v3190
    %4180 = vmatpush.bf16.msra.mxu0 %v3177
    %4181 = vmatpush.bf16.msra.mxu0 %v3164
    %4182 = vmatpush.bf16.msra.mxu0 %v3151
    %4183 = vmatpush.bf16.msra.mxu0 %v3138
    %4184 = vmatmul.bf16.gmra.mxu0 %v792
    %v4185 = vpop.f32.mrf.mxu0
    %v4186 = vadd.f32 %v4173, %v4185
    %v4187 = vpop.f32.mrf.mxu0
    %4188 = vdwg.mxu0
    %4189 = vmatpush.bf16.msra.mxu0 %v3333
    %4190 = vmatpush.bf16.msra.mxu0 %v3320
    %4191 = vmatpush.bf16.msra.mxu0 %v3307
    %4192 = vmatpush.bf16.msra.mxu0 %v3294
    %4193 = vmatpush.bf16.msra.mxu0 %v3281
    %4194 = vmatpush.bf16.msra.mxu0 %v3268
    %4195 = vmatpush.bf16.msra.mxu0 %v3255
    %4196 = vmatpush.bf16.msra.mxu0 %v3242
    %4197 = vmatmul.bf16.gmra.mxu0 %v793
    %v4198 = vpop.f32.mrf.mxu0
    %v4199 = vadd.f32 %v4186, %v4198
    %v4200 = vpop.f32.mrf.mxu0
    %4201 = vdwg.mxu0
    %4202 = vmatpush.bf16.msra.mxu0 %v2814
    %4203 = vmatpush.bf16.msra.mxu0 %v2801
    %4204 = vmatpush.bf16.msra.mxu0 %v2788
    %4205 = vmatpush.bf16.msra.mxu0 %v2775
    %4206 = vmatpush.bf16.msra.mxu0 %v2762
    %4207 = vmatpush.bf16.msra.mxu0 %v2749
    %4208 = vmatpush.bf16.msra.mxu0 %v2736
    %4209 = vmatpush.bf16.msra.mxu0 %v2723
    %4210 = vmatmul.bf16.gmra.mxu0 %v788
    %v4211 = vpop.f32.mrf.mxu0
    %v4212 = vadd.f32 %v763, %v4211
    %v4213 = vpop.f32.mrf.mxu0
    %4214 = vdwg.mxu0
    %4215 = vmatpush.bf16.msra.mxu0 %v2918
    %4216 = vmatpush.bf16.msra.mxu0 %v2905
    %4217 = vmatpush.bf16.msra.mxu0 %v2892
    %4218 = vmatpush.bf16.msra.mxu0 %v2879
    %4219 = vmatpush.bf16.msra.mxu0 %v2866
    %4220 = vmatpush.bf16.msra.mxu0 %v2853
    %4221 = vmatpush.bf16.msra.mxu0 %v2840
    %4222 = vmatpush.bf16.msra.mxu0 %v2827
    %4223 = vmatmul.bf16.gmra.mxu0 %v789
    %v4224 = vpop.f32.mrf.mxu0
    %v4225 = vadd.f32 %v4212, %v4224
    %v4226 = vpop.f32.mrf.mxu0
    %4227 = vdwg.mxu0
    %4228 = vmatpush.bf16.msra.mxu0 %v3022
    %4229 = vmatpush.bf16.msra.mxu0 %v3009
    %4230 = vmatpush.bf16.msra.mxu0 %v2996
    %4231 = vmatpush.bf16.msra.mxu0 %v2983
    %4232 = vmatpush.bf16.msra.mxu0 %v2970
    %4233 = vmatpush.bf16.msra.mxu0 %v2957
    %4234 = vmatpush.bf16.msra.mxu0 %v2944
    %4235 = vmatpush.bf16.msra.mxu0 %v2931
    %4236 = vmatmul.bf16.gmra.mxu0 %v790
    %v4237 = vpop.f32.mrf.mxu0
    %v4238 = vadd.f32 %v4225, %v4237
    %v4239 = vpop.f32.mrf.mxu0
    %4240 = vdwg.mxu0
    %4241 = vmatpush.bf16.msra.mxu0 %v3126
    %4242 = vmatpush.bf16.msra.mxu0 %v3113
    %4243 = vmatpush.bf16.msra.mxu0 %v3100
    %4244 = vmatpush.bf16.msra.mxu0 %v3087
    %4245 = vmatpush.bf16.msra.mxu0 %v3074
    %4246 = vmatpush.bf16.msra.mxu0 %v3061
    %4247 = vmatpush.bf16.msra.mxu0 %v3048
    %4248 = vmatpush.bf16.msra.mxu0 %v3035
    %4249 = vmatmul.bf16.gmra.mxu0 %v791
    %v4250 = vpop.f32.mrf.mxu0
    %v4251 = vadd.f32 %v4238, %v4250
    %v4252 = vpop.f32.mrf.mxu0
    %4253 = vdwg.mxu0
    %4254 = vmatpush.bf16.msra.mxu0 %v3230
    %4255 = vmatpush.bf16.msra.mxu0 %v3217
    %4256 = vmatpush.bf16.msra.mxu0 %v3204
    %4257 = vmatpush.bf16.msra.mxu0 %v3191
    %4258 = vmatpush.bf16.msra.mxu0 %v3178
    %4259 = vmatpush.bf16.msra.mxu0 %v3165
    %4260 = vmatpush.bf16.msra.mxu0 %v3152
    %4261 = vmatpush.bf16.msra.mxu0 %v3139
    %4262 = vmatmul.bf16.gmra.mxu0 %v792
    %v4263 = vpop.f32.mrf.mxu0
    %v4264 = vadd.f32 %v4251, %v4263
    %v4265 = vpop.f32.mrf.mxu0
    %4266 = vdwg.mxu0
    %4267 = vmatpush.bf16.msra.mxu0 %v3334
    %4268 = vmatpush.bf16.msra.mxu0 %v3321
    %4269 = vmatpush.bf16.msra.mxu0 %v3308
    %4270 = vmatpush.bf16.msra.mxu0 %v3295
    %4271 = vmatpush.bf16.msra.mxu0 %v3282
    %4272 = vmatpush.bf16.msra.mxu0 %v3269
    %4273 = vmatpush.bf16.msra.mxu0 %v3256
    %4274 = vmatpush.bf16.msra.mxu0 %v3243
    %4275 = vmatmul.bf16.gmra.mxu0 %v793
    %v4276 = vpop.f32.mrf.mxu0
    %v4277 = vadd.f32 %v4264, %v4276
    %v4278 = vpop.f32.mrf.mxu0
    %4279 = vdwg.mxu0
    %4280 = vmatpush.bf16.msra.mxu0 %v2815
    %4281 = vmatpush.bf16.msra.mxu0 %v2802
    %4282 = vmatpush.bf16.msra.mxu0 %v2789
    %4283 = vmatpush.bf16.msra.mxu0 %v2776
    %4284 = vmatpush.bf16.msra.mxu0 %v2763
    %4285 = vmatpush.bf16.msra.mxu0 %v2750
    %4286 = vmatpush.bf16.msra.mxu0 %v2737
    %4287 = vmatpush.bf16.msra.mxu0 %v2724
    %4288 = vmatmul.bf16.gmra.mxu0 %v788
    %v4289 = vpop.f32.mrf.mxu0
    %v4290 = vadd.f32 %v764, %v4289
    %v4291 = vpop.f32.mrf.mxu0
    %4292 = vdwg.mxu0
    %4293 = vmatpush.bf16.msra.mxu0 %v2919
    %4294 = vmatpush.bf16.msra.mxu0 %v2906
    %4295 = vmatpush.bf16.msra.mxu0 %v2893
    %4296 = vmatpush.bf16.msra.mxu0 %v2880
    %4297 = vmatpush.bf16.msra.mxu0 %v2867
    %4298 = vmatpush.bf16.msra.mxu0 %v2854
    %4299 = vmatpush.bf16.msra.mxu0 %v2841
    %4300 = vmatpush.bf16.msra.mxu0 %v2828
    %4301 = vmatmul.bf16.gmra.mxu0 %v789
    %v4302 = vpop.f32.mrf.mxu0
    %v4303 = vadd.f32 %v4290, %v4302
    %v4304 = vpop.f32.mrf.mxu0
    %4305 = vdwg.mxu0
    %4306 = vmatpush.bf16.msra.mxu0 %v3023
    %4307 = vmatpush.bf16.msra.mxu0 %v3010
    %4308 = vmatpush.bf16.msra.mxu0 %v2997
    %4309 = vmatpush.bf16.msra.mxu0 %v2984
    %4310 = vmatpush.bf16.msra.mxu0 %v2971
    %4311 = vmatpush.bf16.msra.mxu0 %v2958
    %4312 = vmatpush.bf16.msra.mxu0 %v2945
    %4313 = vmatpush.bf16.msra.mxu0 %v2932
    %4314 = vmatmul.bf16.gmra.mxu0 %v790
    %v4315 = vpop.f32.mrf.mxu0
    %v4316 = vadd.f32 %v4303, %v4315
    %v4317 = vpop.f32.mrf.mxu0
    %4318 = vdwg.mxu0
    %4319 = vmatpush.bf16.msra.mxu0 %v3127
    %4320 = vmatpush.bf16.msra.mxu0 %v3114
    %4321 = vmatpush.bf16.msra.mxu0 %v3101
    %4322 = vmatpush.bf16.msra.mxu0 %v3088
    %4323 = vmatpush.bf16.msra.mxu0 %v3075
    %4324 = vmatpush.bf16.msra.mxu0 %v3062
    %4325 = vmatpush.bf16.msra.mxu0 %v3049
    %4326 = vmatpush.bf16.msra.mxu0 %v3036
    %4327 = vmatmul.bf16.gmra.mxu0 %v791
    %v4328 = vpop.f32.mrf.mxu0
    %v4329 = vadd.f32 %v4316, %v4328
    %v4330 = vpop.f32.mrf.mxu0
    %4331 = vdwg.mxu0
    %4332 = vmatpush.bf16.msra.mxu0 %v3231
    %4333 = vmatpush.bf16.msra.mxu0 %v3218
    %4334 = vmatpush.bf16.msra.mxu0 %v3205
    %4335 = vmatpush.bf16.msra.mxu0 %v3192
    %4336 = vmatpush.bf16.msra.mxu0 %v3179
    %4337 = vmatpush.bf16.msra.mxu0 %v3166
    %4338 = vmatpush.bf16.msra.mxu0 %v3153
    %4339 = vmatpush.bf16.msra.mxu0 %v3140
    %4340 = vmatmul.bf16.gmra.mxu0 %v792
    %v4341 = vpop.f32.mrf.mxu0
    %v4342 = vadd.f32 %v4329, %v4341
    %v4343 = vpop.f32.mrf.mxu0
    %4344 = vdwg.mxu0
    %4345 = vmatpush.bf16.msra.mxu0 %v3335
    %4346 = vmatpush.bf16.msra.mxu0 %v3322
    %4347 = vmatpush.bf16.msra.mxu0 %v3309
    %4348 = vmatpush.bf16.msra.mxu0 %v3296
    %4349 = vmatpush.bf16.msra.mxu0 %v3283
    %4350 = vmatpush.bf16.msra.mxu0 %v3270
    %4351 = vmatpush.bf16.msra.mxu0 %v3257
    %4352 = vmatpush.bf16.msra.mxu0 %v3244
    %4353 = vmatmul.bf16.gmra.mxu0 %v793
    %v4354 = vpop.f32.mrf.mxu0
    %v4355 = vadd.f32 %v4342, %v4354
    %v4356 = vpop.f32.mrf.mxu0
    %4357 = vdwg.mxu0
    %4358 = vmatpush.bf16.msra.mxu0 %v2816
    %4359 = vmatpush.bf16.msra.mxu0 %v2803
    %4360 = vmatpush.bf16.msra.mxu0 %v2790
    %4361 = vmatpush.bf16.msra.mxu0 %v2777
    %4362 = vmatpush.bf16.msra.mxu0 %v2764
    %4363 = vmatpush.bf16.msra.mxu0 %v2751
    %4364 = vmatpush.bf16.msra.mxu0 %v2738
    %4365 = vmatpush.bf16.msra.mxu0 %v2725
    %4366 = vmatmul.bf16.gmra.mxu0 %v788
    %v4367 = vpop.f32.mrf.mxu0
    %v4368 = vadd.f32 %v765, %v4367
    %v4369 = vpop.f32.mrf.mxu0
    %4370 = vdwg.mxu0
    %4371 = vmatpush.bf16.msra.mxu0 %v2920
    %4372 = vmatpush.bf16.msra.mxu0 %v2907
    %4373 = vmatpush.bf16.msra.mxu0 %v2894
    %4374 = vmatpush.bf16.msra.mxu0 %v2881
    %4375 = vmatpush.bf16.msra.mxu0 %v2868
    %4376 = vmatpush.bf16.msra.mxu0 %v2855
    %4377 = vmatpush.bf16.msra.mxu0 %v2842
    %4378 = vmatpush.bf16.msra.mxu0 %v2829
    %4379 = vmatmul.bf16.gmra.mxu0 %v789
    %v4380 = vpop.f32.mrf.mxu0
    %v4381 = vadd.f32 %v4368, %v4380
    %v4382 = vpop.f32.mrf.mxu0
    %4383 = vdwg.mxu0
    %4384 = vmatpush.bf16.msra.mxu0 %v3024
    %4385 = vmatpush.bf16.msra.mxu0 %v3011
    %4386 = vmatpush.bf16.msra.mxu0 %v2998
    %4387 = vmatpush.bf16.msra.mxu0 %v2985
    %4388 = vmatpush.bf16.msra.mxu0 %v2972
    %4389 = vmatpush.bf16.msra.mxu0 %v2959
    %4390 = vmatpush.bf16.msra.mxu0 %v2946
    %4391 = vmatpush.bf16.msra.mxu0 %v2933
    %4392 = vmatmul.bf16.gmra.mxu0 %v790
    %v4393 = vpop.f32.mrf.mxu0
    %v4394 = vadd.f32 %v4381, %v4393
    %v4395 = vpop.f32.mrf.mxu0
    %4396 = vdwg.mxu0
    %4397 = vmatpush.bf16.msra.mxu0 %v3128
    %4398 = vmatpush.bf16.msra.mxu0 %v3115
    %4399 = vmatpush.bf16.msra.mxu0 %v3102
    %4400 = vmatpush.bf16.msra.mxu0 %v3089
    %4401 = vmatpush.bf16.msra.mxu0 %v3076
    %4402 = vmatpush.bf16.msra.mxu0 %v3063
    %4403 = vmatpush.bf16.msra.mxu0 %v3050
    %4404 = vmatpush.bf16.msra.mxu0 %v3037
    %4405 = vmatmul.bf16.gmra.mxu0 %v791
    %v4406 = vpop.f32.mrf.mxu0
    %v4407 = vadd.f32 %v4394, %v4406
    %v4408 = vpop.f32.mrf.mxu0
    %4409 = vdwg.mxu0
    %4410 = vmatpush.bf16.msra.mxu0 %v3232
    %4411 = vmatpush.bf16.msra.mxu0 %v3219
    %4412 = vmatpush.bf16.msra.mxu0 %v3206
    %4413 = vmatpush.bf16.msra.mxu0 %v3193
    %4414 = vmatpush.bf16.msra.mxu0 %v3180
    %4415 = vmatpush.bf16.msra.mxu0 %v3167
    %4416 = vmatpush.bf16.msra.mxu0 %v3154
    %4417 = vmatpush.bf16.msra.mxu0 %v3141
    %4418 = vmatmul.bf16.gmra.mxu0 %v792
    %v4419 = vpop.f32.mrf.mxu0
    %v4420 = vadd.f32 %v4407, %v4419
    %v4421 = vpop.f32.mrf.mxu0
    %4422 = vdwg.mxu0
    %4423 = vmatpush.bf16.msra.mxu0 %v3336
    %4424 = vmatpush.bf16.msra.mxu0 %v3323
    %4425 = vmatpush.bf16.msra.mxu0 %v3310
    %4426 = vmatpush.bf16.msra.mxu0 %v3297
    %4427 = vmatpush.bf16.msra.mxu0 %v3284
    %4428 = vmatpush.bf16.msra.mxu0 %v3271
    %4429 = vmatpush.bf16.msra.mxu0 %v3258
    %4430 = vmatpush.bf16.msra.mxu0 %v3245
    %4431 = vmatmul.bf16.gmra.mxu0 %v793
    %v4432 = vpop.f32.mrf.mxu0
    %v4433 = vadd.f32 %v4420, %v4432
    %v4434 = vpop.f32.mrf.mxu0
    %4435 = vdwg.mxu0
    %4436 = vmatpush.bf16.msra.mxu0 %v2817
    %4437 = vmatpush.bf16.msra.mxu0 %v2804
    %4438 = vmatpush.bf16.msra.mxu0 %v2791
    %4439 = vmatpush.bf16.msra.mxu0 %v2778
    %4440 = vmatpush.bf16.msra.mxu0 %v2765
    %4441 = vmatpush.bf16.msra.mxu0 %v2752
    %4442 = vmatpush.bf16.msra.mxu0 %v2739
    %4443 = vmatpush.bf16.msra.mxu0 %v2726
    %4444 = vmatmul.bf16.gmra.mxu0 %v788
    %v4445 = vpop.f32.mrf.mxu0
    %v4446 = vadd.f32 %v766, %v4445
    %v4447 = vpop.f32.mrf.mxu0
    %4448 = vdwg.mxu0
    %4449 = vmatpush.bf16.msra.mxu0 %v2921
    %4450 = vmatpush.bf16.msra.mxu0 %v2908
    %4451 = vmatpush.bf16.msra.mxu0 %v2895
    %4452 = vmatpush.bf16.msra.mxu0 %v2882
    %4453 = vmatpush.bf16.msra.mxu0 %v2869
    %4454 = vmatpush.bf16.msra.mxu0 %v2856
    %4455 = vmatpush.bf16.msra.mxu0 %v2843
    %4456 = vmatpush.bf16.msra.mxu0 %v2830
    %4457 = vmatmul.bf16.gmra.mxu0 %v789
    %v4458 = vpop.f32.mrf.mxu0
    %v4459 = vadd.f32 %v4446, %v4458
    %v4460 = vpop.f32.mrf.mxu0
    %4461 = vdwg.mxu0
    %4462 = vmatpush.bf16.msra.mxu0 %v3025
    %4463 = vmatpush.bf16.msra.mxu0 %v3012
    %4464 = vmatpush.bf16.msra.mxu0 %v2999
    %4465 = vmatpush.bf16.msra.mxu0 %v2986
    %4466 = vmatpush.bf16.msra.mxu0 %v2973
    %4467 = vmatpush.bf16.msra.mxu0 %v2960
    %4468 = vmatpush.bf16.msra.mxu0 %v2947
    %4469 = vmatpush.bf16.msra.mxu0 %v2934
    %4470 = vmatmul.bf16.gmra.mxu0 %v790
    %v4471 = vpop.f32.mrf.mxu0
    %v4472 = vadd.f32 %v4459, %v4471
    %v4473 = vpop.f32.mrf.mxu0
    %4474 = vdwg.mxu0
    %4475 = vmatpush.bf16.msra.mxu0 %v3129
    %4476 = vmatpush.bf16.msra.mxu0 %v3116
    %4477 = vmatpush.bf16.msra.mxu0 %v3103
    %4478 = vmatpush.bf16.msra.mxu0 %v3090
    %4479 = vmatpush.bf16.msra.mxu0 %v3077
    %4480 = vmatpush.bf16.msra.mxu0 %v3064
    %4481 = vmatpush.bf16.msra.mxu0 %v3051
    %4482 = vmatpush.bf16.msra.mxu0 %v3038
    %4483 = vmatmul.bf16.gmra.mxu0 %v791
    %v4484 = vpop.f32.mrf.mxu0
    %v4485 = vadd.f32 %v4472, %v4484
    %v4486 = vpop.f32.mrf.mxu0
    %4487 = vdwg.mxu0
    %4488 = vmatpush.bf16.msra.mxu0 %v3233
    %4489 = vmatpush.bf16.msra.mxu0 %v3220
    %4490 = vmatpush.bf16.msra.mxu0 %v3207
    %4491 = vmatpush.bf16.msra.mxu0 %v3194
    %4492 = vmatpush.bf16.msra.mxu0 %v3181
    %4493 = vmatpush.bf16.msra.mxu0 %v3168
    %4494 = vmatpush.bf16.msra.mxu0 %v3155
    %4495 = vmatpush.bf16.msra.mxu0 %v3142
    %4496 = vmatmul.bf16.gmra.mxu0 %v792
    %v4497 = vpop.f32.mrf.mxu0
    %v4498 = vadd.f32 %v4485, %v4497
    %v4499 = vpop.f32.mrf.mxu0
    %4500 = vdwg.mxu0
    %4501 = vmatpush.bf16.msra.mxu0 %v3337
    %4502 = vmatpush.bf16.msra.mxu0 %v3324
    %4503 = vmatpush.bf16.msra.mxu0 %v3311
    %4504 = vmatpush.bf16.msra.mxu0 %v3298
    %4505 = vmatpush.bf16.msra.mxu0 %v3285
    %4506 = vmatpush.bf16.msra.mxu0 %v3272
    %4507 = vmatpush.bf16.msra.mxu0 %v3259
    %4508 = vmatpush.bf16.msra.mxu0 %v3246
    %4509 = vmatmul.bf16.gmra.mxu0 %v793
    %v4510 = vpop.f32.mrf.mxu0
    %v4511 = vadd.f32 %v4498, %v4510
    %v4512 = vpop.f32.mrf.mxu0
    %4513 = vdwg.mxu0
    %4514 = vmatpush.bf16.msra.mxu0 %v2818
    %4515 = vmatpush.bf16.msra.mxu0 %v2805
    %4516 = vmatpush.bf16.msra.mxu0 %v2792
    %4517 = vmatpush.bf16.msra.mxu0 %v2779
    %4518 = vmatpush.bf16.msra.mxu0 %v2766
    %4519 = vmatpush.bf16.msra.mxu0 %v2753
    %4520 = vmatpush.bf16.msra.mxu0 %v2740
    %4521 = vmatpush.bf16.msra.mxu0 %v2727
    %4522 = vmatmul.bf16.gmra.mxu0 %v788
    %v4523 = vpop.f32.mrf.mxu0
    %v4524 = vadd.f32 %v767, %v4523
    %v4525 = vpop.f32.mrf.mxu0
    %4526 = vdwg.mxu0
    %4527 = vmatpush.bf16.msra.mxu0 %v2922
    %4528 = vmatpush.bf16.msra.mxu0 %v2909
    %4529 = vmatpush.bf16.msra.mxu0 %v2896
    %4530 = vmatpush.bf16.msra.mxu0 %v2883
    %4531 = vmatpush.bf16.msra.mxu0 %v2870
    %4532 = vmatpush.bf16.msra.mxu0 %v2857
    %4533 = vmatpush.bf16.msra.mxu0 %v2844
    %4534 = vmatpush.bf16.msra.mxu0 %v2831
    %4535 = vmatmul.bf16.gmra.mxu0 %v789
    %v4536 = vpop.f32.mrf.mxu0
    %v4537 = vadd.f32 %v4524, %v4536
    %v4538 = vpop.f32.mrf.mxu0
    %4539 = vdwg.mxu0
    %4540 = vmatpush.bf16.msra.mxu0 %v3026
    %4541 = vmatpush.bf16.msra.mxu0 %v3013
    %4542 = vmatpush.bf16.msra.mxu0 %v3000
    %4543 = vmatpush.bf16.msra.mxu0 %v2987
    %4544 = vmatpush.bf16.msra.mxu0 %v2974
    %4545 = vmatpush.bf16.msra.mxu0 %v2961
    %4546 = vmatpush.bf16.msra.mxu0 %v2948
    %4547 = vmatpush.bf16.msra.mxu0 %v2935
    %4548 = vmatmul.bf16.gmra.mxu0 %v790
    %v4549 = vpop.f32.mrf.mxu0
    %v4550 = vadd.f32 %v4537, %v4549
    %v4551 = vpop.f32.mrf.mxu0
    %4552 = vdwg.mxu0
    %4553 = vmatpush.bf16.msra.mxu0 %v3130
    %4554 = vmatpush.bf16.msra.mxu0 %v3117
    %4555 = vmatpush.bf16.msra.mxu0 %v3104
    %4556 = vmatpush.bf16.msra.mxu0 %v3091
    %4557 = vmatpush.bf16.msra.mxu0 %v3078
    %4558 = vmatpush.bf16.msra.mxu0 %v3065
    %4559 = vmatpush.bf16.msra.mxu0 %v3052
    %4560 = vmatpush.bf16.msra.mxu0 %v3039
    %4561 = vmatmul.bf16.gmra.mxu0 %v791
    %v4562 = vpop.f32.mrf.mxu0
    %v4563 = vadd.f32 %v4550, %v4562
    %v4564 = vpop.f32.mrf.mxu0
    %4565 = vdwg.mxu0
    %4566 = vmatpush.bf16.msra.mxu0 %v3234
    %4567 = vmatpush.bf16.msra.mxu0 %v3221
    %4568 = vmatpush.bf16.msra.mxu0 %v3208
    %4569 = vmatpush.bf16.msra.mxu0 %v3195
    %4570 = vmatpush.bf16.msra.mxu0 %v3182
    %4571 = vmatpush.bf16.msra.mxu0 %v3169
    %4572 = vmatpush.bf16.msra.mxu0 %v3156
    %4573 = vmatpush.bf16.msra.mxu0 %v3143
    %4574 = vmatmul.bf16.gmra.mxu0 %v792
    %v4575 = vpop.f32.mrf.mxu0
    %v4576 = vadd.f32 %v4563, %v4575
    %v4577 = vpop.f32.mrf.mxu0
    %4578 = vdwg.mxu0
    %4579 = vmatpush.bf16.msra.mxu0 %v3338
    %4580 = vmatpush.bf16.msra.mxu0 %v3325
    %4581 = vmatpush.bf16.msra.mxu0 %v3312
    %4582 = vmatpush.bf16.msra.mxu0 %v3299
    %4583 = vmatpush.bf16.msra.mxu0 %v3286
    %4584 = vmatpush.bf16.msra.mxu0 %v3273
    %4585 = vmatpush.bf16.msra.mxu0 %v3260
    %4586 = vmatpush.bf16.msra.mxu0 %v3247
    %4587 = vmatmul.bf16.gmra.mxu0 %v793
    %v4588 = vpop.f32.mrf.mxu0
    %v4589 = vadd.f32 %v4576, %v4588
    %v4590 = vpop.f32.mrf.mxu0
    %4591 = vdwg.mxu0
    %4592 = vmatpush.bf16.msra.mxu0 %v2819
    %4593 = vmatpush.bf16.msra.mxu0 %v2806
    %4594 = vmatpush.bf16.msra.mxu0 %v2793
    %4595 = vmatpush.bf16.msra.mxu0 %v2780
    %4596 = vmatpush.bf16.msra.mxu0 %v2767
    %4597 = vmatpush.bf16.msra.mxu0 %v2754
    %4598 = vmatpush.bf16.msra.mxu0 %v2741
    %4599 = vmatpush.bf16.msra.mxu0 %v2728
    %4600 = vmatmul.bf16.gmra.mxu0 %v788
    %v4601 = vpop.f32.mrf.mxu0
    %v4602 = vadd.f32 %v768, %v4601
    %v4603 = vpop.f32.mrf.mxu0
    %4604 = vdwg.mxu0
    %4605 = vmatpush.bf16.msra.mxu0 %v2923
    %4606 = vmatpush.bf16.msra.mxu0 %v2910
    %4607 = vmatpush.bf16.msra.mxu0 %v2897
    %4608 = vmatpush.bf16.msra.mxu0 %v2884
    %4609 = vmatpush.bf16.msra.mxu0 %v2871
    %4610 = vmatpush.bf16.msra.mxu0 %v2858
    %4611 = vmatpush.bf16.msra.mxu0 %v2845
    %4612 = vmatpush.bf16.msra.mxu0 %v2832
    %4613 = vmatmul.bf16.gmra.mxu0 %v789
    %v4614 = vpop.f32.mrf.mxu0
    %v4615 = vadd.f32 %v4602, %v4614
    %v4616 = vpop.f32.mrf.mxu0
    %4617 = vdwg.mxu0
    %4618 = vmatpush.bf16.msra.mxu0 %v3027
    %4619 = vmatpush.bf16.msra.mxu0 %v3014
    %4620 = vmatpush.bf16.msra.mxu0 %v3001
    %4621 = vmatpush.bf16.msra.mxu0 %v2988
    %4622 = vmatpush.bf16.msra.mxu0 %v2975
    %4623 = vmatpush.bf16.msra.mxu0 %v2962
    %4624 = vmatpush.bf16.msra.mxu0 %v2949
    %4625 = vmatpush.bf16.msra.mxu0 %v2936
    %4626 = vmatmul.bf16.gmra.mxu0 %v790
    %v4627 = vpop.f32.mrf.mxu0
    %v4628 = vadd.f32 %v4615, %v4627
    %v4629 = vpop.f32.mrf.mxu0
    %4630 = vdwg.mxu0
    %4631 = vmatpush.bf16.msra.mxu0 %v3131
    %4632 = vmatpush.bf16.msra.mxu0 %v3118
    %4633 = vmatpush.bf16.msra.mxu0 %v3105
    %4634 = vmatpush.bf16.msra.mxu0 %v3092
    %4635 = vmatpush.bf16.msra.mxu0 %v3079
    %4636 = vmatpush.bf16.msra.mxu0 %v3066
    %4637 = vmatpush.bf16.msra.mxu0 %v3053
    %4638 = vmatpush.bf16.msra.mxu0 %v3040
    %4639 = vmatmul.bf16.gmra.mxu0 %v791
    %v4640 = vpop.f32.mrf.mxu0
    %v4641 = vadd.f32 %v4628, %v4640
    %v4642 = vpop.f32.mrf.mxu0
    %4643 = vdwg.mxu0
    %4644 = vmatpush.bf16.msra.mxu0 %v3235
    %4645 = vmatpush.bf16.msra.mxu0 %v3222
    %4646 = vmatpush.bf16.msra.mxu0 %v3209
    %4647 = vmatpush.bf16.msra.mxu0 %v3196
    %4648 = vmatpush.bf16.msra.mxu0 %v3183
    %4649 = vmatpush.bf16.msra.mxu0 %v3170
    %4650 = vmatpush.bf16.msra.mxu0 %v3157
    %4651 = vmatpush.bf16.msra.mxu0 %v3144
    %4652 = vmatmul.bf16.gmra.mxu0 %v792
    %v4653 = vpop.f32.mrf.mxu0
    %v4654 = vadd.f32 %v4641, %v4653
    %v4655 = vpop.f32.mrf.mxu0
    %4656 = vdwg.mxu0
    %4657 = vmatpush.bf16.msra.mxu0 %v3339
    %4658 = vmatpush.bf16.msra.mxu0 %v3326
    %4659 = vmatpush.bf16.msra.mxu0 %v3313
    %4660 = vmatpush.bf16.msra.mxu0 %v3300
    %4661 = vmatpush.bf16.msra.mxu0 %v3287
    %4662 = vmatpush.bf16.msra.mxu0 %v3274
    %4663 = vmatpush.bf16.msra.mxu0 %v3261
    %4664 = vmatpush.bf16.msra.mxu0 %v3248
    %4665 = vmatmul.bf16.gmra.mxu0 %v793
    %v4666 = vpop.f32.mrf.mxu0
    %v4667 = vadd.f32 %v4654, %v4666
    %v4668 = vpop.f32.mrf.mxu0
    %4669 = vdwg.mxu0
    %4670 = vmatpush.bf16.msra.mxu0 %v2820
    %4671 = vmatpush.bf16.msra.mxu0 %v2807
    %4672 = vmatpush.bf16.msra.mxu0 %v2794
    %4673 = vmatpush.bf16.msra.mxu0 %v2781
    %4674 = vmatpush.bf16.msra.mxu0 %v2768
    %4675 = vmatpush.bf16.msra.mxu0 %v2755
    %4676 = vmatpush.bf16.msra.mxu0 %v2742
    %4677 = vmatpush.bf16.msra.mxu0 %v2729
    %4678 = vmatmul.bf16.gmra.mxu0 %v788
    %v4679 = vpop.f32.mrf.mxu0
    %v4680 = vadd.f32 %v769, %v4679
    %v4681 = vpop.f32.mrf.mxu0
    %4682 = vdwg.mxu0
    %4683 = vmatpush.bf16.msra.mxu0 %v2924
    %4684 = vmatpush.bf16.msra.mxu0 %v2911
    %4685 = vmatpush.bf16.msra.mxu0 %v2898
    %4686 = vmatpush.bf16.msra.mxu0 %v2885
    %4687 = vmatpush.bf16.msra.mxu0 %v2872
    %4688 = vmatpush.bf16.msra.mxu0 %v2859
    %4689 = vmatpush.bf16.msra.mxu0 %v2846
    %4690 = vmatpush.bf16.msra.mxu0 %v2833
    %4691 = vmatmul.bf16.gmra.mxu0 %v789
    %v4692 = vpop.f32.mrf.mxu0
    %v4693 = vadd.f32 %v4680, %v4692
    %v4694 = vpop.f32.mrf.mxu0
    %4695 = vdwg.mxu0
    %4696 = vmatpush.bf16.msra.mxu0 %v3028
    %4697 = vmatpush.bf16.msra.mxu0 %v3015
    %4698 = vmatpush.bf16.msra.mxu0 %v3002
    %4699 = vmatpush.bf16.msra.mxu0 %v2989
    %4700 = vmatpush.bf16.msra.mxu0 %v2976
    %4701 = vmatpush.bf16.msra.mxu0 %v2963
    %4702 = vmatpush.bf16.msra.mxu0 %v2950
    %4703 = vmatpush.bf16.msra.mxu0 %v2937
    %4704 = vmatmul.bf16.gmra.mxu0 %v790
    %v4705 = vpop.f32.mrf.mxu0
    %v4706 = vadd.f32 %v4693, %v4705
    %v4707 = vpop.f32.mrf.mxu0
    %4708 = vdwg.mxu0
    %4709 = vmatpush.bf16.msra.mxu0 %v3132
    %4710 = vmatpush.bf16.msra.mxu0 %v3119
    %4711 = vmatpush.bf16.msra.mxu0 %v3106
    %4712 = vmatpush.bf16.msra.mxu0 %v3093
    %4713 = vmatpush.bf16.msra.mxu0 %v3080
    %4714 = vmatpush.bf16.msra.mxu0 %v3067
    %4715 = vmatpush.bf16.msra.mxu0 %v3054
    %4716 = vmatpush.bf16.msra.mxu0 %v3041
    %4717 = vmatmul.bf16.gmra.mxu0 %v791
    %v4718 = vpop.f32.mrf.mxu0
    %v4719 = vadd.f32 %v4706, %v4718
    %v4720 = vpop.f32.mrf.mxu0
    %4721 = vdwg.mxu0
    %4722 = vmatpush.bf16.msra.mxu0 %v3236
    %4723 = vmatpush.bf16.msra.mxu0 %v3223
    %4724 = vmatpush.bf16.msra.mxu0 %v3210
    %4725 = vmatpush.bf16.msra.mxu0 %v3197
    %4726 = vmatpush.bf16.msra.mxu0 %v3184
    %4727 = vmatpush.bf16.msra.mxu0 %v3171
    %4728 = vmatpush.bf16.msra.mxu0 %v3158
    %4729 = vmatpush.bf16.msra.mxu0 %v3145
    %4730 = vmatmul.bf16.gmra.mxu0 %v792
    %v4731 = vpop.f32.mrf.mxu0
    %v4732 = vadd.f32 %v4719, %v4731
    %v4733 = vpop.f32.mrf.mxu0
    %4734 = vdwg.mxu0
    %4735 = vmatpush.bf16.msra.mxu0 %v3340
    %4736 = vmatpush.bf16.msra.mxu0 %v3327
    %4737 = vmatpush.bf16.msra.mxu0 %v3314
    %4738 = vmatpush.bf16.msra.mxu0 %v3301
    %4739 = vmatpush.bf16.msra.mxu0 %v3288
    %4740 = vmatpush.bf16.msra.mxu0 %v3275
    %4741 = vmatpush.bf16.msra.mxu0 %v3262
    %4742 = vmatpush.bf16.msra.mxu0 %v3249
    %4743 = vmatmul.bf16.gmra.mxu0 %v793
    %v4744 = vpop.f32.mrf.mxu0
    %v4745 = vadd.f32 %v4732, %v4744
    %v4746 = vpop.f32.mrf.mxu0
    %4747 = vdwg.mxu0
    %4748 = vmatpush.bf16.msra.mxu0 %v2821
    %4749 = vmatpush.bf16.msra.mxu0 %v2808
    %4750 = vmatpush.bf16.msra.mxu0 %v2795
    %4751 = vmatpush.bf16.msra.mxu0 %v2782
    %4752 = vmatpush.bf16.msra.mxu0 %v2769
    %4753 = vmatpush.bf16.msra.mxu0 %v2756
    %4754 = vmatpush.bf16.msra.mxu0 %v2743
    %4755 = vmatpush.bf16.msra.mxu0 %v2730
    %4756 = vmatmul.bf16.gmra.mxu0 %v788
    %v4757 = vpop.f32.mrf.mxu0
    %v4758 = vadd.f32 %v770, %v4757
    %v4759 = vpop.f32.mrf.mxu0
    %4760 = vdwg.mxu0
    %4761 = vmatpush.bf16.msra.mxu0 %v2925
    %4762 = vmatpush.bf16.msra.mxu0 %v2912
    %4763 = vmatpush.bf16.msra.mxu0 %v2899
    %4764 = vmatpush.bf16.msra.mxu0 %v2886
    %4765 = vmatpush.bf16.msra.mxu0 %v2873
    %4766 = vmatpush.bf16.msra.mxu0 %v2860
    %4767 = vmatpush.bf16.msra.mxu0 %v2847
    %4768 = vmatpush.bf16.msra.mxu0 %v2834
    %4769 = vmatmul.bf16.gmra.mxu0 %v789
    %v4770 = vpop.f32.mrf.mxu0
    %v4771 = vadd.f32 %v4758, %v4770
    %v4772 = vpop.f32.mrf.mxu0
    %4773 = vdwg.mxu0
    %4774 = vmatpush.bf16.msra.mxu0 %v3029
    %4775 = vmatpush.bf16.msra.mxu0 %v3016
    %4776 = vmatpush.bf16.msra.mxu0 %v3003
    %4777 = vmatpush.bf16.msra.mxu0 %v2990
    %4778 = vmatpush.bf16.msra.mxu0 %v2977
    %4779 = vmatpush.bf16.msra.mxu0 %v2964
    %4780 = vmatpush.bf16.msra.mxu0 %v2951
    %4781 = vmatpush.bf16.msra.mxu0 %v2938
    %4782 = vmatmul.bf16.gmra.mxu0 %v790
    %v4783 = vpop.f32.mrf.mxu0
    %v4784 = vadd.f32 %v4771, %v4783
    %v4785 = vpop.f32.mrf.mxu0
    %4786 = vdwg.mxu0
    %4787 = vmatpush.bf16.msra.mxu0 %v3133
    %4788 = vmatpush.bf16.msra.mxu0 %v3120
    %4789 = vmatpush.bf16.msra.mxu0 %v3107
    %4790 = vmatpush.bf16.msra.mxu0 %v3094
    %4791 = vmatpush.bf16.msra.mxu0 %v3081
    %4792 = vmatpush.bf16.msra.mxu0 %v3068
    %4793 = vmatpush.bf16.msra.mxu0 %v3055
    %4794 = vmatpush.bf16.msra.mxu0 %v3042
    %4795 = vmatmul.bf16.gmra.mxu0 %v791
    %v4796 = vpop.f32.mrf.mxu0
    %v4797 = vadd.f32 %v4784, %v4796
    %v4798 = vpop.f32.mrf.mxu0
    %4799 = vdwg.mxu0
    %4800 = vmatpush.bf16.msra.mxu0 %v3237
    %4801 = vmatpush.bf16.msra.mxu0 %v3224
    %4802 = vmatpush.bf16.msra.mxu0 %v3211
    %4803 = vmatpush.bf16.msra.mxu0 %v3198
    %4804 = vmatpush.bf16.msra.mxu0 %v3185
    %4805 = vmatpush.bf16.msra.mxu0 %v3172
    %4806 = vmatpush.bf16.msra.mxu0 %v3159
    %4807 = vmatpush.bf16.msra.mxu0 %v3146
    %4808 = vmatmul.bf16.gmra.mxu0 %v792
    %v4809 = vpop.f32.mrf.mxu0
    %v4810 = vadd.f32 %v4797, %v4809
    %v4811 = vpop.f32.mrf.mxu0
    %4812 = vdwg.mxu0
    %4813 = vmatpush.bf16.msra.mxu0 %v3341
    %4814 = vmatpush.bf16.msra.mxu0 %v3328
    %4815 = vmatpush.bf16.msra.mxu0 %v3315
    %4816 = vmatpush.bf16.msra.mxu0 %v3302
    %4817 = vmatpush.bf16.msra.mxu0 %v3289
    %4818 = vmatpush.bf16.msra.mxu0 %v3276
    %4819 = vmatpush.bf16.msra.mxu0 %v3263
    %4820 = vmatpush.bf16.msra.mxu0 %v3250
    %4821 = vmatmul.bf16.gmra.mxu0 %v793
    %v4822 = vpop.f32.mrf.mxu0
    %v4823 = vadd.f32 %v4810, %v4822
    %v4824 = vpop.f32.mrf.mxu0
    %4825 = vdwg.mxu0
    %4826 = vmatpush.bf16.msra.mxu0 %v2822
    %4827 = vmatpush.bf16.msra.mxu0 %v2809
    %4828 = vmatpush.bf16.msra.mxu0 %v2796
    %4829 = vmatpush.bf16.msra.mxu0 %v2783
    %4830 = vmatpush.bf16.msra.mxu0 %v2770
    %4831 = vmatpush.bf16.msra.mxu0 %v2757
    %4832 = vmatpush.bf16.msra.mxu0 %v2744
    %4833 = vmatpush.bf16.msra.mxu0 %v2731
    %4834 = vmatmul.bf16.gmra.mxu0 %v788
    %v4835 = vpop.f32.mrf.mxu0
    %v4836 = vadd.f32 %v771, %v4835
    %v4837 = vpop.f32.mrf.mxu0
    %4838 = vdwg.mxu0
    %4839 = vmatpush.bf16.msra.mxu0 %v2926
    %4840 = vmatpush.bf16.msra.mxu0 %v2913
    %4841 = vmatpush.bf16.msra.mxu0 %v2900
    %4842 = vmatpush.bf16.msra.mxu0 %v2887
    %4843 = vmatpush.bf16.msra.mxu0 %v2874
    %4844 = vmatpush.bf16.msra.mxu0 %v2861
    %4845 = vmatpush.bf16.msra.mxu0 %v2848
    %4846 = vmatpush.bf16.msra.mxu0 %v2835
    %4847 = vmatmul.bf16.gmra.mxu0 %v789
    %v4848 = vpop.f32.mrf.mxu0
    %v4849 = vadd.f32 %v4836, %v4848
    %v4850 = vpop.f32.mrf.mxu0
    %4851 = vdwg.mxu0
    %4852 = vmatpush.bf16.msra.mxu0 %v3030
    %4853 = vmatpush.bf16.msra.mxu0 %v3017
    %4854 = vmatpush.bf16.msra.mxu0 %v3004
    %4855 = vmatpush.bf16.msra.mxu0 %v2991
    %4856 = vmatpush.bf16.msra.mxu0 %v2978
    %4857 = vmatpush.bf16.msra.mxu0 %v2965
    %4858 = vmatpush.bf16.msra.mxu0 %v2952
    %4859 = vmatpush.bf16.msra.mxu0 %v2939
    %4860 = vmatmul.bf16.gmra.mxu0 %v790
    %v4861 = vpop.f32.mrf.mxu0
    %v4862 = vadd.f32 %v4849, %v4861
    %v4863 = vpop.f32.mrf.mxu0
    %4864 = vdwg.mxu0
    %4865 = vmatpush.bf16.msra.mxu0 %v3134
    %4866 = vmatpush.bf16.msra.mxu0 %v3121
    %4867 = vmatpush.bf16.msra.mxu0 %v3108
    %4868 = vmatpush.bf16.msra.mxu0 %v3095
    %4869 = vmatpush.bf16.msra.mxu0 %v3082
    %4870 = vmatpush.bf16.msra.mxu0 %v3069
    %4871 = vmatpush.bf16.msra.mxu0 %v3056
    %4872 = vmatpush.bf16.msra.mxu0 %v3043
    %4873 = vmatmul.bf16.gmra.mxu0 %v791
    %v4874 = vpop.f32.mrf.mxu0
    %v4875 = vadd.f32 %v4862, %v4874
    %v4876 = vpop.f32.mrf.mxu0
    %4877 = vdwg.mxu0
    %4878 = vmatpush.bf16.msra.mxu0 %v3238
    %4879 = vmatpush.bf16.msra.mxu0 %v3225
    %4880 = vmatpush.bf16.msra.mxu0 %v3212
    %4881 = vmatpush.bf16.msra.mxu0 %v3199
    %4882 = vmatpush.bf16.msra.mxu0 %v3186
    %4883 = vmatpush.bf16.msra.mxu0 %v3173
    %4884 = vmatpush.bf16.msra.mxu0 %v3160
    %4885 = vmatpush.bf16.msra.mxu0 %v3147
    %4886 = vmatmul.bf16.gmra.mxu0 %v792
    %v4887 = vpop.f32.mrf.mxu0
    %v4888 = vadd.f32 %v4875, %v4887
    %v4889 = vpop.f32.mrf.mxu0
    %4890 = vdwg.mxu0
    %4891 = vmatpush.bf16.msra.mxu0 %v3342
    %4892 = vmatpush.bf16.msra.mxu0 %v3329
    %4893 = vmatpush.bf16.msra.mxu0 %v3316
    %4894 = vmatpush.bf16.msra.mxu0 %v3303
    %4895 = vmatpush.bf16.msra.mxu0 %v3290
    %4896 = vmatpush.bf16.msra.mxu0 %v3277
    %4897 = vmatpush.bf16.msra.mxu0 %v3264
    %4898 = vmatpush.bf16.msra.mxu0 %v3251
    %4899 = vmatmul.bf16.gmra.mxu0 %v793
    %v4900 = vpop.f32.mrf.mxu0
    %v4901 = vadd.f32 %v4888, %v4900
    %v4902 = vpop.f32.mrf.mxu0
    %4903 = vdwg.mxu0
    %4904 = vmatpush.bf16.msra.mxu0 %v2823
    %4905 = vmatpush.bf16.msra.mxu0 %v2810
    %4906 = vmatpush.bf16.msra.mxu0 %v2797
    %4907 = vmatpush.bf16.msra.mxu0 %v2784
    %4908 = vmatpush.bf16.msra.mxu0 %v2771
    %4909 = vmatpush.bf16.msra.mxu0 %v2758
    %4910 = vmatpush.bf16.msra.mxu0 %v2745
    %4911 = vmatpush.bf16.msra.mxu0 %v2732
    %4912 = vmatmul.bf16.gmra.mxu0 %v788
    %v4913 = vpop.f32.mrf.mxu0
    %v4914 = vadd.f32 %v772, %v4913
    %v4915 = vpop.f32.mrf.mxu0
    %4916 = vdwg.mxu0
    %4917 = vmatpush.bf16.msra.mxu0 %v2927
    %4918 = vmatpush.bf16.msra.mxu0 %v2914
    %4919 = vmatpush.bf16.msra.mxu0 %v2901
    %4920 = vmatpush.bf16.msra.mxu0 %v2888
    %4921 = vmatpush.bf16.msra.mxu0 %v2875
    %4922 = vmatpush.bf16.msra.mxu0 %v2862
    %4923 = vmatpush.bf16.msra.mxu0 %v2849
    %4924 = vmatpush.bf16.msra.mxu0 %v2836
    %4925 = vmatmul.bf16.gmra.mxu0 %v789
    %v4926 = vpop.f32.mrf.mxu0
    %v4927 = vadd.f32 %v4914, %v4926
    %v4928 = vpop.f32.mrf.mxu0
    %4929 = vdwg.mxu0
    %4930 = vmatpush.bf16.msra.mxu0 %v3031
    %4931 = vmatpush.bf16.msra.mxu0 %v3018
    %4932 = vmatpush.bf16.msra.mxu0 %v3005
    %4933 = vmatpush.bf16.msra.mxu0 %v2992
    %4934 = vmatpush.bf16.msra.mxu0 %v2979
    %4935 = vmatpush.bf16.msra.mxu0 %v2966
    %4936 = vmatpush.bf16.msra.mxu0 %v2953
    %4937 = vmatpush.bf16.msra.mxu0 %v2940
    %4938 = vmatmul.bf16.gmra.mxu0 %v790
    %v4939 = vpop.f32.mrf.mxu0
    %v4940 = vadd.f32 %v4927, %v4939
    %v4941 = vpop.f32.mrf.mxu0
    %4942 = vdwg.mxu0
    %4943 = vmatpush.bf16.msra.mxu0 %v3135
    %4944 = vmatpush.bf16.msra.mxu0 %v3122
    %4945 = vmatpush.bf16.msra.mxu0 %v3109
    %4946 = vmatpush.bf16.msra.mxu0 %v3096
    %4947 = vmatpush.bf16.msra.mxu0 %v3083
    %4948 = vmatpush.bf16.msra.mxu0 %v3070
    %4949 = vmatpush.bf16.msra.mxu0 %v3057
    %4950 = vmatpush.bf16.msra.mxu0 %v3044
    %4951 = vmatmul.bf16.gmra.mxu0 %v791
    %v4952 = vpop.f32.mrf.mxu0
    %v4953 = vadd.f32 %v4940, %v4952
    %v4954 = vpop.f32.mrf.mxu0
    %4955 = vdwg.mxu0
    %4956 = vmatpush.bf16.msra.mxu0 %v3239
    %4957 = vmatpush.bf16.msra.mxu0 %v3226
    %4958 = vmatpush.bf16.msra.mxu0 %v3213
    %4959 = vmatpush.bf16.msra.mxu0 %v3200
    %4960 = vmatpush.bf16.msra.mxu0 %v3187
    %4961 = vmatpush.bf16.msra.mxu0 %v3174
    %4962 = vmatpush.bf16.msra.mxu0 %v3161
    %4963 = vmatpush.bf16.msra.mxu0 %v3148
    %4964 = vmatmul.bf16.gmra.mxu0 %v792
    %v4965 = vpop.f32.mrf.mxu0
    %v4966 = vadd.f32 %v4953, %v4965
    %v4967 = vpop.f32.mrf.mxu0
    %4968 = vdwg.mxu0
    %4969 = vmatpush.bf16.msra.mxu0 %v3343
    %4970 = vmatpush.bf16.msra.mxu0 %v3330
    %4971 = vmatpush.bf16.msra.mxu0 %v3317
    %4972 = vmatpush.bf16.msra.mxu0 %v3304
    %4973 = vmatpush.bf16.msra.mxu0 %v3291
    %4974 = vmatpush.bf16.msra.mxu0 %v3278
    %4975 = vmatpush.bf16.msra.mxu0 %v3265
    %4976 = vmatpush.bf16.msra.mxu0 %v3252
    %4977 = vmatmul.bf16.gmra.mxu0 %v793
    %v4978 = vpop.f32.mrf.mxu0
    %v4979 = vadd.f32 %v4966, %v4978
    %v4980 = vpop.f32.mrf.mxu0
    %4981 = vdwg.mxu0
    %v4982 = vmul.f32 %v4043, 1.702
    %v4983 = vmul.f32 %v4121, 1.702
    %v4984 = vmul.f32 %v4199, 1.702
    %v4985 = vmul.f32 %v4277, 1.702
    %v4986 = vmul.f32 %v4355, 1.702
    %v4987 = vmul.f32 %v4433, 1.702
    %v4988 = vmul.f32 %v4511, 1.702
    %v4989 = vmul.f32 %v4589, 1.702
    %v4990 = vmul.f32 %v4667, 1.702
    %v4991 = vmul.f32 %v4745, 1.702
    %v4992 = vmul.f32 %v4823, 1.702
    %v4993 = vmul.f32 %v4901, 1.702
    %v4994 = vmul.f32 %v4979, 1.702
    %v4995 = vxor.u32 %v4982, 2147483648
    %v4996 = vxor.u32 %v4983, 2147483648
    %v4997 = vxor.u32 %v4984, 2147483648
    %v4998 = vxor.u32 %v4985, 2147483648
    %v4999 = vxor.u32 %v4986, 2147483648
    %v5000 = vxor.u32 %v4987, 2147483648
    %v5001 = vxor.u32 %v4988, 2147483648
    %v5002 = vxor.u32 %v4989, 2147483648
    %v5003 = vxor.u32 %v4990, 2147483648
    %v5004 = vxor.u32 %v4991, 2147483648
    %v5005 = vxor.u32 %v4992, 2147483648
    %v5006 = vxor.u32 %v4993, 2147483648
    %v5007 = vxor.u32 %v4994, 2147483648
    %v5008 = vmul.f32 %v4995, 1.442695
    %v5009 = vpow.pop %v5008
    %v5010 = vmul.f32 %v4996, 1.442695
    %v5011 = vpow.pop %v5010
    %v5012 = vmul.f32 %v4997, 1.442695
    %v5013 = vpow.pop %v5012
    %v5014 = vmul.f32 %v4998, 1.442695
    %v5015 = vpow.pop %v5014
    %v5016 = vmul.f32 %v4999, 1.442695
    %v5017 = vpow.pop %v5016
    %v5018 = vmul.f32 %v5000, 1.442695
    %v5019 = vpow.pop %v5018
    %v5020 = vmul.f32 %v5001, 1.442695
    %v5021 = vpow.pop %v5020
    %v5022 = vmul.f32 %v5002, 1.442695
    %v5023 = vpow.pop %v5022
    %v5024 = vmul.f32 %v5003, 1.442695
    %v5025 = vpow.pop %v5024
    %v5026 = vmul.f32 %v5004, 1.442695
    %v5027 = vpow.pop %v5026
    %v5028 = vmul.f32 %v5005, 1.442695
    %v5029 = vpow.pop %v5028
    %v5030 = vmul.f32 %v5006, 1.442695
    %v5031 = vpow.pop %v5030
    %v5032 = vmul.f32 %v5007, 1.442695
    %v5033 = vpow.pop %v5032
    %v5034 = vadd.f32 %v5009, 1.0
    %v5035 = vadd.f32 %v5011, 1.0
    %v5036 = vadd.f32 %v5013, 1.0
    %v5037 = vadd.f32 %v5015, 1.0
    %v5038 = vadd.f32 %v5017, 1.0
    %v5039 = vadd.f32 %v5019, 1.0
    %v5040 = vadd.f32 %v5021, 1.0
    %v5041 = vadd.f32 %v5023, 1.0
    %v5042 = vadd.f32 %v5025, 1.0
    %v5043 = vadd.f32 %v5027, 1.0
    %v5044 = vadd.f32 %v5029, 1.0
    %v5045 = vadd.f32 %v5031, 1.0
    %v5046 = vadd.f32 %v5033, 1.0
    %v5047 = vrcp.pop %v5034
    %v5048 = vmul.f32 %v5034, %v5047
    %v5049 = vsub.f32 1.0, %v5048
    %v5050 = vmul.f32 %v5047, %v5049
    %v5051 = vadd.f32 %v5047, %v5050
    %vm5052 = vweird.f32 %v5034
    %vm5053 = vweird.f32 %v5047
    %vm5054 = vmor %vm5052, %vm5053
    %v5055 = vsel %vm5054, %v5047, %v5051
    %v5056 = vand.u32 2147483647, %v5034
    %vm5057 = vcmp.eq.f32.partialorder %v5056, 8.507059e+37
    %v5058 = vand.u32 %v5034, 2147483648
    %v5059 = vor.u32 1.1754944e-38, %v5058
    %v5060 = vsel %vm5057, %v5059, %v5055
    %v5061 = vmul.f32 1.0, %v5060
    %v5062 = vrcp.pop %v5035
    %v5063 = vmul.f32 %v5035, %v5062
    %v5064 = vsub.f32 1.0, %v5063
    %v5065 = vmul.f32 %v5062, %v5064
    %v5066 = vadd.f32 %v5062, %v5065
    %vm5067 = vweird.f32 %v5035
    %vm5068 = vweird.f32 %v5062
    %vm5069 = vmor %vm5067, %vm5068
    %v5070 = vsel %vm5069, %v5062, %v5066
    %v5071 = vand.u32 2147483647, %v5035
    %vm5072 = vcmp.eq.f32.partialorder %v5071, 8.507059e+37
    %v5073 = vand.u32 %v5035, 2147483648
    %v5074 = vor.u32 1.1754944e-38, %v5073
    %v5075 = vsel %vm5072, %v5074, %v5070
    %v5076 = vmul.f32 1.0, %v5075
    %v5077 = vrcp.pop %v5036
    %v5078 = vmul.f32 %v5036, %v5077
    %v5079 = vsub.f32 1.0, %v5078
    %v5080 = vmul.f32 %v5077, %v5079
    %v5081 = vadd.f32 %v5077, %v5080
    %vm5082 = vweird.f32 %v5036
    %vm5083 = vweird.f32 %v5077
    %vm5084 = vmor %vm5082, %vm5083
    %v5085 = vsel %vm5084, %v5077, %v5081
    %v5086 = vand.u32 2147483647, %v5036
    %vm5087 = vcmp.eq.f32.partialorder %v5086, 8.507059e+37
    %v5088 = vand.u32 %v5036, 2147483648
    %v5089 = vor.u32 1.1754944e-38, %v5088
    %v5090 = vsel %vm5087, %v5089, %v5085
    %v5091 = vmul.f32 1.0, %v5090
    %v5092 = vrcp.pop %v5037
    %v5093 = vmul.f32 %v5037, %v5092
    %v5094 = vsub.f32 1.0, %v5093
    %v5095 = vmul.f32 %v5092, %v5094
    %v5096 = vadd.f32 %v5092, %v5095
    %vm5097 = vweird.f32 %v5037
    %vm5098 = vweird.f32 %v5092
    %vm5099 = vmor %vm5097, %vm5098
    %v5100 = vsel %vm5099, %v5092, %v5096
    %v5101 = vand.u32 2147483647, %v5037
    %vm5102 = vcmp.eq.f32.partialorder %v5101, 8.507059e+37
    %v5103 = vand.u32 %v5037, 2147483648
    %v5104 = vor.u32 1.1754944e-38, %v5103
    %v5105 = vsel %vm5102, %v5104, %v5100
    %v5106 = vmul.f32 1.0, %v5105
    %v5107 = vrcp.pop %v5038
    %v5108 = vmul.f32 %v5038, %v5107
    %v5109 = vsub.f32 1.0, %v5108
    %v5110 = vmul.f32 %v5107, %v5109
    %v5111 = vadd.f32 %v5107, %v5110
    %vm5112 = vweird.f32 %v5038
    %vm5113 = vweird.f32 %v5107
    %vm5114 = vmor %vm5112, %vm5113
    %v5115 = vsel %vm5114, %v5107, %v5111
    %v5116 = vand.u32 2147483647, %v5038
    %vm5117 = vcmp.eq.f32.partialorder %v5116, 8.507059e+37
    %v5118 = vand.u32 %v5038, 2147483648
    %v5119 = vor.u32 1.1754944e-38, %v5118
    %v5120 = vsel %vm5117, %v5119, %v5115
    %v5121 = vmul.f32 1.0, %v5120
    %v5122 = vrcp.pop %v5039
    %v5123 = vmul.f32 %v5039, %v5122
    %v5124 = vsub.f32 1.0, %v5123
    %v5125 = vmul.f32 %v5122, %v5124
    %v5126 = vadd.f32 %v5122, %v5125
    %vm5127 = vweird.f32 %v5039
    %vm5128 = vweird.f32 %v5122
    %vm5129 = vmor %vm5127, %vm5128
    %v5130 = vsel %vm5129, %v5122, %v5126
    %v5131 = vand.u32 2147483647, %v5039
    %vm5132 = vcmp.eq.f32.partialorder %v5131, 8.507059e+37
    %v5133 = vand.u32 %v5039, 2147483648
    %v5134 = vor.u32 1.1754944e-38, %v5133
    %v5135 = vsel %vm5132, %v5134, %v5130
    %v5136 = vmul.f32 1.0, %v5135
    %v5137 = vrcp.pop %v5040
    %v5138 = vmul.f32 %v5040, %v5137
    %v5139 = vsub.f32 1.0, %v5138
    %v5140 = vmul.f32 %v5137, %v5139
    %v5141 = vadd.f32 %v5137, %v5140
    %vm5142 = vweird.f32 %v5040
    %vm5143 = vweird.f32 %v5137
    %vm5144 = vmor %vm5142, %vm5143
    %v5145 = vsel %vm5144, %v5137, %v5141
    %v5146 = vand.u32 2147483647, %v5040
    %vm5147 = vcmp.eq.f32.partialorder %v5146, 8.507059e+37
    %v5148 = vand.u32 %v5040, 2147483648
    %v5149 = vor.u32 1.1754944e-38, %v5148
    %v5150 = vsel %vm5147, %v5149, %v5145
    %v5151 = vmul.f32 1.0, %v5150
    %v5152 = vrcp.pop %v5041
    %v5153 = vmul.f32 %v5041, %v5152
    %v5154 = vsub.f32 1.0, %v5153
    %v5155 = vmul.f32 %v5152, %v5154
    %v5156 = vadd.f32 %v5152, %v5155
    %vm5157 = vweird.f32 %v5041
    %vm5158 = vweird.f32 %v5152
    %vm5159 = vmor %vm5157, %vm5158
    %v5160 = vsel %vm5159, %v5152, %v5156
    %v5161 = vand.u32 2147483647, %v5041
    %vm5162 = vcmp.eq.f32.partialorder %v5161, 8.507059e+37
    %v5163 = vand.u32 %v5041, 2147483648
    %v5164 = vor.u32 1.1754944e-38, %v5163
    %v5165 = vsel %vm5162, %v5164, %v5160
    %v5166 = vmul.f32 1.0, %v5165
    %v5167 = vrcp.pop %v5042
    %v5168 = vmul.f32 %v5042, %v5167
    %v5169 = vsub.f32 1.0, %v5168
    %v5170 = vmul.f32 %v5167, %v5169
    %v5171 = vadd.f32 %v5167, %v5170
    %vm5172 = vweird.f32 %v5042
    %vm5173 = vweird.f32 %v5167
    %vm5174 = vmor %vm5172, %vm5173
    %v5175 = vsel %vm5174, %v5167, %v5171
    %v5176 = vand.u32 2147483647, %v5042
    %vm5177 = vcmp.eq.f32.partialorder %v5176, 8.507059e+37
    %v5178 = vand.u32 %v5042, 2147483648
    %v5179 = vor.u32 1.1754944e-38, %v5178
    %v5180 = vsel %vm5177, %v5179, %v5175
    %v5181 = vmul.f32 1.0, %v5180
    %v5182 = vrcp.pop %v5043
    %v5183 = vmul.f32 %v5043, %v5182
    %v5184 = vsub.f32 1.0, %v5183
    %v5185 = vmul.f32 %v5182, %v5184
    %v5186 = vadd.f32 %v5182, %v5185
    %vm5187 = vweird.f32 %v5043
    %vm5188 = vweird.f32 %v5182
    %vm5189 = vmor %vm5187, %vm5188
    %v5190 = vsel %vm5189, %v5182, %v5186
    %v5191 = vand.u32 2147483647, %v5043
    %vm5192 = vcmp.eq.f32.partialorder %v5191, 8.507059e+37
    %v5193 = vand.u32 %v5043, 2147483648
    %v5194 = vor.u32 1.1754944e-38, %v5193
    %v5195 = vsel %vm5192, %v5194, %v5190
    %v5196 = vmul.f32 1.0, %v5195
    %v5197 = vrcp.pop %v5044
    %v5198 = vmul.f32 %v5044, %v5197
    %v5199 = vsub.f32 1.0, %v5198
    %v5200 = vmul.f32 %v5197, %v5199
    %v5201 = vadd.f32 %v5197, %v5200
    %vm5202 = vweird.f32 %v5044
    %vm5203 = vweird.f32 %v5197
    %vm5204 = vmor %vm5202, %vm5203
    %v5205 = vsel %vm5204, %v5197, %v5201
    %v5206 = vand.u32 2147483647, %v5044
    %vm5207 = vcmp.eq.f32.partialorder %v5206, 8.507059e+37
    %v5208 = vand.u32 %v5044, 2147483648
    %v5209 = vor.u32 1.1754944e-38, %v5208
    %v5210 = vsel %vm5207, %v5209, %v5205
    %v5211 = vmul.f32 1.0, %v5210
    %v5212 = vrcp.pop %v5045
    %v5213 = vmul.f32 %v5045, %v5212
    %v5214 = vsub.f32 1.0, %v5213
    %v5215 = vmul.f32 %v5212, %v5214
    %v5216 = vadd.f32 %v5212, %v5215
    %vm5217 = vweird.f32 %v5045
    %vm5218 = vweird.f32 %v5212
    %vm5219 = vmor %vm5217, %vm5218
    %v5220 = vsel %vm5219, %v5212, %v5216
    %v5221 = vand.u32 2147483647, %v5045
    %vm5222 = vcmp.eq.f32.partialorder %v5221, 8.507059e+37
    %v5223 = vand.u32 %v5045, 2147483648
    %v5224 = vor.u32 1.1754944e-38, %v5223
    %v5225 = vsel %vm5222, %v5224, %v5220
    %v5226 = vmul.f32 1.0, %v5225
    %v5227 = vrcp.pop %v5046
    %v5228 = vmul.f32 %v5046, %v5227
    %v5229 = vsub.f32 1.0, %v5228
    %v5230 = vmul.f32 %v5227, %v5229
    %v5231 = vadd.f32 %v5227, %v5230
    %vm5232 = vweird.f32 %v5046
    %vm5233 = vweird.f32 %v5227
    %vm5234 = vmor %vm5232, %vm5233
    %v5235 = vsel %vm5234, %v5227, %v5231
    %v5236 = vand.u32 2147483647, %v5046
    %vm5237 = vcmp.eq.f32.partialorder %v5236, 8.507059e+37
    %v5238 = vand.u32 %v5046, 2147483648
    %v5239 = vor.u32 1.1754944e-38, %v5238
    %v5240 = vsel %vm5237, %v5239, %v5235
    %v5241 = vmul.f32 1.0, %v5240
    %v5242 = vmul.f32 %v4043, %v5061
    %v5243 = vmul.f32 %v4121, %v5076
    %v5244 = vmul.f32 %v4199, %v5091
    %v5245 = vmul.f32 %v4277, %v5106
    %v5246 = vmul.f32 %v4355, %v5121
    %v5247 = vmul.f32 %v4433, %v5136
    %v5248 = vmul.f32 %v4511, %v5151
    %v5249 = vmul.f32 %v4589, %v5166
    %v5250 = vmul.f32 %v4667, %v5181
    %v5251 = vmul.f32 %v4745, %v5196
    %v5252 = vmul.f32 %v4823, %v5211
    %v5253 = vmul.f32 %v4901, %v5226
    %v5254 = vmul.f32 %v4979, %v5241
    %v5255 = vld [vmem:[%s3] sm:$0xff]
    %v5256 = vld [vmem:[%s3 + $0x8] sm:$0xff]
    %v5257 = vld [vmem:[%s3 + $0x10] sm:$0xff]
    %v5258 = vld [vmem:[%s3 + $0x18] sm:$0xff]
    %v5259 = vld [vmem:[%s3 + $0x20] sm:$0xff]
    %v5260 = vld [vmem:[%s3 + $0x28] sm:$0xff]
    %v5261 = vld [vmem:[%s3 + $0x30] sm:$0xff]
    %v5262 = vld [vmem:[%s3 + $0x38] sm:$0xff]
    %v5263 = vld [vmem:[%s3 + $0x40] sm:$0xff]
    %v5264 = vld [vmem:[%s3 + $0x48] sm:$0xff]
    %v5265 = vld [vmem:[%s3 + $0x50] sm:$0xff]
    %v5266 = vld [vmem:[%s3 + $0x58] sm:$0xff]
    %v5267 = vld [vmem:[%s3 + $0x60] sm:$0xff]
    %v5268 = vld [vmem:[%s3 + $0x68] sm:$0xff]
    %v5269 = vld [vmem:[%s3 + $0x70] sm:$0xff]
    %v5270 = vld [vmem:[%s3 + $0x78] sm:$0xff]
    %v5271 = vld [vmem:[%s3 + $0x80] sm:$0xff]
    %v5272 = vld [vmem:[%s3 + $0x88] sm:$0xff]
    %v5273 = vld [vmem:[%s3 + $0x90] sm:$0xff]
    %v5274 = vld [vmem:[%s3 + $0x98] sm:$0xff]
    %v5275 = vld [vmem:[%s3 + $0xa0] sm:$0xff]
    %v5276 = vld [vmem:[%s3 + $0xa8] sm:$0xff]
    %v5277 = vld [vmem:[%s3 + $0xb0] sm:$0xff]
    %v5278 = vld [vmem:[%s3 + $0xb8] sm:$0xff]
    %v5279 = vld [vmem:[%s3 + $0xc0] sm:$0xff]
    %v5280 = vld [vmem:[%s3 + $0xc8] sm:$0xff]
    %v5281 = vld [vmem:[%s3 + $0xd0] sm:$0xff]
    %v5282 = vld [vmem:[%s3 + $0xd8] sm:$0xff]
    %v5283 = vld [vmem:[%s3 + $0xe0] sm:$0xff]
    %v5284 = vld [vmem:[%s3 + $0xe8] sm:$0xff]
    %v5285 = vld [vmem:[%s3 + $0xf0] sm:$0xff]
    %v5286 = vld [vmem:[%s3 + $0xf8] sm:$0xff]
    %v5287 = vld [vmem:[%s3 + $0x100] sm:$0xff]
    %v5288 = vld [vmem:[%s3 + $0x108] sm:$0xff]
    %v5289 = vld [vmem:[%s3 + $0x110] sm:$0xff]
    %v5290 = vld [vmem:[%s3 + $0x118] sm:$0xff]
    %v5291 = vld [vmem:[%s3 + $0x120] sm:$0xff]
    %v5292 = vld [vmem:[%s3 + $0x128] sm:$0xff]
    %v5293 = vld [vmem:[%s3 + $0x130] sm:$0xff]
    %v5294 = vld [vmem:[%s3 + $0x138] sm:$0xff]
    %v5295 = vld [vmem:[%s3 + $0x140] sm:$0xff]
    %v5296 = vld [vmem:[%s3 + $0x148] sm:$0xff]
    %v5297 = vld [vmem:[%s3 + $0x150] sm:$0xff]
    %v5298 = vld [vmem:[%s3 + $0x158] sm:$0xff]
    %v5299 = vld [vmem:[%s3 + $0x160] sm:$0xff]
    %v5300 = vld [vmem:[%s3 + $0x168] sm:$0xff]
    %v5301 = vld [vmem:[%s3 + $0x170] sm:$0xff]
    %v5302 = vld [vmem:[%s3 + $0x178] sm:$0xff]
    %v5303 = vld [vmem:[%s3 + $0x180] sm:$0xff]
    %v5304 = vld [vmem:[%s3 + $0x188] sm:$0xff]
    %v5305 = vld [vmem:[%s3 + $0x190] sm:$0xff]
    %v5306 = vld [vmem:[%s3 + $0x198] sm:$0xff]
    %v5307 = vld [vmem:[%s3 + $0x1a0] sm:$0xff]
    %v5308 = vld [vmem:[%s3 + $0x1a8] sm:$0xff]
    %v5309 = vld [vmem:[%s3 + $0x1b0] sm:$0xff]
    %v5310 = vld [vmem:[%s3 + $0x1b8] sm:$0xff]
    %v5311 = vld [vmem:[%s3 + $0x1c0] sm:$0xff]
    %v5312 = vld [vmem:[%s3 + $0x1c8] sm:$0xff]
    %v5313 = vld [vmem:[%s3 + $0x1d0] sm:$0xff]
    %v5314 = vld [vmem:[%s3 + $0x1d8] sm:$0xff]
    %v5315 = vld [vmem:[%s3 + $0x1e0] sm:$0xff]
    %v5316 = vld [vmem:[%s3 + $0x1e8] sm:$0xff]
    %v5317 = vld [vmem:[%s3 + $0x1f0] sm:$0xff]
    %v5318 = vld [vmem:[%s3 + $0x1f8] sm:$0xff]
    %v5319 = vld [vmem:[%s3 + $0x200] sm:$0xff]
    %v5320 = vld [vmem:[%s3 + $0x208] sm:$0xff]
    %v5321 = vld [vmem:[%s3 + $0x210] sm:$0xff]
    %v5322 = vld [vmem:[%s3 + $0x218] sm:$0xff]
    %v5323 = vld [vmem:[%s3 + $0x220] sm:$0xff]
    %v5324 = vld [vmem:[%s3 + $0x228] sm:$0xff]
    %v5325 = vld [vmem:[%s3 + $0x230] sm:$0xff]
    %v5326 = vld [vmem:[%s3 + $0x238] sm:$0xff]
    %v5327 = vld [vmem:[%s3 + $0x240] sm:$0xff]
    %v5328 = vld [vmem:[%s3 + $0x248] sm:$0xff]
    %v5329 = vld [vmem:[%s3 + $0x250] sm:$0xff]
    %v5330 = vld [vmem:[%s3 + $0x258] sm:$0xff]
    %v5331 = vld [vmem:[%s3 + $0x260] sm:$0xff]
    %v5332 = vld [vmem:[%s3 + $0x268] sm:$0xff]
    %v5333 = vld [vmem:[%s3 + $0x270] sm:$0xff]
    %v5334 = vld [vmem:[%s3 + $0x278] sm:$0xff]
    %v5335 = vld [vmem:[%s3 + $0x280] sm:$0xff]
    %v5336 = vld [vmem:[%s3 + $0x288] sm:$0xff]
    %v5337 = vld [vmem:[%s3 + $0x290] sm:$0xff]
    %v5338 = vld [vmem:[%s3 + $0x298] sm:$0xff]
    %v5339 = vld [vmem:[%s3 + $0x2a0] sm:$0xff]
    %v5340 = vld [vmem:[%s3 + $0x2a8] sm:$0xff]
    %v5341 = vld [vmem:[%s3 + $0x2b0] sm:$0xff]
    %v5342 = vld [vmem:[%s3 + $0x2b8] sm:$0xff]
    %v5343 = vld [vmem:[%s3 + $0x2c0] sm:$0xff]
    %v5344 = vld [vmem:[%s3 + $0x2c8] sm:$0xff]
    %v5345 = vld [vmem:[%s3 + $0x2d0] sm:$0xff]
    %v5346 = vld [vmem:[%s3 + $0x2d8] sm:$0xff]
    %v5347 = vld [vmem:[%s3 + $0x2e0] sm:$0xff]
    %v5348 = vld [vmem:[%s3 + $0x2e8] sm:$0xff]
    %v5349 = vld [vmem:[%s3 + $0x2f0] sm:$0xff]
    %v5350 = vld [vmem:[%s3 + $0x2f8] sm:$0xff]
    %v5351 = vld [vmem:[%s3 + $0x300] sm:$0xff]
    %v5352 = vld [vmem:[%s3 + $0x308] sm:$0xff]
    %v5353 = vld [vmem:[%s3 + $0x310] sm:$0xff]
    %v5354 = vld [vmem:[%s3 + $0x318] sm:$0xff]
    %v5355 = vld [vmem:[%s3 + $0x320] sm:$0xff]
    %v5356 = vld [vmem:[%s3 + $0x328] sm:$0xff]
    %v5357 = vld [vmem:[%s3 + $0x330] sm:$0xff]
    %v5358 = vld [vmem:[%s3 + $0x338] sm:$0xff]
    %v5359 = vld [vmem:[%s3 + $0x340] sm:$0xff]
    %v5360 = vld [vmem:[%s3 + $0x348] sm:$0xff]
    %v5361 = vld [vmem:[%s3 + $0x350] sm:$0xff]
    %v5362 = vld [vmem:[%s3 + $0x358] sm:$0xff]
    %v5363 = vld [vmem:[%s3 + $0x360] sm:$0xff]
    %v5364 = vld [vmem:[%s3 + $0x368] sm:$0xff]
    %v5365 = vld [vmem:[%s3 + $0x370] sm:$0xff]
    %v5366 = vld [vmem:[%s3 + $0x378] sm:$0xff]
    %v5367 = vld [vmem:[%s3 + $0x380] sm:$0xff]
    %v5368 = vld [vmem:[%s3 + $0x388] sm:$0xff]
    %v5369 = vld [vmem:[%s3 + $0x390] sm:$0xff]
    %v5370 = vld [vmem:[%s3 + $0x398] sm:$0xff]
    %v5371 = vld [vmem:[%s3 + $0x3a0] sm:$0xff]
    %v5372 = vld [vmem:[%s3 + $0x3a8] sm:$0xff]
    %v5373 = vld [vmem:[%s3 + $0x3b0] sm:$0xff]
    %v5374 = vld [vmem:[%s3 + $0x3b8] sm:$0xff]
    %v5375 = vld [vmem:[%s3 + $0x3c0] sm:$0xff]
    %v5376 = vld [vmem:[%s3 + $0x3c8] sm:$0xff]
    %v5377 = vld [vmem:[%s3 + $0x3d0] sm:$0xff]
    %v5378 = vld [vmem:[%s3 + $0x3d8] sm:$0xff]
    %v5379 = vld [vmem:[%s3 + $0x3e0] sm:$0xff]
    %v5380 = vld [vmem:[%s3 + $0x3e8] sm:$0xff]
    %v5381 = vld [vmem:[%s3 + $0x3f0] sm:$0xff]
    %v5382 = vld [vmem:[%s3 + $0x3f8] sm:$0xff]
    %v5383 = vld [vmem:[%s3 + $0x400] sm:$0xff]
    %v5384 = vld [vmem:[%s3 + $0x408] sm:$0xff]
    %v5385 = vld [vmem:[%s3 + $0x410] sm:$0xff]
    %v5386 = vld [vmem:[%s3 + $0x418] sm:$0xff]
    %v5387 = vld [vmem:[%s3 + $0x420] sm:$0xff]
    %v5388 = vld [vmem:[%s3 + $0x428] sm:$0xff]
    %v5389 = vld [vmem:[%s3 + $0x430] sm:$0xff]
    %v5390 = vld [vmem:[%s3 + $0x438] sm:$0xff]
    %v5391 = vld [vmem:[%s3 + $0x440] sm:$0xff]
    %v5392 = vld [vmem:[%s3 + $0x448] sm:$0xff]
    %v5393 = vld [vmem:[%s3 + $0x450] sm:$0xff]
    %v5394 = vld [vmem:[%s3 + $0x458] sm:$0xff]
    %v5395 = vld [vmem:[%s3 + $0x460] sm:$0xff]
    %v5396 = vld [vmem:[%s3 + $0x468] sm:$0xff]
    %v5397 = vld [vmem:[%s3 + $0x470] sm:$0xff]
    %v5398 = vld [vmem:[%s3 + $0x478] sm:$0xff]
    %v5399 = vld [vmem:[%s3 + $0x480] sm:$0xff]
    %v5400 = vld [vmem:[%s3 + $0x488] sm:$0xff]
    %v5401 = vld [vmem:[%s3 + $0x490] sm:$0xff]
    %v5402 = vld [vmem:[%s3 + $0x498] sm:$0xff]
    %v5403 = vld [vmem:[%s3 + $0x4a0] sm:$0xff]
    %v5404 = vld [vmem:[%s3 + $0x4a8] sm:$0xff]
    %v5405 = vld [vmem:[%s3 + $0x4b0] sm:$0xff]
    %v5406 = vld [vmem:[%s3 + $0x4b8] sm:$0xff]
    %v5407 = vld [vmem:[%s3 + $0x4c0] sm:$0xff]
    %v5408 = vld [vmem:[%s3 + $0x4c8] sm:$0xff]
    %v5409 = vld [vmem:[%s3 + $0x4d0] sm:$0xff]
    %v5410 = vld [vmem:[%s3 + $0x4d8] sm:$0xff]
    %v5411 = vld [vmem:[%s3 + $0x4e0] sm:$0xff]
    %v5412 = vld [vmem:[%s3 + $0x4e8] sm:$0xff]
    %v5413 = vld [vmem:[%s3 + $0x4f0] sm:$0xff]
    %v5414 = vld [vmem:[%s3 + $0x4f8] sm:$0xff]
    %v5415 = vld [vmem:[%s3 + $0x500] sm:$0xff]
    %v5416 = vld [vmem:[%s3 + $0x508] sm:$0xff]
    %v5417 = vld [vmem:[%s3 + $0x510] sm:$0xff]
    %v5418 = vld [vmem:[%s3 + $0x518] sm:$0xff]
    %v5419 = vld [vmem:[%s3 + $0x520] sm:$0xff]
    %v5420 = vld [vmem:[%s3 + $0x528] sm:$0xff]
    %v5421 = vld [vmem:[%s3 + $0x530] sm:$0xff]
    %v5422 = vld [vmem:[%s3 + $0x538] sm:$0xff]
    %v5423 = vld [vmem:[%s3 + $0x540] sm:$0xff]
    %v5424 = vld [vmem:[%s3 + $0x548] sm:$0xff]
    %v5425 = vld [vmem:[%s3 + $0x550] sm:$0xff]
    %v5426 = vld [vmem:[%s3 + $0x558] sm:$0xff]
    %v5427 = vld [vmem:[%s3 + $0x560] sm:$0xff]
    %v5428 = vld [vmem:[%s3 + $0x568] sm:$0xff]
    %v5429 = vld [vmem:[%s3 + $0x570] sm:$0xff]
    %v5430 = vld [vmem:[%s3 + $0x578] sm:$0xff]
    %v5431 = vld [vmem:[%s3 + $0x580] sm:$0xff]
    %v5432 = vld [vmem:[%s3 + $0x588] sm:$0xff]
    %v5433 = vld [vmem:[%s3 + $0x590] sm:$0xff]
    %v5434 = vld [vmem:[%s3 + $0x598] sm:$0xff]
    %v5435 = vld [vmem:[%s3 + $0x5a0] sm:$0xff]
    %v5436 = vld [vmem:[%s3 + $0x5a8] sm:$0xff]
    %v5437 = vld [vmem:[%s3 + $0x5b0] sm:$0xff]
    %v5438 = vld [vmem:[%s3 + $0x5b8] sm:$0xff]
    %v5439 = vld [vmem:[%s3 + $0x5c0] sm:$0xff]
    %v5440 = vld [vmem:[%s3 + $0x5c8] sm:$0xff]
    %v5441 = vld [vmem:[%s3 + $0x5d0] sm:$0xff]
    %v5442 = vld [vmem:[%s3 + $0x5d8] sm:$0xff]
    %v5443 = vld [vmem:[%s3 + $0x5e0] sm:$0xff]
    %v5444 = vld [vmem:[%s3 + $0x5e8] sm:$0xff]
    %v5445 = vld [vmem:[%s3 + $0x5f0] sm:$0xff]
    %v5446 = vld [vmem:[%s3 + $0x5f8] sm:$0xff]
    %v5447 = vld [vmem:[%s3 + $0x600] sm:$0xff]
    %v5448 = vld [vmem:[%s3 + $0x608] sm:$0xff]
    %v5449 = vld [vmem:[%s3 + $0x610] sm:$0xff]
    %v5450 = vld [vmem:[%s3 + $0x618] sm:$0xff]
    %v5451 = vld [vmem:[%s3 + $0x620] sm:$0xff]
    %v5452 = vld [vmem:[%s3 + $0x628] sm:$0xff]
    %v5453 = vld [vmem:[%s3 + $0x630] sm:$0xff]
    %v5454 = vld [vmem:[%s3 + $0x638] sm:$0xff]
    %v5455 = vld [vmem:[%s3 + $0x640] sm:$0xff]
    %v5456 = vld [vmem:[%s3 + $0x648] sm:$0xff]
    %v5457 = vld [vmem:[%s3 + $0x650] sm:$0xff]
    %v5458 = vld [vmem:[%s3 + $0x658] sm:$0xff]
    %v5459 = vld [vmem:[%s3 + $0x660] sm:$0xff]
    %v5460 = vld [vmem:[%s3 + $0x668] sm:$0xff]
    %v5461 = vld [vmem:[%s3 + $0x670] sm:$0xff]
    %v5462 = vld [vmem:[%s3 + $0x678] sm:$0xff]
    %5463 = vmatpush.msra.mxu0 %v5270
    %5464 = vmatpush.msra.mxu0 %v5269
    %5465 = vmatpush.msra.mxu0 %v5268
    %5466 = vmatpush.msra.mxu0 %v5267
    %5467 = vmatpush.msra.mxu0 %v5266
    %5468 = vmatpush.msra.mxu0 %v5265
    %5469 = vmatpush.msra.mxu0 %v5264
    %5470 = vmatpush.msra.mxu0 %v5263
    %5471 = vmatpush.msra.mxu0 %v5262
    %5472 = vmatpush.msra.mxu0 %v5261
    %5473 = vmatpush.msra.mxu0 %v5260
    %5474 = vmatpush.msra.mxu0 %v5259
    %5475 = vmatpush.msra.mxu0 %v5258
    %5476 = vmatpush.msra.mxu0 %v5257
    %5477 = vmatpush.msra.mxu0 %v5256
    %5478 = vmatpush.msra.mxu0 %v5255
    %5479 = vmatmul.f32.gmra.mxu0 %v5242
    %v5480 = vpop.f32.mrf.mxu0
    %v5481 = vadd.f32 0.0, %v5480
    %5482 = vdwg.mxu0
    %5483 = vmatpush.msra.mxu0 %v5286
    %5484 = vmatpush.msra.mxu0 %v5285
    %5485 = vmatpush.msra.mxu0 %v5284
    %5486 = vmatpush.msra.mxu0 %v5283
    %5487 = vmatpush.msra.mxu0 %v5282
    %5488 = vmatpush.msra.mxu0 %v5281
    %5489 = vmatpush.msra.mxu0 %v5280
    %5490 = vmatpush.msra.mxu0 %v5279
    %5491 = vmatpush.msra.mxu0 %v5278
    %5492 = vmatpush.msra.mxu0 %v5277
    %5493 = vmatpush.msra.mxu0 %v5276
    %5494 = vmatpush.msra.mxu0 %v5275
    %5495 = vmatpush.msra.mxu0 %v5274
    %5496 = vmatpush.msra.mxu0 %v5273
    %5497 = vmatpush.msra.mxu0 %v5272
    %5498 = vmatpush.msra.mxu0 %v5271
    %5499 = vmatmul.f32.gmra.mxu0 %v5243
    %v5500 = vpop.f32.mrf.mxu0
    %v5501 = vadd.f32 %v5481, %v5500
    %5502 = vdwg.mxu0
    %5503 = vmatpush.msra.mxu0 %v5302
    %5504 = vmatpush.msra.mxu0 %v5301
    %5505 = vmatpush.msra.mxu0 %v5300
    %5506 = vmatpush.msra.mxu0 %v5299
    %5507 = vmatpush.msra.mxu0 %v5298
    %5508 = vmatpush.msra.mxu0 %v5297
    %5509 = vmatpush.msra.mxu0 %v5296
    %5510 = vmatpush.msra.mxu0 %v5295
    %5511 = vmatpush.msra.mxu0 %v5294
    %5512 = vmatpush.msra.mxu0 %v5293
    %5513 = vmatpush.msra.mxu0 %v5292
    %5514 = vmatpush.msra.mxu0 %v5291
    %5515 = vmatpush.msra.mxu0 %v5290
    %5516 = vmatpush.msra.mxu0 %v5289
    %5517 = vmatpush.msra.mxu0 %v5288
    %5518 = vmatpush.msra.mxu0 %v5287
    %5519 = vmatmul.f32.gmra.mxu0 %v5244
    %v5520 = vpop.f32.mrf.mxu0
    %v5521 = vadd.f32 %v5501, %v5520
    %5522 = vdwg.mxu0
    %5523 = vmatpush.msra.mxu0 %v5318
    %5524 = vmatpush.msra.mxu0 %v5317
    %5525 = vmatpush.msra.mxu0 %v5316
    %5526 = vmatpush.msra.mxu0 %v5315
    %5527 = vmatpush.msra.mxu0 %v5314
    %5528 = vmatpush.msra.mxu0 %v5313
    %5529 = vmatpush.msra.mxu0 %v5312
    %5530 = vmatpush.msra.mxu0 %v5311
    %5531 = vmatpush.msra.mxu0 %v5310
    %5532 = vmatpush.msra.mxu0 %v5309
    %5533 = vmatpush.msra.mxu0 %v5308
    %5534 = vmatpush.msra.mxu0 %v5307
    %5535 = vmatpush.msra.mxu0 %v5306
    %5536 = vmatpush.msra.mxu0 %v5305
    %5537 = vmatpush.msra.mxu0 %v5304
    %5538 = vmatpush.msra.mxu0 %v5303
    %5539 = vmatmul.f32.gmra.mxu0 %v5245
    %v5540 = vpop.f32.mrf.mxu0
    %v5541 = vadd.f32 %v5521, %v5540
    %5542 = vdwg.mxu0
    %5543 = vmatpush.msra.mxu0 %v5334
    %5544 = vmatpush.msra.mxu0 %v5333
    %5545 = vmatpush.msra.mxu0 %v5332
    %5546 = vmatpush.msra.mxu0 %v5331
    %5547 = vmatpush.msra.mxu0 %v5330
    %5548 = vmatpush.msra.mxu0 %v5329
    %5549 = vmatpush.msra.mxu0 %v5328
    %5550 = vmatpush.msra.mxu0 %v5327
    %5551 = vmatpush.msra.mxu0 %v5326
    %5552 = vmatpush.msra.mxu0 %v5325
    %5553 = vmatpush.msra.mxu0 %v5324
    %5554 = vmatpush.msra.mxu0 %v5323
    %5555 = vmatpush.msra.mxu0 %v5322
    %5556 = vmatpush.msra.mxu0 %v5321
    %5557 = vmatpush.msra.mxu0 %v5320
    %5558 = vmatpush.msra.mxu0 %v5319
    %5559 = vmatmul.f32.gmra.mxu0 %v5246
    %v5560 = vpop.f32.mrf.mxu0
    %v5561 = vadd.f32 %v5541, %v5560
    %5562 = vdwg.mxu0
    %5563 = vmatpush.msra.mxu0 %v5350
    %5564 = vmatpush.msra.mxu0 %v5349
    %5565 = vmatpush.msra.mxu0 %v5348
    %5566 = vmatpush.msra.mxu0 %v5347
    %5567 = vmatpush.msra.mxu0 %v5346
    %5568 = vmatpush.msra.mxu0 %v5345
    %5569 = vmatpush.msra.mxu0 %v5344
    %5570 = vmatpush.msra.mxu0 %v5343
    %5571 = vmatpush.msra.mxu0 %v5342
    %5572 = vmatpush.msra.mxu0 %v5341
    %5573 = vmatpush.msra.mxu0 %v5340
    %5574 = vmatpush.msra.mxu0 %v5339
    %5575 = vmatpush.msra.mxu0 %v5338
    %5576 = vmatpush.msra.mxu0 %v5337
    %5577 = vmatpush.msra.mxu0 %v5336
    %5578 = vmatpush.msra.mxu0 %v5335
    %5579 = vmatmul.f32.gmra.mxu0 %v5247
    %v5580 = vpop.f32.mrf.mxu0
    %v5581 = vadd.f32 %v5561, %v5580
    %5582 = vdwg.mxu0
    %5583 = vmatpush.msra.mxu0 %v5366
    %5584 = vmatpush.msra.mxu0 %v5365
    %5585 = vmatpush.msra.mxu0 %v5364
    %5586 = vmatpush.msra.mxu0 %v5363
    %5587 = vmatpush.msra.mxu0 %v5362
    %5588 = vmatpush.msra.mxu0 %v5361
    %5589 = vmatpush.msra.mxu0 %v5360
    %5590 = vmatpush.msra.mxu0 %v5359
    %5591 = vmatpush.msra.mxu0 %v5358
    %5592 = vmatpush.msra.mxu0 %v5357
    %5593 = vmatpush.msra.mxu0 %v5356
    %5594 = vmatpush.msra.mxu0 %v5355
    %5595 = vmatpush.msra.mxu0 %v5354
    %5596 = vmatpush.msra.mxu0 %v5353
    %5597 = vmatpush.msra.mxu0 %v5352
    %5598 = vmatpush.msra.mxu0 %v5351
    %5599 = vmatmul.f32.gmra.mxu0 %v5248
    %v5600 = vpop.f32.mrf.mxu0
    %v5601 = vadd.f32 %v5581, %v5600
    %5602 = vdwg.mxu0
    %5603 = vmatpush.msra.mxu0 %v5382
    %5604 = vmatpush.msra.mxu0 %v5381
    %5605 = vmatpush.msra.mxu0 %v5380
    %5606 = vmatpush.msra.mxu0 %v5379
    %5607 = vmatpush.msra.mxu0 %v5378
    %5608 = vmatpush.msra.mxu0 %v5377
    %5609 = vmatpush.msra.mxu0 %v5376
    %5610 = vmatpush.msra.mxu0 %v5375
    %5611 = vmatpush.msra.mxu0 %v5374
    %5612 = vmatpush.msra.mxu0 %v5373
    %5613 = vmatpush.msra.mxu0 %v5372
    %5614 = vmatpush.msra.mxu0 %v5371
    %5615 = vmatpush.msra.mxu0 %v5370
    %5616 = vmatpush.msra.mxu0 %v5369
    %5617 = vmatpush.msra.mxu0 %v5368
    %5618 = vmatpush.msra.mxu0 %v5367
    %5619 = vmatmul.f32.gmra.mxu0 %v5249
    %v5620 = vpop.f32.mrf.mxu0
    %v5621 = vadd.f32 %v5601, %v5620
    %5622 = vdwg.mxu0
    %5623 = vmatpush.msra.mxu0 %v5398
    %5624 = vmatpush.msra.mxu0 %v5397
    %5625 = vmatpush.msra.mxu0 %v5396
    %5626 = vmatpush.msra.mxu0 %v5395
    %5627 = vmatpush.msra.mxu0 %v5394
    %5628 = vmatpush.msra.mxu0 %v5393
    %5629 = vmatpush.msra.mxu0 %v5392
    %5630 = vmatpush.msra.mxu0 %v5391
    %5631 = vmatpush.msra.mxu0 %v5390
    %5632 = vmatpush.msra.mxu0 %v5389
    %5633 = vmatpush.msra.mxu0 %v5388
    %5634 = vmatpush.msra.mxu0 %v5387
    %5635 = vmatpush.msra.mxu0 %v5386
    %5636 = vmatpush.msra.mxu0 %v5385
    %5637 = vmatpush.msra.mxu0 %v5384
    %5638 = vmatpush.msra.mxu0 %v5383
    %5639 = vmatmul.f32.gmra.mxu0 %v5250
    %v5640 = vpop.f32.mrf.mxu0
    %v5641 = vadd.f32 %v5621, %v5640
    %5642 = vdwg.mxu0
    %5643 = vmatpush.msra.mxu0 %v5414
    %5644 = vmatpush.msra.mxu0 %v5413
    %5645 = vmatpush.msra.mxu0 %v5412
    %5646 = vmatpush.msra.mxu0 %v5411
    %5647 = vmatpush.msra.mxu0 %v5410
    %5648 = vmatpush.msra.mxu0 %v5409
    %5649 = vmatpush.msra.mxu0 %v5408
    %5650 = vmatpush.msra.mxu0 %v5407
    %5651 = vmatpush.msra.mxu0 %v5406
    %5652 = vmatpush.msra.mxu0 %v5405
    %5653 = vmatpush.msra.mxu0 %v5404
    %5654 = vmatpush.msra.mxu0 %v5403
    %5655 = vmatpush.msra.mxu0 %v5402
    %5656 = vmatpush.msra.mxu0 %v5401
    %5657 = vmatpush.msra.mxu0 %v5400
    %5658 = vmatpush.msra.mxu0 %v5399
    %5659 = vmatmul.f32.gmra.mxu0 %v5251
    %v5660 = vpop.f32.mrf.mxu0
    %v5661 = vadd.f32 %v5641, %v5660
    %5662 = vdwg.mxu0
    %5663 = vmatpush.msra.mxu0 %v5430
    %5664 = vmatpush.msra.mxu0 %v5429
    %5665 = vmatpush.msra.mxu0 %v5428
    %5666 = vmatpush.msra.mxu0 %v5427
    %5667 = vmatpush.msra.mxu0 %v5426
    %5668 = vmatpush.msra.mxu0 %v5425
    %5669 = vmatpush.msra.mxu0 %v5424
    %5670 = vmatpush.msra.mxu0 %v5423
    %5671 = vmatpush.msra.mxu0 %v5422
    %5672 = vmatpush.msra.mxu0 %v5421
    %5673 = vmatpush.msra.mxu0 %v5420
    %5674 = vmatpush.msra.mxu0 %v5419
    %5675 = vmatpush.msra.mxu0 %v5418
    %5676 = vmatpush.msra.mxu0 %v5417
    %5677 = vmatpush.msra.mxu0 %v5416
    %5678 = vmatpush.msra.mxu0 %v5415
    %5679 = vmatmul.f32.gmra.mxu0 %v5252
    %v5680 = vpop.f32.mrf.mxu0
    %v5681 = vadd.f32 %v5661, %v5680
    %5682 = vdwg.mxu0
    %5683 = vmatpush.msra.mxu0 %v5446
    %5684 = vmatpush.msra.mxu0 %v5445
    %5685 = vmatpush.msra.mxu0 %v5444
    %5686 = vmatpush.msra.mxu0 %v5443
    %5687 = vmatpush.msra.mxu0 %v5442
    %5688 = vmatpush.msra.mxu0 %v5441
    %5689 = vmatpush.msra.mxu0 %v5440
    %5690 = vmatpush.msra.mxu0 %v5439
    %5691 = vmatpush.msra.mxu0 %v5438
    %5692 = vmatpush.msra.mxu0 %v5437
    %5693 = vmatpush.msra.mxu0 %v5436
    %5694 = vmatpush.msra.mxu0 %v5435
    %5695 = vmatpush.msra.mxu0 %v5434
    %5696 = vmatpush.msra.mxu0 %v5433
    %5697 = vmatpush.msra.mxu0 %v5432
    %5698 = vmatpush.msra.mxu0 %v5431
    %5699 = vmatmul.f32.gmra.mxu0 %v5253
    %v5700 = vpop.f32.mrf.mxu0
    %v5701 = vadd.f32 %v5681, %v5700
    %5702 = vdwg.mxu0
    %5703 = vmatpush.msra.mxu0 %v5462
    %5704 = vmatpush.msra.mxu0 %v5461
    %5705 = vmatpush.msra.mxu0 %v5460
    %5706 = vmatpush.msra.mxu0 %v5459
    %5707 = vmatpush.msra.mxu0 %v5458
    %5708 = vmatpush.msra.mxu0 %v5457
    %5709 = vmatpush.msra.mxu0 %v5456
    %5710 = vmatpush.msra.mxu0 %v5455
    %5711 = vmatpush.msra.mxu0 %v5454
    %5712 = vmatpush.msra.mxu0 %v5453
    %5713 = vmatpush.msra.mxu0 %v5452
    %5714 = vmatpush.msra.mxu0 %v5451
    %5715 = vmatpush.msra.mxu0 %v5450
    %5716 = vmatpush.msra.mxu0 %v5449
    %5717 = vmatpush.msra.mxu0 %v5448
    %5718 = vmatpush.msra.mxu0 %v5447
    %5719 = vmatmul.f32.gmra.mxu0 %v5254
    %v5720 = vpop.f32.mrf.mxu0
    %v5721 = vadd.f32 %v5701, %v5720
    %5722 = vdwg.mxu0
    %vm5723 = vcmask 254976
    %v5724 = vsel %vm5723, %v5721, 0.0
    %5725 = vadd.xlane.f32.xlu0 %v5724
    %v5726 = vpop.xlane.xlu0 %5725
    %v5727 = vrcp.pop 32.0
    %v5728 = vmul.f32 32.0, %v5727
    %v5729 = vsub.f32 1.0, %v5728
    %v5730 = vmul.f32 %v5727, %v5729
    %v5731 = vadd.f32 %v5727, %v5730
    %vm5732 = vweird.f32 %v5727
    %v5733 = vsel %vm5732, %v5727, %v5731
    %v5734 = vmul.f32 %v5726, %v5733
    %v5735 = vsub.f32 %v5721, %v5734
    %v5736 = vmul.f32 %v5735, %v5735
    %v5737 = vsel %vm5723, %v5736, 0.0
    %5738 = vadd.xlane.f32.xlu0 %v5737
    %v5739 = vpop.xlane.xlu0 %5738
    %v5740 = vmul.f32 %v5739, %v5733
    %v5741 = vadd.f32 %v5740, 1e-05
    %v5742 = vrsqrt.pop %v5741
    %v5743 = vmul.f32 %v5742, %v5741
    %v5744 = vmul.f32 %v5743, %v5742
    %v5745 = vmul.f32 0.5, %v5744
    %v5746 = vsub.f32 1.5, %v5745
    %v5747 = vmul.f32 %v5742, %v5746
    %vm5748 = vweird.f32 %v5741
    %vm5749 = vweird.f32 %v5742
    %vm5750 = vmor %vm5748, %vm5749
    %v5751 = vsel %vm5750, %v5742, %v5747
    %v5752 = vmul.f32 %v5735, %v5751
    %v5753 = vld [vmem:[#allocation7] sm:$0xff]
    %v5754 = vld [vmem:[#allocation7 + $0x8] sm:$0xff]
    %v5755 = vld [vmem:[#allocation7 + $0x10] sm:$0xff]
    %v5756 = vld [vmem:[#allocation7 + $0x18] sm:$0xff]
    %v5757 = vld [vmem:[#allocation8] sm:$0x1]
    %v5759 = vperm.slane %v5757, 0
    %vm5761 = vcmask 261120
    %v5763 = vsel %vm5761, %v5752, 0
    %5765 = vmatpush.msra.mxu0 0.0
    %5766 = vmatpush.msra.mxu0 0.0
    %5767 = vmatpush.msra.mxu0 0.0
    %5768 = vmatpush.msra.mxu0 0.0
    %5769 = vmatpush.msra.mxu0 0.0
    %5770 = vmatpush.msra.mxu0 0.0
    %5771 = vmatpush.msra.mxu0 0.0
    %5772 = vmatpush.msra.mxu0 0.0
    %5773 = vmatpush.msra.mxu0 0.0
    %5774 = vmatpush.msra.mxu0 0.0
    %5775 = vmatpush.msra.mxu0 0.0
    %5776 = vmatpush.msra.mxu0 0.0
    %5777 = vmatpush.msra.mxu0 %v5756
    %5778 = vmatpush.msra.mxu0 %v5755
    %5779 = vmatpush.msra.mxu0 %v5754
    %5780 = vmatpush.msra.mxu0 %v5753
    %5781 = vmatmul.f32.gmra.mxu0 %v5763
    %v5782 = vpop.f32.mrf.mxu0
    %v5783 = vadd.f32 %v5759, %v5782
    %5784 = vdwg.mxu0
    %5785 = vst [vmem:[#allocation10] sm:$0x3] %v5783
    // Predicated region
    $region42: #{medclip_forward_folded.1} parent=1 // pred_check
      _
    $region43: #{medclip_forward_folded.1} parent=1 // pred_check_branch
      %5787 = sbr.rel (0) target = $region45
    $region44: #{medclip_forward_folded.1} parent=1 // pred_region
      %5789 = vsyncadd [#allocation4], 0
      %s5791 = sshll.u32 [#allocation10], 4
      %s5792 = int_to_ptr.vmem [resolvable:$true] %s5791
      %s5793 = sshll.u32 %s6, 4
      %s5794 = int_to_ptr.hbm [resolvable:$true] %s5793
      %5796 = dma.vmem_to_hbm [thread:$0]  %s5792, 32, %s5794, [#allocation4]
    $region45: #{medclip_forward_folded.1} parent=1 // pred_fallthru
      _
    // Predicated region
    $region46: #{medclip_forward_folded.1} parent=1 // pred_check
      _
    $region47: #{medclip_forward_folded.1} parent=1 // pred_check_branch
      %5798 = sbr.rel (0) target = $region49
    $region48: #{medclip_forward_folded.1} parent=1 // pred_region
      %5800 = dma.done [#allocation4], 32
    $region49: #{medclip_forward_folded.1} parent=1 // pred_fallthru
      _
    %5801 = vsyncpa [#allocation3], 1
    %5802 = vsyncpa [#allocation6], 1
    %5803 = vsyncpa [#allocation9], 1
    %5804 = vsyncpa [#allocation4], 1

</llo_original>
